<compile_context>
chip_gen: v7x
topology: tpu7x:2x2x1
jax: 0.10.0
libtpu: 0.0.40
codegen_flags: <defaults>
</compile_context>

<pallas_src>
import jax
import jax.numpy as jnp
from jax import lax
from jax.experimental import pallas as pl
from jax.experimental.pallas import tpu as pltpu

# ---------------- static problem sizes (small BasicBlock instance) ----------------
N = 2            # batch
C = 32           # in_channels == out_channels (identity residual)
H = 16           # spatial height
Wd = 16          # spatial width
HP, WP = H + 2, Wd + 2          # zero-padded spatial (pad=1 for the 3x3 convs)
P = HP * WP                     # flattened padded pixels per image          (= 324)
A = WP + 1                      # apron so every tap shift stays in range    (= 19)
PBIG = P + 4 * A                # lanes per image in the packed input        (= 400)
LX = 1024                       # input lane width   (>= L1 + max_shift, mult of 128)
L1 = 896                        # conv1/h1 lane width (>= L2 + max_shift, mult of 128)
L2 = 768                        # conv2/output lane width (>= (N-1)*PBIG+P, mult of 128)
NTAPS = 9
EPS = 1e-5


def basic_block_kernel(x_ref, w_ref, b_ref, o_ref):
    """out = bn2(conv2(relu(bn1(conv1(x))))) + x   (BN folded, eval mode).

    Layout: channels on sublanes, (image, padded pixel) flattened on lanes.
    Lane r maps to image n = r // PBIG;   h1 lane r  <-> padded pixel (r % PBIG) - A;
    output lane r <-> padded pixel (r % PBIG).
    """
    x = x_ref[...]                                   # [C, LX] f32 (residual path)
    xb = x.astype(jnp.bfloat16)                      # bf16 operand for the MXU
    b1 = b_ref[:, 0:1]                               # [C, 1] folded bn1 bias (f32)
    b2 = b_ref[:, 1:2]                               # [C, 1] folded bn2 bias (f32)

    # ---- conv1 (+ folded bn1): ONE fused matmul, then 9 lane-shifted adds --------
    y1 = jnp.dot(w_ref[0:NTAPS * C, :], xb,
                 preferred_element_type=jnp.float32)            # [9C, LX] f32
    acc1 = y1[0:C, 0:L1]                                        # tap (0,0): shift 0
    for t in range(1, NTAPS):
        dy, dx = divmod(t, 3)
        s = dy * WP + dx                                        # lane shift of tap t
        acc1 = acc1 + y1[t * C:(t + 1) * C, s:s + L1]

    # Interior mask (emulates conv2's zero padding), generated in-kernel from an iota.
    # Float floor/multiply trick avoids vector integer div/mod.
    lane = lax.broadcasted_iota(jnp.int32, (1, L1), 1).astype(jnp.float32)
    j = lane - PBIG * jnp.floor((lane + 0.5) * (1.0 / PBIG))    # lane within image
    q = j - A                                                   # padded pixel index
    hp = jnp.floor((q + 0.5) * (1.0 / WP))                      # padded row
    wp = q - WP * hp                                            # padded col
    interior = ((hp > 0.5) & (hp < H + 0.5) &
                (wp > 0.5) & (wp < Wd + 0.5) &
                (lane < N * PBIG - 0.5))
    mask = interior.astype(jnp.float32)                         # [1, L1]

    h1 = jnp.maximum(acc1 + b1, 0.0) * mask                     # ReLU; zero pad ring
    h1b = h1.astype(jnp.bfloat16)

    # ---- conv2 (+ folded bn2): ONE fused matmul, then 9 lane-shifted adds --------
    y2 = jnp.dot(w_ref[NTAPS * C:2 * NTAPS * C, :], h1b,
                 preferred_element_type=jnp.float32)            # [9C, L1] f32
    acc2 = y2[0:C, 0:L2]
    for t in range(1, NTAPS):
        dy, dx = divmod(t, 3)
        s = dy * WP + dx
        acc2 = acc2 + y2[t * C:(t + 1) * C, s:s + L2]

    resid = x[:, 2 * A:2 * A + L2]                              # x at padded pixels
    o_ref[...] = acc2 + b2 + resid                              # identity skip


# ---------------- wrapper-side plumbing (layout + BN folding) ----------------
def fold_bn(w_hwio, gamma, beta, mean, var):
    scale = gamma / jnp.sqrt(var + EPS)              # [C_out]
    return w_hwio * scale, beta - mean * scale       # folded weight, folded bias


def _fused_taps(w_folded_hwio):
    # [3,3,ci,co] -> [9*C, C] with row index t*C + co, column ci.
    return jnp.transpose(w_folded_hwio, (0, 1, 3, 2)).reshape(NTAPS * C, C)


def pack_x(x_nchw):
    xp = jnp.pad(x_nchw, ((0, 0), (0, 0), (1, 1), (1, 1)))      # [N, C, HP, WP]
    xf = xp.reshape(N, C, P)
    xf = jnp.pad(xf, ((0, 0), (0, 0), (2 * A, 2 * A)))          # [N, C, PBIG]
    xt = jnp.transpose(xf, (1, 0, 2)).reshape(C, N * PBIG)      # [C, N*PBIG]
    return jnp.pad(xt, ((0, 0), (0, LX - N * PBIG)))            # [C, LX]


def basic_block_forward(x_nchw, w1, w2, bn1, bn2):
    w1f, b1 = fold_bn(w1, *bn1)
    w2f, b2 = fold_bn(w2, *bn2)
    w_slab = jnp.concatenate([_fused_taps(w1f), _fused_taps(w2f)],
                             axis=0).astype(jnp.bfloat16)       # [18C, C] bf16
    bias = jnp.stack([b1, b2], axis=1).astype(jnp.float32)      # [C, 2]  f32
    x_t = pack_x(x_nchw)                                        # [C, LX] f32

    out_t = pl.pallas_call(
        basic_block_kernel,
        out_shape=jax.ShapeDtypeStruct((C, L2), jnp.float32),
        grid_spec=pltpu.PrefetchScalarGridSpec(
            num_scalar_prefetch=0,
            grid=(1,),                                          # single step; both
            in_specs=[                                          # images lane-packed
                pl.BlockSpec((C, LX), lambda i: (0, 0)),
                pl.BlockSpec((2 * NTAPS * C, C), lambda i: (0, 0)),
                pl.BlockSpec((C, 2), lambda i: (0, 0)),
            ],
            out_specs=pl.BlockSpec((C, L2), lambda i: (0, 0)),
        ),
        compiler_params=pltpu.CompilerParams(
            dimension_semantics=("arbitrary",)),
    )(x_t, w_slab, bias)

    # unpack: lane n*PBIG + q  <->  image n, padded pixel q; keep the interior.
    imgs = [out_t[:, n * PBIG:n * PBIG + P].reshape(C, HP, WP)[:, 1:1 + H, 1:1 + Wd]
            for n in range(N)]
    return jnp.stack(imgs, axis=0)                              # [N, C, H, W]


# ---------------- references ----------------
def reference_forward_f32(x, w1, w2, bn1, bn2):
    """Eval-mode BasicBlock, full f32, HIGHEST precision (module semantics)."""
    def conv(v, w):
        return lax.conv_general_dilated(
            v, w, window_strides=(1, 1), padding=((1, 1), (1, 1)),
            dimension_numbers=("NCHW", "HWIO", "NCHW"),
            precision=lax.Precision.HIGHEST)

    def bn(v, p):
        g, b, m, s = p
        c = lambda a: a[None, :, None, None]
        return (v - c(m)) / jnp.sqrt(c(s) + EPS) * c(g) + c(b)

    out = jax.nn.relu(bn(conv(x, w1), bn1))    # ConvBnReLU
    out = bn(conv(out, w2), bn2)               # ConvBn
    return out + x                             # identity skip (downsample=None)


def reference_forward_bf16(x, w1, w2, bn1, bn2):
    """Numerics-matched reference: folded BN, bf16 MXU operands, f32 accumulation."""
    w1f, b1 = fold_bn(w1, *bn1)
    w2f, b2 = fold_bn(w2, *bn2)

    def conv(v, w):
        return lax.conv_general_dilated(
            v.astype(jnp.bfloat16), w.astype(jnp.bfloat16),
            window_strides=(1, 1), padding=((1, 1), (1, 1)),
            dimension_numbers=("NCHW", "HWIO", "NCHW"),
            preferred_element_type=jnp.float32)

    c = lambda a: a[None, :, None, None]
    h = jax.nn.relu(conv(x, w1f) + c(b1))
    out = conv(h, w2f) + c(b2)
    return out + x


if __name__ == "__main__":
    key = jax.random.PRNGKey(0)
    (kx, kw1, kw2,
     kg1, kb1, km1, kv1,
     kg2, kb2, km2, kv2) = jax.random.split(key, 11)

    x = jax.random.normal(kx, (N, C, H, Wd), dtype=jnp.float32)   # NCHW like PyTorch
    fan_in = 9 * C
    w1 = jnp.sqrt(2.0 / fan_in) * jax.random.normal(kw1, (3, 3, C, C), jnp.float32)
    w2 = jnp.sqrt(2.0 / fan_in) * jax.random.normal(kw2, (3, 3, C, C), jnp.float32)
    bn1 = (jax.random.uniform(kg1, (C,), jnp.float32, 0.5, 1.5),
           0.1 * jax.random.normal(kb1, (C,), jnp.float32),
           0.1 * jax.random.normal(km1, (C,), jnp.float32),
           jax.random.uniform(kv1, (C,), jnp.float32, 0.5, 1.5))
    bn2 = (jax.random.uniform(kg2, (C,), jnp.float32, 0.5, 1.5),
           0.1 * jax.random.normal(kb2, (C,), jnp.float32),
           0.1 * jax.random.normal(km2, (C,), jnp.float32),
           jax.random.uniform(kv2, (C,), jnp.float32, 0.5, 1.5))

    out = basic_block_forward(x, w1, w2, bn1, bn2)
    out = jax.block_until_ready(out)
    assert out.shape == (N, C, H, Wd)

    # Tight check against a numerics-matched (folded BN + bf16 operand) reference:
    ref_m = reference_forward_bf16(x, w1, w2, bn1, bn2)
    err_m = jnp.max(jnp.abs(out - ref_m))
    assert jnp.allclose(out, ref_m, atol=1e-2, rtol=1e-2), \
        f"mismatch vs bf16-matched reference, max abs err={err_m}"

    # Loose check against the full-f32 module reference (bf16 MXU operands in kernel):
    ref_f = reference_forward_f32(x, w1, w2, bn1, bn2)
    err_f = jnp.max(jnp.abs(out - ref_f))
    assert jnp.allclose(out, ref_f, atol=1e-1, rtol=1e-1), \
        f"mismatch vs f32 reference, max abs err={err_f}"

    print("KERNEL_OK")
</pallas_src>

<mosaic_0001>
module attributes {stable_mosaic.version = 11 : i64} {
  func.func @basic_block_kernel(%arg0: i32, %arg1: memref<32x1024xf32, #tpu.memory_space<vmem>>, %arg2: memref<576x32xbf16, #tpu.memory_space<vmem>>, %arg3: memref<32x2xf32, #tpu.memory_space<vmem>>, %arg4: memref<32x768xf32, #tpu.memory_space<vmem>>) attributes {dimension_semantics = [#tpu.dimension_semantics<arbitrary>], iteration_bounds = array<i64: 1>, scalar_prefetch = 0 : i64, scratch_operands = 0 : i64, tpu.core_type = #tpu.core_type<tc>, window_params = [{pipeline_mode = #tpu.pipeline_mode<synchronous>, transform_indices = @transform_0, window_bounds = array<i64: 32, 1024>}, {pipeline_mode = #tpu.pipeline_mode<synchronous>, transform_indices = @transform_1, window_bounds = array<i64: 576, 32>}, {pipeline_mode = #tpu.pipeline_mode<synchronous>, transform_indices = @transform_2, window_bounds = array<i64: 32, 2>}, {pipeline_mode = #tpu.pipeline_mode<synchronous>, transform_indices = @transform_3, window_bounds = array<i64: 32, 768>}]} {
    %c0 = arith.constant 0 : index
    %c0_0 = arith.constant 0 : index
    %0 = vector.load %arg1[%c0, %c0_0] : memref<32x1024xf32, #tpu.memory_space<vmem>>, vector<32x1024xf32>
    %1 = arith.truncf %0 : vector<32x1024xf32> to vector<32x1024xbf16>
    %c0_1 = arith.constant 0 : index
    %c0_2 = arith.constant 0 : index
    %2 = vector.load %arg3[%c0_1, %c0_2] : memref<32x2xf32, #tpu.memory_space<vmem>>, vector<32x1xf32>
    %c0_3 = arith.constant 0 : index
    %c1 = arith.constant 1 : index
    %3 = vector.load %arg3[%c0_3, %c1] : memref<32x2xf32, #tpu.memory_space<vmem>>, vector<32x1xf32>
    %c0_4 = arith.constant 0 : index
    %c0_5 = arith.constant 0 : index
    %4 = vector.load %arg2[%c0_4, %c0_5] : memref<576x32xbf16, #tpu.memory_space<vmem>>, vector<288x32xbf16>
    %cst = arith.constant dense<0.000000e+00> : vector<288x1024xf32>
    %5 = tpu.matmul %4, %1, %cst {dimension_numbers = #tpu.dot_dimension_numbers<[1], [0], [0], [1], [0, 0, 1, 1], [], []>} : vector<288x32xbf16>, vector<32x1024xbf16>, vector<288x1024xf32> -> vector<288x1024xf32>
    %6 = vector.extract_strided_slice %5 {offsets = [0, 0], sizes = [32, 896], strides = [1, 1]} : vector<288x1024xf32> to vector<32x896xf32>
    %7 = vector.extract_strided_slice %5 {offsets = [32, 1], sizes = [32, 896], strides = [1, 1]} : vector<288x1024xf32> to vector<32x896xf32>
    %8 = arith.addf %6, %7 : vector<32x896xf32>
    %9 = vector.extract_strided_slice %5 {offsets = [64, 2], sizes = [32, 896], strides = [1, 1]} : vector<288x1024xf32> to vector<32x896xf32>
    %10 = arith.addf %8, %9 : vector<32x896xf32>
    %11 = vector.extract_strided_slice %5 {offsets = [96, 18], sizes = [32, 896], strides = [1, 1]} : vector<288x1024xf32> to vector<32x896xf32>
    %12 = arith.addf %10, %11 : vector<32x896xf32>
    %13 = vector.extract_strided_slice %5 {offsets = [128, 19], sizes = [32, 896], strides = [1, 1]} : vector<288x1024xf32> to vector<32x896xf32>
    %14 = arith.addf %12, %13 : vector<32x896xf32>
    %15 = vector.extract_strided_slice %5 {offsets = [160, 20], sizes = [32, 896], strides = [1, 1]} : vector<288x1024xf32> to vector<32x896xf32>
    %16 = arith.addf %14, %15 : vector<32x896xf32>
    %17 = vector.extract_strided_slice %5 {offsets = [192, 36], sizes = [32, 896], strides = [1, 1]} : vector<288x1024xf32> to vector<32x896xf32>
    %18 = arith.addf %16, %17 : vector<32x896xf32>
    %19 = vector.extract_strided_slice %5 {offsets = [224, 37], sizes = [32, 896], strides = [1, 1]} : vector<288x1024xf32> to vector<32x896xf32>
    %20 = arith.addf %18, %19 : vector<32x896xf32>
    %21 = vector.extract_strided_slice %5 {offsets = [256, 38], sizes = [32, 896], strides = [1, 1]} : vector<288x1024xf32> to vector<32x896xf32>
    %22 = arith.addf %20, %21 : vector<32x896xf32>
    %23 = tpu.iota {dimensions = array<i32: 1>} : vector<1x896xi32>
    %24 = arith.sitofp %23 : vector<1x896xi32> to vector<1x896xf32>
    %cst_6 = arith.constant 5.000000e-01 : f32
    %25 = vector.broadcast %cst_6 : f32 to vector<1x896xf32>
    %26 = arith.addf %24, %25 : vector<1x896xf32>
    %cst_7 = arith.constant 2.500000e-03 : f32
    %27 = vector.broadcast %cst_7 : f32 to vector<1x896xf32>
    %28 = arith.mulf %26, %27 : vector<1x896xf32>
    %29 = math.floor %28 : vector<1x896xf32>
    %cst_8 = arith.constant 4.000000e+02 : f32
    %30 = vector.broadcast %cst_8 : f32 to vector<1x896xf32>
    %31 = arith.mulf %30, %29 : vector<1x896xf32>
    %32 = arith.subf %24, %31 : vector<1x896xf32>
    %cst_9 = arith.constant 1.900000e+01 : f32
    %33 = vector.broadcast %cst_9 : f32 to vector<1x896xf32>
    %34 = arith.subf %32, %33 : vector<1x896xf32>
    %cst_10 = arith.constant 5.000000e-01 : f32
    %35 = vector.broadcast %cst_10 : f32 to vector<1x896xf32>
    %36 = arith.addf %34, %35 : vector<1x896xf32>
    %cst_11 = arith.constant 0.055555556 : f32
    %37 = vector.broadcast %cst_11 : f32 to vector<1x896xf32>
    %38 = arith.mulf %36, %37 : vector<1x896xf32>
    %39 = math.floor %38 : vector<1x896xf32>
    %cst_12 = arith.constant 1.800000e+01 : f32
    %40 = vector.broadcast %cst_12 : f32 to vector<1x896xf32>
    %41 = arith.mulf %40, %39 : vector<1x896xf32>
    %42 = arith.subf %34, %41 : vector<1x896xf32>
    %cst_13 = arith.constant 5.000000e-01 : f32
    %43 = vector.broadcast %cst_13 : f32 to vector<1x896xf32>
    %44 = arith.cmpf ogt, %39, %43 : vector<1x896xf32>
    %cst_14 = arith.constant 1.650000e+01 : f32
    %45 = vector.broadcast %cst_14 : f32 to vector<1x896xf32>
    %46 = arith.cmpf olt, %39, %45 : vector<1x896xf32>
    %47 = arith.andi %44, %46 : vector<1x896xi1>
    %cst_15 = arith.constant 5.000000e-01 : f32
    %48 = vector.broadcast %cst_15 : f32 to vector<1x896xf32>
    %49 = arith.cmpf ogt, %42, %48 : vector<1x896xf32>
    %50 = arith.andi %47, %49 : vector<1x896xi1>
    %cst_16 = arith.constant 1.650000e+01 : f32
    %51 = vector.broadcast %cst_16 : f32 to vector<1x896xf32>
    %52 = arith.cmpf olt, %42, %51 : vector<1x896xf32>
    %53 = arith.andi %50, %52 : vector<1x896xi1>
    %cst_17 = arith.constant 7.995000e+02 : f32
    %54 = vector.broadcast %cst_17 : f32 to vector<1x896xf32>
    %55 = arith.cmpf olt, %24, %54 : vector<1x896xf32>
    %56 = arith.andi %53, %55 : vector<1x896xi1>
    %57 = arith.extui %56 : vector<1x896xi1> to vector<1x896xi32>
    %58 = arith.sitofp %57 : vector<1x896xi32> to vector<1x896xf32>
    %59 = vector.broadcast %2 : vector<32x1xf32> to vector<32x896xf32>
    %60 = arith.addf %22, %59 : vector<32x896xf32>
    %cst_18 = arith.constant 0.000000e+00 : f32
    %61 = vector.broadcast %cst_18 : f32 to vector<32x896xf32>
    %62 = arith.maximumf %60, %61 : vector<32x896xf32>
    %63 = vector.broadcast %58 : vector<1x896xf32> to vector<32x896xf32>
    %64 = arith.mulf %62, %63 : vector<32x896xf32>
    %65 = arith.truncf %64 : vector<32x896xf32> to vector<32x896xbf16>
    %c288 = arith.constant 288 : index
    %c0_19 = arith.constant 0 : index
    %66 = vector.load %arg2[%c288, %c0_19] : memref<576x32xbf16, #tpu.memory_space<vmem>>, vector<288x32xbf16>
    %cst_20 = arith.constant dense<0.000000e+00> : vector<288x896xf32>
    %67 = tpu.matmul %66, %65, %cst_20 {dimension_numbers = #tpu.dot_dimension_numbers<[1], [0], [0], [1], [0, 0, 1, 1], [], []>} : vector<288x32xbf16>, vector<32x896xbf16>, vector<288x896xf32> -> vector<288x896xf32>
    %68 = vector.extract_strided_slice %67 {offsets = [0, 0], sizes = [32, 768], strides = [1, 1]} : vector<288x896xf32> to vector<32x768xf32>
    %69 = vector.extract_strided_slice %67 {offsets = [32, 1], sizes = [32, 768], strides = [1, 1]} : vector<288x896xf32> to vector<32x768xf32>
    %70 = arith.addf %68, %69 : vector<32x768xf32>
    %71 = vector.extract_strided_slice %67 {offsets = [64, 2], sizes = [32, 768], strides = [1, 1]} : vector<288x896xf32> to vector<32x768xf32>
    %72 = arith.addf %70, %71 : vector<32x768xf32>
    %73 = vector.extract_strided_slice %67 {offsets = [96, 18], sizes = [32, 768], strides = [1, 1]} : vector<288x896xf32> to vector<32x768xf32>
    %74 = arith.addf %72, %73 : vector<32x768xf32>
    %75 = vector.extract_strided_slice %67 {offsets = [128, 19], sizes = [32, 768], strides = [1, 1]} : vector<288x896xf32> to vector<32x768xf32>
    %76 = arith.addf %74, %75 : vector<32x768xf32>
    %77 = vector.extract_strided_slice %67 {offsets = [160, 20], sizes = [32, 768], strides = [1, 1]} : vector<288x896xf32> to vector<32x768xf32>
    %78 = arith.addf %76, %77 : vector<32x768xf32>
    %79 = vector.extract_strided_slice %67 {offsets = [192, 36], sizes = [32, 768], strides = [1, 1]} : vector<288x896xf32> to vector<32x768xf32>
    %80 = arith.addf %78, %79 : vector<32x768xf32>
    %81 = vector.extract_strided_slice %67 {offsets = [224, 37], sizes = [32, 768], strides = [1, 1]} : vector<288x896xf32> to vector<32x768xf32>
    %82 = arith.addf %80, %81 : vector<32x768xf32>
    %83 = vector.extract_strided_slice %67 {offsets = [256, 38], sizes = [32, 768], strides = [1, 1]} : vector<288x896xf32> to vector<32x768xf32>
    %84 = arith.addf %82, %83 : vector<32x768xf32>
    %85 = vector.extract_strided_slice %0 {offsets = [0, 38], sizes = [32, 768], strides = [1, 1]} : vector<32x1024xf32> to vector<32x768xf32>
    %86 = vector.broadcast %3 : vector<32x1xf32> to vector<32x768xf32>
    %87 = arith.addf %84, %86 : vector<32x768xf32>
    %88 = arith.addf %87, %85 : vector<32x768xf32>
    %c0_21 = arith.constant 0 : index
    %c0_22 = arith.constant 0 : index
    %89 = vector.load %arg4[%c0_21, %c0_22] : memref<32x768xf32, #tpu.memory_space<vmem>>, vector<32x768xf32>
    tpu.vector_store %arg4[%c0_21, %c0_22], %88 {strides = array<i32>} : memref<32x768xf32, #tpu.memory_space<vmem>>, vector<32x768xf32>,
    return
  }
  func.func @transform_0(%arg0: i32) -> (i32, i32) {
    %c0_i32 = arith.constant 0 : i32
    %c0_i32_0 = arith.constant 0 : i32
    %c0_i32_1 = arith.constant 0 : i32
    return %c0_i32, %c0_i32_0 : i32, i32
  }
  func.func @transform_1(%arg0: i32) -> (i32, i32) {
    %c0_i32 = arith.constant 0 : i32
    %c0_i32_0 = arith.constant 0 : i32
    %c0_i32_1 = arith.constant 0 : i32
    return %c0_i32, %c0_i32_0 : i32, i32
  }
  func.func @transform_2(%arg0: i32) -> (i32, i32) {
    %c0_i32 = arith.constant 0 : i32
    %c0_i32_0 = arith.constant 0 : i32
    %c0_i32_1 = arith.constant 0 : i32
    return %c0_i32, %c0_i32_0 : i32, i32
  }
  func.func @transform_3(%arg0: i32) -> (i32, i32) {
    %c0_i32 = arith.constant 0 : i32
    %c0_i32_0 = arith.constant 0 : i32
    %c0_i32_1 = arith.constant 0 : i32
    return %c0_i32, %c0_i32_0 : i32, i32
  }
}

</mosaic_0001>

<llo_original>
// kernel: tpu_custom_call.1
$region0: #{tpu_custom_call.1}
  #allocation0 [shape = 'u32[]', space=smem, size = 0x4, offset = 0x4, fixed_abs, tag = 'smem constant byte address 0x4 - core index']
  #allocation1 [shape = 'u32[144,128]{1,0:T(1,128)}', space=vmem, size = 0x12000, scoped, tag = 'internal scratch']
  %s0 = inlined_call_operand.vmem [shape: f32[32,1024], index: 0, kind: input, shape index: {}]
  %s1 = inlined_call_operand.vmem [shape: bf16[576,32], index: 1, kind: input, shape index: {}]
  %s2 = inlined_call_operand.vmem [shape: f32[32,2], index: 2, kind: input, shape index: {}]
  %s3 = inlined_call_operand.hbm [shape: f32[32,768], index: 3, kind: output, shape index: {}]
  %s4 = sld [smem:[#allocation0]]
  $region22: #{tpu_custom_call.1} parent=0
    _
  %s6 = ssub.s32 1, %s4
  %s7 = scalar_select 0, %s6, %s4
  $region1: #{tpu_custom_call.1} parent=0
    #allocation2 [shape = 'u8[98304]{0}', space=vmem, size = 0x18000, scoped, tag = 'output window, operand 0, single buffered']
    #allocation3 [shape = 's32[1]{0}', space=sflag, size = 0x4, scoped, tag = 'scoped memory for tpu_custom_call.1']
    %8 = vsyncpa [#allocation3], 0
    // Predicated region
    $region2: #{tpu_custom_call.1} parent=1 // pred_check
      _
    $region3: #{tpu_custom_call.1} parent=1 // pred_check_branch
      %10 = sbr.rel (0) target = $region5
    $region4: #{tpu_custom_call.1} parent=1 // pred_region
      _
    $region5: #{tpu_custom_call.1} parent=1 // pred_fallthru
      _
    // Predicated region
    $region6: #{tpu_custom_call.1} parent=1 // pred_check
      _
    $region7: #{tpu_custom_call.1} parent=1 // pred_check_branch
      %12 = sbr.rel (0) target = $region9
    $region8: #{tpu_custom_call.1} parent=1 // pred_region
      _
    $region9: #{tpu_custom_call.1} parent=1 // pred_fallthru
      _
    // Predicated region
    $region10: #{tpu_custom_call.1} parent=1 // pred_check
      _
    $region11: #{tpu_custom_call.1} parent=1 // pred_check_branch
      %14 = sbr.rel (0) target = $region13
    $region12: #{tpu_custom_call.1} parent=1 // pred_region
      _
    $region13: #{tpu_custom_call.1} parent=1 // pred_fallthru
      _
    %v16 = vld [vmem:[%s0] sm:$0xff]
    %v17 = vld [vmem:[%s0 + $0x8] sm:$0xff]
    %v18 = vld [vmem:[%s0 + $0x10] sm:$0xff]
    %v19 = vld [vmem:[%s0 + $0x18] sm:$0xff]
    %v20 = vld [vmem:[%s0 + $0x20] sm:$0xff]
    %v21 = vld [vmem:[%s0 + $0x28] sm:$0xff]
    %v22 = vld [vmem:[%s0 + $0x30] sm:$0xff]
    %v23 = vld [vmem:[%s0 + $0x38] sm:$0xff]
    %v24 = vld [vmem:[%s0 + $0x40] sm:$0xff]
    %v25 = vld [vmem:[%s0 + $0x48] sm:$0xff]
    %v26 = vld [vmem:[%s0 + $0x50] sm:$0xff]
    %v27 = vld [vmem:[%s0 + $0x58] sm:$0xff]
    %v28 = vld [vmem:[%s0 + $0x60] sm:$0xff]
    %v29 = vld [vmem:[%s0 + $0x68] sm:$0xff]
    %v30 = vld [vmem:[%s0 + $0x70] sm:$0xff]
    %v31 = vld [vmem:[%s0 + $0x78] sm:$0xff]
    %v32 = vld [vmem:[%s0 + $0x80] sm:$0xff]
    %v33 = vld [vmem:[%s0 + $0x88] sm:$0xff]
    %v34 = vld [vmem:[%s0 + $0x90] sm:$0xff]
    %v35 = vld [vmem:[%s0 + $0x98] sm:$0xff]
    %v36 = vld [vmem:[%s0 + $0xa0] sm:$0xff]
    %v37 = vld [vmem:[%s0 + $0xa8] sm:$0xff]
    %v38 = vld [vmem:[%s0 + $0xb0] sm:$0xff]
    %v39 = vld [vmem:[%s0 + $0xb8] sm:$0xff]
    %v40 = vld [vmem:[%s0 + $0xc0] sm:$0xff]
    %v41 = vld [vmem:[%s0 + $0xc8] sm:$0xff]
    %v42 = vld [vmem:[%s0 + $0xd0] sm:$0xff]
    %v43 = vld [vmem:[%s0 + $0xd8] sm:$0xff]
    %v44 = vld [vmem:[%s0 + $0xe0] sm:$0xff]
    %v45 = vld [vmem:[%s0 + $0xe8] sm:$0xff]
    %v46 = vld [vmem:[%s0 + $0xf0] sm:$0xff]
    %v47 = vld [vmem:[%s0 + $0xf8] sm:$0xff]
    %v48 = vpack.c.bf16 %v24, %v16
    %v49 = vpack.c.bf16 %v25, %v17
    %v50 = vpack.c.bf16 %v26, %v18
    %v51 = vpack.c.bf16 %v27, %v19
    %v52 = vpack.c.bf16 %v28, %v20
    %v53 = vpack.c.bf16 %v29, %v21
    %v54 = vpack.c.bf16 %v30, %v22
    %v55 = vpack.c.bf16 %v31, %v23
    %v56 = vpack.c.bf16 %v40, %v32
    %v57 = vpack.c.bf16 %v41, %v33
    %v58 = vpack.c.bf16 %v42, %v34
    %v59 = vpack.c.bf16 %v43, %v35
    %v60 = vpack.c.bf16 %v44, %v36
    %v61 = vpack.c.bf16 %v45, %v37
    %v62 = vpack.c.bf16 %v46, %v38
    %v63 = vpack.c.bf16 %v47, %v39
    %v64 = vld [vmem:[%s2] sm:$0xff]
    %v65 = vld [vmem:[%s2 + $0x8] sm:$0xff]
    %v66 = vld [vmem:[%s2 + $0x10] sm:$0xff]
    %v67 = vld [vmem:[%s2 + $0x18] sm:$0xff]
    %v68 = vld [vmem:[%s1] sm:$0xf]
    %v69 = vld [vmem:[%s1 + $0x4] sm:$0xf]
    %v70 = vld [vmem:[%s1 + $0x8] sm:$0xf]
    %v71 = vld [vmem:[%s1 + $0xc] sm:$0xf]
    %v72 = vld [vmem:[%s1 + $0x10] sm:$0xf]
    %v73 = vld [vmem:[%s1 + $0x14] sm:$0xf]
    %v74 = vld [vmem:[%s1 + $0x18] sm:$0xf]
    %v75 = vld [vmem:[%s1 + $0x1c] sm:$0xf]
    %v76 = vld [vmem:[%s1 + $0x20] sm:$0xf]
    %v77 = vld [vmem:[%s1 + $0x24] sm:$0xf]
    %v78 = vld [vmem:[%s1 + $0x28] sm:$0xf]
    %v79 = vld [vmem:[%s1 + $0x2c] sm:$0xf]
    %v80 = vld [vmem:[%s1 + $0x30] sm:$0xf]
    %v81 = vld [vmem:[%s1 + $0x34] sm:$0xf]
    %v82 = vld [vmem:[%s1 + $0x38] sm:$0xf]
    %v83 = vld [vmem:[%s1 + $0x3c] sm:$0xf]
    %v84 = vld [vmem:[%s1 + $0x40] sm:$0xf]
    %v85 = vld [vmem:[%s1 + $0x44] sm:$0xf]
    %v86 = vld [vmem:[%s1 + $0x48] sm:$0xf]
    %v87 = vld [vmem:[%s1 + $0x4c] sm:$0xf]
    %v88 = vld [vmem:[%s1 + $0x50] sm:$0xf]
    %v89 = vld [vmem:[%s1 + $0x54] sm:$0xf]
    %v90 = vld [vmem:[%s1 + $0x58] sm:$0xf]
    %v91 = vld [vmem:[%s1 + $0x5c] sm:$0xf]
    %v92 = vld [vmem:[%s1 + $0x60] sm:$0xf]
    %v93 = vld [vmem:[%s1 + $0x64] sm:$0xf]
    %v94 = vld [vmem:[%s1 + $0x68] sm:$0xf]
    %v95 = vld [vmem:[%s1 + $0x6c] sm:$0xf]
    %v96 = vld [vmem:[%s1 + $0x70] sm:$0xf]
    %v97 = vld [vmem:[%s1 + $0x74] sm:$0xf]
    %v98 = vld [vmem:[%s1 + $0x78] sm:$0xf]
    %v99 = vld [vmem:[%s1 + $0x7c] sm:$0xf]
    %v100 = vld [vmem:[%s1 + $0x80] sm:$0xf]
    %v101 = vld [vmem:[%s1 + $0x84] sm:$0xf]
    %v102 = vld [vmem:[%s1 + $0x88] sm:$0xf]
    %v103 = vld [vmem:[%s1 + $0x8c] sm:$0xf]
    %v140 = vunpack.c.l.b16 %v68
    %v141 = vunpack.c.l.b16 %v69
    %v142 = vunpack.c.l.b16 %v70
    %v143 = vunpack.c.l.b16 %v71
    %v144 = vunpack.c.l.b16 %v72
    %v145 = vunpack.c.l.b16 %v73
    %v146 = vunpack.c.l.b16 %v74
    %v147 = vunpack.c.l.b16 %v75
    %v148 = vunpack.c.l.b16 %v76
    %v149 = vunpack.c.l.b16 %v77
    %v150 = vunpack.c.l.b16 %v78
    %v151 = vunpack.c.l.b16 %v79
    %v152 = vunpack.c.l.b16 %v80
    %v153 = vunpack.c.l.b16 %v81
    %v154 = vunpack.c.l.b16 %v82
    %v155 = vunpack.c.l.b16 %v83
    %v156 = vunpack.c.l.b16 %v84
    %v157 = vunpack.c.l.b16 %v85
    %v158 = vunpack.c.l.b16 %v86
    %v159 = vunpack.c.l.b16 %v87
    %v160 = vunpack.c.l.b16 %v88
    %v161 = vunpack.c.l.b16 %v89
    %v162 = vunpack.c.l.b16 %v90
    %v163 = vunpack.c.l.b16 %v91
    %v164 = vunpack.c.l.b16 %v92
    %v165 = vunpack.c.l.b16 %v93
    %v166 = vunpack.c.l.b16 %v94
    %v167 = vunpack.c.l.b16 %v95
    %v168 = vunpack.c.l.b16 %v96
    %v169 = vunpack.c.l.b16 %v97
    %v170 = vunpack.c.l.b16 %v98
    %v171 = vunpack.c.l.b16 %v99
    %v172 = vunpack.c.l.b16 %v100
    %v173 = vunpack.c.l.b16 %v101
    %v174 = vunpack.c.l.b16 %v102
    %v175 = vunpack.c.l.b16 %v103
    %v176 = vpack.c.b16 %v141, %v140
    %v177 = vpack.c.b16 %v143, %v142
    %v178 = vpack.c.b16 %v145, %v144
    %v179 = vpack.c.b16 %v147, %v146
    %v180 = vpack.c.b16 %v149, %v148
    %v181 = vpack.c.b16 %v151, %v150
    %v182 = vpack.c.b16 %v153, %v152
    %v183 = vpack.c.b16 %v155, %v154
    %v184 = vpack.c.b16 %v157, %v156
    %v185 = vpack.c.b16 %v159, %v158
    %v186 = vpack.c.b16 %v161, %v160
    %v187 = vpack.c.b16 %v163, %v162
    %v188 = vpack.c.b16 %v165, %v164
    %v189 = vpack.c.b16 %v167, %v166
    %v190 = vpack.c.b16 %v169, %v168
    %v191 = vpack.c.b16 %v171, %v170
    %v192 = vpack.c.b16 %v173, %v172
    %v193 = vpack.c.b16 %v175, %v174
    %vm194 = vcmask 261120
    %v196 = vsel %vm194, %v176, 0
    %v199 = vsel %vm194, %v177, 0
    %v202 = vsel %vm194, %v178, 0
    %v205 = vsel %vm194, %v179, 0
    %v208 = vsel %vm194, %v180, 0
    %v211 = vsel %vm194, %v181, 0
    %v214 = vsel %vm194, %v182, 0
    %v217 = vsel %vm194, %v183, 0
    %v220 = vsel %vm194, %v184, 0
    %v223 = vsel %vm194, %v185, 0
    %v226 = vsel %vm194, %v186, 0
    %v229 = vsel %vm194, %v187, 0
    %v232 = vsel %vm194, %v188, 0
    %v235 = vsel %vm194, %v189, 0
    %v238 = vsel %vm194, %v190, 0
    %v241 = vsel %vm194, %v191, 0
    %v244 = vsel %vm194, %v192, 0
    %v247 = vsel %vm194, %v193, 0
    %249 = vmatprep.subr.bf16.mxu0 %v49
    %250 = vmatpush1.bf16.msra.mxu0 %v48
    %251 = vmatprep.subr.bf16.mxu0 %v57
    %252 = vmatpush1.bf16.msra.mxu0 %v56
    %253 = vmatprep.subr.bf16.mxu0 0
    %254 = vmatpush1.bf16.msra.mxu0 0
    %255 = vmatprep.subr.bf16.mxu0 0
    %256 = vmatpush1.bf16.msra.mxu0 0
    %257 = vmatprep.subr.bf16.mxu0 0
    %258 = vmatpush1.bf16.msra.mxu0 0
    %259 = vmatprep.subr.bf16.mxu0 0
    %260 = vmatpush1.bf16.msra.mxu0 0
    %261 = vmatprep.subr.bf16.mxu0 0
    %262 = vmatpush1.bf16.msra.mxu0 0
    %263 = vmatprep.subr.bf16.mxu0 0
    %264 = vmatpush1.bf16.msra.mxu0 0
    %265 = vmatprep.subr.bf16.mxu0 0
    %266 = vmatpush1.bf16.msra.mxu0 0
    %267 = vmatprep.subr.bf16.mxu0 0
    %268 = vmatpush1.bf16.msra.mxu0 0
    %269 = vmatprep.subr.bf16.mxu0 0
    %270 = vmatpush1.bf16.msra.mxu0 0
    %271 = vmatprep.subr.bf16.mxu0 0
    %272 = vmatpush1.bf16.msra.mxu0 0
    %273 = vmatprep.subr.bf16.mxu0 0
    %274 = vmatpush1.bf16.msra.mxu0 0
    %275 = vmatprep.subr.bf16.mxu0 0
    %276 = vmatpush1.bf16.msra.mxu0 0
    %277 = vmatprep.subr.bf16.mxu0 0
    %278 = vmatpush1.bf16.msra.mxu0 0
    %279 = vmatprep.subr.bf16.mxu0 0
    %280 = vmatpush1.bf16.msra.mxu0 0
    %281 = vmatprep.mubr.bf16.mxu0 0
    %282 = vmatmul.mubr.bf16.gmra.mrb[0].mxu0 %v196
    %v283 = vpop.f32.mrb[0].mxu0
    %v284 = vadd.f32 0.0, %v283
    %v285 = vpop.f32.mrb[0].mxu0
    %v286 = vadd.f32 0.0, %v285
    %v287 = vpop.f32.mrb[0].mxu0
    %v288 = vadd.f32 0.0, %v287
    %v289 = vpop.f32.mrb[0].mxu0
    %v290 = vadd.f32 0.0, %v289
    %291 = vmatprep.mubr.bf16.mxu0 0
    %292 = vmatmul.mubr.bf16.gmra.mrb[0].mxu0 %v199
    %v293 = vpop.f32.mrb[0].mxu0
    %v294 = vadd.f32 0.0, %v293
    %v295 = vpop.f32.mrb[0].mxu0
    %v296 = vadd.f32 0.0, %v295
    %v297 = vpop.f32.mrb[0].mxu0
    %v298 = vadd.f32 0.0, %v297
    %v299 = vpop.f32.mrb[0].mxu0
    %v300 = vadd.f32 0.0, %v299
    %301 = vmatprep.mubr.bf16.mxu0 0
    %302 = vmatmul.mubr.bf16.gmra.mrb[0].mxu0 %v202
    %v303 = vpop.f32.mrb[0].mxu0
    %v304 = vadd.f32 0.0, %v303
    %v305 = vpop.f32.mrb[0].mxu0
    %v306 = vadd.f32 0.0, %v305
    %v307 = vpop.f32.mrb[0].mxu0
    %v308 = vadd.f32 0.0, %v307
    %v309 = vpop.f32.mrb[0].mxu0
    %v310 = vadd.f32 0.0, %v309
    %311 = vmatprep.mubr.bf16.mxu0 0
    %312 = vmatmul.mubr.bf16.gmra.mrb[0].mxu0 %v205
    %v313 = vpop.f32.mrb[0].mxu0
    %v314 = vadd.f32 0.0, %v313
    %v315 = vpop.f32.mrb[0].mxu0
    %v316 = vadd.f32 0.0, %v315
    %v317 = vpop.f32.mrb[0].mxu0
    %v318 = vadd.f32 0.0, %v317
    %v319 = vpop.f32.mrb[0].mxu0
    %v320 = vadd.f32 0.0, %v319
    %321 = vmatprep.mubr.bf16.mxu0 0
    %322 = vmatmul.mubr.bf16.gmra.mrb[0].mxu0 %v208
    %v323 = vpop.f32.mrb[0].mxu0
    %v324 = vadd.f32 0.0, %v323
    %v325 = vpop.f32.mrb[0].mxu0
    %v326 = vadd.f32 0.0, %v325
    %v327 = vpop.f32.mrb[0].mxu0
    %v328 = vadd.f32 0.0, %v327
    %v329 = vpop.f32.mrb[0].mxu0
    %v330 = vadd.f32 0.0, %v329
    %331 = vmatprep.mubr.bf16.mxu0 0
    %332 = vmatmul.mubr.bf16.gmra.mrb[0].mxu0 %v211
    %v333 = vpop.f32.mrb[0].mxu0
    %v334 = vadd.f32 0.0, %v333
    %v335 = vpop.f32.mrb[0].mxu0
    %v336 = vadd.f32 0.0, %v335
    %v337 = vpop.f32.mrb[0].mxu0
    %v338 = vadd.f32 0.0, %v337
    %v339 = vpop.f32.mrb[0].mxu0
    %v340 = vadd.f32 0.0, %v339
    %341 = vmatprep.mubr.bf16.mxu0 0
    %342 = vmatmul.mubr.bf16.gmra.mrb[0].mxu0 %v214
    %v343 = vpop.f32.mrb[0].mxu0
    %v344 = vadd.f32 0.0, %v343
    %v345 = vpop.f32.mrb[0].mxu0
    %v346 = vadd.f32 0.0, %v345
    %v347 = vpop.f32.mrb[0].mxu0
    %v348 = vadd.f32 0.0, %v347
    %v349 = vpop.f32.mrb[0].mxu0
    %v350 = vadd.f32 0.0, %v349
    %351 = vmatprep.mubr.bf16.mxu0 0
    %352 = vmatmul.mubr.bf16.gmra.mrb[0].mxu0 %v217
    %v353 = vpop.f32.mrb[0].mxu0
    %v354 = vadd.f32 0.0, %v353
    %v355 = vpop.f32.mrb[0].mxu0
    %v356 = vadd.f32 0.0, %v355
    %v357 = vpop.f32.mrb[0].mxu0
    %v358 = vadd.f32 0.0, %v357
    %v359 = vpop.f32.mrb[0].mxu0
    %v360 = vadd.f32 0.0, %v359
    %361 = vmatprep.mubr.bf16.mxu0 0
    %362 = vmatmul.mubr.bf16.gmra.mrb[0].mxu0 %v220
    %v363 = vpop.f32.mrb[0].mxu0
    %v364 = vadd.f32 0.0, %v363
    %v365 = vpop.f32.mrb[0].mxu0
    %v366 = vadd.f32 0.0, %v365
    %v367 = vpop.f32.mrb[0].mxu0
    %v368 = vadd.f32 0.0, %v367
    %v369 = vpop.f32.mrb[0].mxu0
    %v370 = vadd.f32 0.0, %v369
    %371 = vmatprep.mubr.bf16.mxu0 0
    %372 = vmatmul.mubr.bf16.gmra.mrb[0].mxu0 %v223
    %v373 = vpop.f32.mrb[0].mxu0
    %v374 = vadd.f32 0.0, %v373
    %v375 = vpop.f32.mrb[0].mxu0
    %v376 = vadd.f32 0.0, %v375
    %v377 = vpop.f32.mrb[0].mxu0
    %v378 = vadd.f32 0.0, %v377
    %v379 = vpop.f32.mrb[0].mxu0
    %v380 = vadd.f32 0.0, %v379
    %381 = vmatprep.mubr.bf16.mxu0 0
    %382 = vmatmul.mubr.bf16.gmra.mrb[0].mxu0 %v226
    %v383 = vpop.f32.mrb[0].mxu0
    %v384 = vadd.f32 0.0, %v383
    %v385 = vpop.f32.mrb[0].mxu0
    %v386 = vadd.f32 0.0, %v385
    %v387 = vpop.f32.mrb[0].mxu0
    %v388 = vadd.f32 0.0, %v387
    %v389 = vpop.f32.mrb[0].mxu0
    %v390 = vadd.f32 0.0, %v389
    %391 = vmatprep.mubr.bf16.mxu0 0
    %392 = vmatmul.mubr.bf16.gmra.mrb[0].mxu0 %v229
    %v393 = vpop.f32.mrb[0].mxu0
    %v394 = vadd.f32 0.0, %v393
    %v395 = vpop.f32.mrb[0].mxu0
    %v396 = vadd.f32 0.0, %v395
    %v397 = vpop.f32.mrb[0].mxu0
    %v398 = vadd.f32 0.0, %v397
    %v399 = vpop.f32.mrb[0].mxu0
    %v400 = vadd.f32 0.0, %v399
    %401 = vmatprep.mubr.bf16.mxu0 0
    %402 = vmatmul.mubr.bf16.gmra.mrb[0].mxu0 %v232
    %v403 = vpop.f32.mrb[0].mxu0
    %v404 = vadd.f32 0.0, %v403
    %v405 = vpop.f32.mrb[0].mxu0
    %v406 = vadd.f32 0.0, %v405
    %v407 = vpop.f32.mrb[0].mxu0
    %v408 = vadd.f32 0.0, %v407
    %v409 = vpop.f32.mrb[0].mxu0
    %v410 = vadd.f32 0.0, %v409
    %411 = vmatprep.mubr.bf16.mxu0 0
    %412 = vmatmul.mubr.bf16.gmra.mrb[0].mxu0 %v235
    %v413 = vpop.f32.mrb[0].mxu0
    %v414 = vadd.f32 0.0, %v413
    %v415 = vpop.f32.mrb[0].mxu0
    %v416 = vadd.f32 0.0, %v415
    %v417 = vpop.f32.mrb[0].mxu0
    %v418 = vadd.f32 0.0, %v417
    %v419 = vpop.f32.mrb[0].mxu0
    %v420 = vadd.f32 0.0, %v419
    %421 = vmatprep.mubr.bf16.mxu0 0
    %422 = vmatmul.mubr.bf16.gmra.mrb[0].mxu0 %v238
    %v423 = vpop.f32.mrb[0].mxu0
    %v424 = vadd.f32 0.0, %v423
    %v425 = vpop.f32.mrb[0].mxu0
    %v426 = vadd.f32 0.0, %v425
    %v427 = vpop.f32.mrb[0].mxu0
    %v428 = vadd.f32 0.0, %v427
    %v429 = vpop.f32.mrb[0].mxu0
    %v430 = vadd.f32 0.0, %v429
    %431 = vmatprep.mubr.bf16.mxu0 0
    %432 = vmatmul.mubr.bf16.gmra.mrb[0].mxu0 %v241
    %v433 = vpop.f32.mrb[0].mxu0
    %v434 = vadd.f32 0.0, %v433
    %v435 = vpop.f32.mrb[0].mxu0
    %v436 = vadd.f32 0.0, %v435
    %v437 = vpop.f32.mrb[0].mxu0
    %v438 = vadd.f32 0.0, %v437
    %v439 = vpop.f32.mrb[0].mxu0
    %v440 = vadd.f32 0.0, %v439
    %441 = vmatprep.mubr.bf16.mxu0 0
    %442 = vmatmul.mubr.bf16.gmra.mrb[0].mxu0 %v244
    %v443 = vpop.f32.mrb[0].mxu0
    %v444 = vadd.f32 0.0, %v443
    %v445 = vpop.f32.mrb[0].mxu0
    %v446 = vadd.f32 0.0, %v445
    %v447 = vpop.f32.mrb[0].mxu0
    %v448 = vadd.f32 0.0, %v447
    %v449 = vpop.f32.mrb[0].mxu0
    %v450 = vadd.f32 0.0, %v449
    %451 = vmatprep.mubr.bf16.mxu0 0
    %452 = vmatmul.mubr.bf16.gmra.mrb[0].mxu0 %v247
    %v453 = vpop.f32.mrb[0].mxu0
    %v454 = vadd.f32 0.0, %v453
    %v455 = vpop.f32.mrb[0].mxu0
    %v456 = vadd.f32 0.0, %v455
    %v457 = vpop.f32.mrb[0].mxu0
    %v458 = vadd.f32 0.0, %v457
    %v459 = vpop.f32.mrb[0].mxu0
    %v460 = vadd.f32 0.0, %v459
    %461 = vdwg.mxu0
    %462 = vmatprep.subr.bf16.mxu0 %v51
    %463 = vmatpush1.bf16.msra.mxu0 %v50
    %464 = vmatprep.subr.bf16.mxu0 %v59
    %465 = vmatpush1.bf16.msra.mxu0 %v58
    %466 = vmatprep.subr.bf16.mxu0 0
    %467 = vmatpush1.bf16.msra.mxu0 0
    %468 = vmatprep.subr.bf16.mxu0 0
    %469 = vmatpush1.bf16.msra.mxu0 0
    %470 = vmatprep.subr.bf16.mxu0 0
    %471 = vmatpush1.bf16.msra.mxu0 0
    %472 = vmatprep.subr.bf16.mxu0 0
    %473 = vmatpush1.bf16.msra.mxu0 0
    %474 = vmatprep.subr.bf16.mxu0 0
    %475 = vmatpush1.bf16.msra.mxu0 0
    %476 = vmatprep.subr.bf16.mxu0 0
    %477 = vmatpush1.bf16.msra.mxu0 0
    %478 = vmatprep.subr.bf16.mxu0 0
    %479 = vmatpush1.bf16.msra.mxu0 0
    %480 = vmatprep.subr.bf16.mxu0 0
    %481 = vmatpush1.bf16.msra.mxu0 0
    %482 = vmatprep.subr.bf16.mxu0 0
    %483 = vmatpush1.bf16.msra.mxu0 0
    %484 = vmatprep.subr.bf16.mxu0 0
    %485 = vmatpush1.bf16.msra.mxu0 0
    %486 = vmatprep.subr.bf16.mxu0 0
    %487 = vmatpush1.bf16.msra.mxu0 0
    %488 = vmatprep.subr.bf16.mxu0 0
    %489 = vmatpush1.bf16.msra.mxu0 0
    %490 = vmatprep.subr.bf16.mxu0 0
    %491 = vmatpush1.bf16.msra.mxu0 0
    %492 = vmatprep.subr.bf16.mxu0 0
    %493 = vmatpush1.bf16.msra.mxu0 0
    %494 = vmatprep.mubr.bf16.mxu0 0
    %495 = vmatmul.mubr.bf16.gmra.mrb[0].mxu0 %v196
    %v496 = vpop.f32.mrb[0].mxu0
    %v497 = vadd.f32 0.0, %v496
    %v498 = vpop.f32.mrb[0].mxu0
    %v499 = vadd.f32 0.0, %v498
    %v500 = vpop.f32.mrb[0].mxu0
    %v501 = vadd.f32 0.0, %v500
    %v502 = vpop.f32.mrb[0].mxu0
    %v503 = vadd.f32 0.0, %v502
    %504 = vmatprep.mubr.bf16.mxu0 0
    %505 = vmatmul.mubr.bf16.gmra.mrb[0].mxu0 %v199
    %v506 = vpop.f32.mrb[0].mxu0
    %v507 = vadd.f32 0.0, %v506
    %v508 = vpop.f32.mrb[0].mxu0
    %v509 = vadd.f32 0.0, %v508
    %v510 = vpop.f32.mrb[0].mxu0
    %v511 = vadd.f32 0.0, %v510
    %v512 = vpop.f32.mrb[0].mxu0
    %v513 = vadd.f32 0.0, %v512
    %514 = vmatprep.mubr.bf16.mxu0 0
    %515 = vmatmul.mubr.bf16.gmra.mrb[0].mxu0 %v202
    %v516 = vpop.f32.mrb[0].mxu0
    %v517 = vadd.f32 0.0, %v516
    %v518 = vpop.f32.mrb[0].mxu0
    %v519 = vadd.f32 0.0, %v518
    %v520 = vpop.f32.mrb[0].mxu0
    %v521 = vadd.f32 0.0, %v520
    %v522 = vpop.f32.mrb[0].mxu0
    %v523 = vadd.f32 0.0, %v522
    %524 = vmatprep.mubr.bf16.mxu0 0
    %525 = vmatmul.mubr.bf16.gmra.mrb[0].mxu0 %v205
    %v526 = vpop.f32.mrb[0].mxu0
    %v527 = vadd.f32 0.0, %v526
    %v528 = vpop.f32.mrb[0].mxu0
    %v529 = vadd.f32 0.0, %v528
    %v530 = vpop.f32.mrb[0].mxu0
    %v531 = vadd.f32 0.0, %v530
    %v532 = vpop.f32.mrb[0].mxu0
    %v533 = vadd.f32 0.0, %v532
    %534 = vmatprep.mubr.bf16.mxu0 0
    %535 = vmatmul.mubr.bf16.gmra.mrb[0].mxu0 %v208
    %v536 = vpop.f32.mrb[0].mxu0
    %v537 = vadd.f32 0.0, %v536
    %v538 = vpop.f32.mrb[0].mxu0
    %v539 = vadd.f32 0.0, %v538
    %v540 = vpop.f32.mrb[0].mxu0
    %v541 = vadd.f32 0.0, %v540
    %v542 = vpop.f32.mrb[0].mxu0
    %v543 = vadd.f32 0.0, %v542
    %544 = vmatprep.mubr.bf16.mxu0 0
    %545 = vmatmul.mubr.bf16.gmra.mrb[0].mxu0 %v211
    %v546 = vpop.f32.mrb[0].mxu0
    %v547 = vadd.f32 0.0, %v546
    %v548 = vpop.f32.mrb[0].mxu0
    %v549 = vadd.f32 0.0, %v548
    %v550 = vpop.f32.mrb[0].mxu0
    %v551 = vadd.f32 0.0, %v550
    %v552 = vpop.f32.mrb[0].mxu0
    %v553 = vadd.f32 0.0, %v552
    %554 = vmatprep.mubr.bf16.mxu0 0
    %555 = vmatmul.mubr.bf16.gmra.mrb[0].mxu0 %v214
    %v556 = vpop.f32.mrb[0].mxu0
    %v557 = vadd.f32 0.0, %v556
    %v558 = vpop.f32.mrb[0].mxu0
    %v559 = vadd.f32 0.0, %v558
    %v560 = vpop.f32.mrb[0].mxu0
    %v561 = vadd.f32 0.0, %v560
    %v562 = vpop.f32.mrb[0].mxu0
    %v563 = vadd.f32 0.0, %v562
    %564 = vmatprep.mubr.bf16.mxu0 0
    %565 = vmatmul.mubr.bf16.gmra.mrb[0].mxu0 %v217
    %v566 = vpop.f32.mrb[0].mxu0
    %v567 = vadd.f32 0.0, %v566
    %v568 = vpop.f32.mrb[0].mxu0
    %v569 = vadd.f32 0.0, %v568
    %v570 = vpop.f32.mrb[0].mxu0
    %v571 = vadd.f32 0.0, %v570
    %v572 = vpop.f32.mrb[0].mxu0
    %v573 = vadd.f32 0.0, %v572
    %574 = vmatprep.mubr.bf16.mxu0 0
    %575 = vmatmul.mubr.bf16.gmra.mrb[0].mxu0 %v220
    %v576 = vpop.f32.mrb[0].mxu0
    %v577 = vadd.f32 0.0, %v576
    %v578 = vpop.f32.mrb[0].mxu0
    %v579 = vadd.f32 0.0, %v578
    %v580 = vpop.f32.mrb[0].mxu0
    %v581 = vadd.f32 0.0, %v580
    %v582 = vpop.f32.mrb[0].mxu0
    %v583 = vadd.f32 0.0, %v582
    %584 = vmatprep.mubr.bf16.mxu0 0
    %585 = vmatmul.mubr.bf16.gmra.mrb[0].mxu0 %v223
    %v586 = vpop.f32.mrb[0].mxu0
    %v587 = vadd.f32 0.0, %v586
    %v588 = vpop.f32.mrb[0].mxu0
    %v589 = vadd.f32 0.0, %v588
    %v590 = vpop.f32.mrb[0].mxu0
    %v591 = vadd.f32 0.0, %v590
    %v592 = vpop.f32.mrb[0].mxu0
    %v593 = vadd.f32 0.0, %v592
    %594 = vmatprep.mubr.bf16.mxu0 0
    %595 = vmatmul.mubr.bf16.gmra.mrb[0].mxu0 %v226
    %v596 = vpop.f32.mrb[0].mxu0
    %v597 = vadd.f32 0.0, %v596
    %v598 = vpop.f32.mrb[0].mxu0
    %v599 = vadd.f32 0.0, %v598
    %v600 = vpop.f32.mrb[0].mxu0
    %v601 = vadd.f32 0.0, %v600
    %v602 = vpop.f32.mrb[0].mxu0
    %v603 = vadd.f32 0.0, %v602
    %604 = vmatprep.mubr.bf16.mxu0 0
    %605 = vmatmul.mubr.bf16.gmra.mrb[0].mxu0 %v229
    %v606 = vpop.f32.mrb[0].mxu0
    %v607 = vadd.f32 0.0, %v606
    %v608 = vpop.f32.mrb[0].mxu0
    %v609 = vadd.f32 0.0, %v608
    %v610 = vpop.f32.mrb[0].mxu0
    %v611 = vadd.f32 0.0, %v610
    %v612 = vpop.f32.mrb[0].mxu0
    %v613 = vadd.f32 0.0, %v612
    %614 = vmatprep.mubr.bf16.mxu0 0
    %615 = vmatmul.mubr.bf16.gmra.mrb[0].mxu0 %v232
    %v616 = vpop.f32.mrb[0].mxu0
    %v617 = vadd.f32 0.0, %v616
    %v618 = vpop.f32.mrb[0].mxu0
    %v619 = vadd.f32 0.0, %v618
    %v620 = vpop.f32.mrb[0].mxu0
    %v621 = vadd.f32 0.0, %v620
    %v622 = vpop.f32.mrb[0].mxu0
    %v623 = vadd.f32 0.0, %v622
    %624 = vmatprep.mubr.bf16.mxu0 0
    %625 = vmatmul.mubr.bf16.gmra.mrb[0].mxu0 %v235
    %v626 = vpop.f32.mrb[0].mxu0
    %v627 = vadd.f32 0.0, %v626
    %v628 = vpop.f32.mrb[0].mxu0
    %v629 = vadd.f32 0.0, %v628
    %v630 = vpop.f32.mrb[0].mxu0
    %v631 = vadd.f32 0.0, %v630
    %v632 = vpop.f32.mrb[0].mxu0
    %v633 = vadd.f32 0.0, %v632
    %634 = vmatprep.mubr.bf16.mxu0 0
    %635 = vmatmul.mubr.bf16.gmra.mrb[0].mxu0 %v238
    %v636 = vpop.f32.mrb[0].mxu0
    %v637 = vadd.f32 0.0, %v636
    %v638 = vpop.f32.mrb[0].mxu0
    %v639 = vadd.f32 0.0, %v638
    %v640 = vpop.f32.mrb[0].mxu0
    %v641 = vadd.f32 0.0, %v640
    %v642 = vpop.f32.mrb[0].mxu0
    %v643 = vadd.f32 0.0, %v642
    %644 = vmatprep.mubr.bf16.mxu0 0
    %645 = vmatmul.mubr.bf16.gmra.mrb[0].mxu0 %v241
    %v646 = vpop.f32.mrb[0].mxu0
    %v647 = vadd.f32 0.0, %v646
    %v648 = vpop.f32.mrb[0].mxu0
    %v649 = vadd.f32 0.0, %v648
    %v650 = vpop.f32.mrb[0].mxu0
    %v651 = vadd.f32 0.0, %v650
    %v652 = vpop.f32.mrb[0].mxu0
    %v653 = vadd.f32 0.0, %v652
    %654 = vmatprep.mubr.bf16.mxu0 0
    %655 = vmatmul.mubr.bf16.gmra.mrb[0].mxu0 %v244
    %v656 = vpop.f32.mrb[0].mxu0
    %v657 = vadd.f32 0.0, %v656
    %v658 = vpop.f32.mrb[0].mxu0
    %v659 = vadd.f32 0.0, %v658
    %v660 = vpop.f32.mrb[0].mxu0
    %v661 = vadd.f32 0.0, %v660
    %v662 = vpop.f32.mrb[0].mxu0
    %v663 = vadd.f32 0.0, %v662
    %664 = vmatprep.mubr.bf16.mxu0 0
    %665 = vmatmul.mubr.bf16.gmra.mrb[0].mxu0 %v247
    %v666 = vpop.f32.mrb[0].mxu0
    %v667 = vadd.f32 0.0, %v666
    %v668 = vpop.f32.mrb[0].mxu0
    %v669 = vadd.f32 0.0, %v668
    %v670 = vpop.f32.mrb[0].mxu0
    %v671 = vadd.f32 0.0, %v670
    %v672 = vpop.f32.mrb[0].mxu0
    %v673 = vadd.f32 0.0, %v672
    %674 = vdwg.mxu0
    %675 = vmatprep.subr.bf16.mxu0 %v53
    %676 = vmatpush1.bf16.msra.mxu0 %v52
    %677 = vmatprep.subr.bf16.mxu0 %v61
    %678 = vmatpush1.bf16.msra.mxu0 %v60
    %679 = vmatprep.subr.bf16.mxu0 0
    %680 = vmatpush1.bf16.msra.mxu0 0
    %681 = vmatprep.subr.bf16.mxu0 0
    %682 = vmatpush1.bf16.msra.mxu0 0
    %683 = vmatprep.subr.bf16.mxu0 0
    %684 = vmatpush1.bf16.msra.mxu0 0
    %685 = vmatprep.subr.bf16.mxu0 0
    %686 = vmatpush1.bf16.msra.mxu0 0
    %687 = vmatprep.subr.bf16.mxu0 0
    %688 = vmatpush1.bf16.msra.mxu0 0
    %689 = vmatprep.subr.bf16.mxu0 0
    %690 = vmatpush1.bf16.msra.mxu0 0
    %691 = vmatprep.subr.bf16.mxu0 0
    %692 = vmatpush1.bf16.msra.mxu0 0
    %693 = vmatprep.subr.bf16.mxu0 0
    %694 = vmatpush1.bf16.msra.mxu0 0
    %695 = vmatprep.subr.bf16.mxu0 0
    %696 = vmatpush1.bf16.msra.mxu0 0
    %697 = vmatprep.subr.bf16.mxu0 0
    %698 = vmatpush1.bf16.msra.mxu0 0
    %699 = vmatprep.subr.bf16.mxu0 0
    %700 = vmatpush1.bf16.msra.mxu0 0
    %701 = vmatprep.subr.bf16.mxu0 0
    %702 = vmatpush1.bf16.msra.mxu0 0
    %703 = vmatprep.subr.bf16.mxu0 0
    %704 = vmatpush1.bf16.msra.mxu0 0
    %705 = vmatprep.subr.bf16.mxu0 0
    %706 = vmatpush1.bf16.msra.mxu0 0
    %707 = vmatprep.mubr.bf16.mxu0 0
    %708 = vmatmul.mubr.bf16.gmra.mrb[0].mxu0 %v196
    %v709 = vpop.f32.mrb[0].mxu0
    %v710 = vadd.f32 0.0, %v709
    %v711 = vpop.f32.mrb[0].mxu0
    %v712 = vadd.f32 0.0, %v711
    %v713 = vpop.f32.mrb[0].mxu0
    %v714 = vadd.f32 0.0, %v713
    %v715 = vpop.f32.mrb[0].mxu0
    %v716 = vadd.f32 0.0, %v715
    %717 = vmatprep.mubr.bf16.mxu0 0
    %718 = vmatmul.mubr.bf16.gmra.mrb[0].mxu0 %v199
    %v719 = vpop.f32.mrb[0].mxu0
    %v720 = vadd.f32 0.0, %v719
    %v721 = vpop.f32.mrb[0].mxu0
    %v722 = vadd.f32 0.0, %v721
    %v723 = vpop.f32.mrb[0].mxu0
    %v724 = vadd.f32 0.0, %v723
    %v725 = vpop.f32.mrb[0].mxu0
    %v726 = vadd.f32 0.0, %v725
    %727 = vmatprep.mubr.bf16.mxu0 0
    %728 = vmatmul.mubr.bf16.gmra.mrb[0].mxu0 %v202
    %v729 = vpop.f32.mrb[0].mxu0
    %v730 = vadd.f32 0.0, %v729
    %v731 = vpop.f32.mrb[0].mxu0
    %v732 = vadd.f32 0.0, %v731
    %v733 = vpop.f32.mrb[0].mxu0
    %v734 = vadd.f32 0.0, %v733
    %v735 = vpop.f32.mrb[0].mxu0
    %v736 = vadd.f32 0.0, %v735
    %737 = vmatprep.mubr.bf16.mxu0 0
    %738 = vmatmul.mubr.bf16.gmra.mrb[0].mxu0 %v205
    %v739 = vpop.f32.mrb[0].mxu0
    %v740 = vadd.f32 0.0, %v739
    %v741 = vpop.f32.mrb[0].mxu0
    %v742 = vadd.f32 0.0, %v741
    %v743 = vpop.f32.mrb[0].mxu0
    %v744 = vadd.f32 0.0, %v743
    %v745 = vpop.f32.mrb[0].mxu0
    %v746 = vadd.f32 0.0, %v745
    %747 = vmatprep.mubr.bf16.mxu0 0
    %748 = vmatmul.mubr.bf16.gmra.mrb[0].mxu0 %v208
    %v749 = vpop.f32.mrb[0].mxu0
    %v750 = vadd.f32 0.0, %v749
    %v751 = vpop.f32.mrb[0].mxu0
    %v752 = vadd.f32 0.0, %v751
    %v753 = vpop.f32.mrb[0].mxu0
    %v754 = vadd.f32 0.0, %v753
    %v755 = vpop.f32.mrb[0].mxu0
    %v756 = vadd.f32 0.0, %v755
    %757 = vmatprep.mubr.bf16.mxu0 0
    %758 = vmatmul.mubr.bf16.gmra.mrb[0].mxu0 %v211
    %v759 = vpop.f32.mrb[0].mxu0
    %v760 = vadd.f32 0.0, %v759
    %v761 = vpop.f32.mrb[0].mxu0
    %v762 = vadd.f32 0.0, %v761
    %v763 = vpop.f32.mrb[0].mxu0
    %v764 = vadd.f32 0.0, %v763
    %v765 = vpop.f32.mrb[0].mxu0
    %v766 = vadd.f32 0.0, %v765
    %767 = vmatprep.mubr.bf16.mxu0 0
    %768 = vmatmul.mubr.bf16.gmra.mrb[0].mxu0 %v214
    %v769 = vpop.f32.mrb[0].mxu0
    %v770 = vadd.f32 0.0, %v769
    %v771 = vpop.f32.mrb[0].mxu0
    %v772 = vadd.f32 0.0, %v771
    %v773 = vpop.f32.mrb[0].mxu0
    %v774 = vadd.f32 0.0, %v773
    %v775 = vpop.f32.mrb[0].mxu0
    %v776 = vadd.f32 0.0, %v775
    %777 = vmatprep.mubr.bf16.mxu0 0
    %778 = vmatmul.mubr.bf16.gmra.mrb[0].mxu0 %v217
    %v779 = vpop.f32.mrb[0].mxu0
    %v780 = vadd.f32 0.0, %v779
    %v781 = vpop.f32.mrb[0].mxu0
    %v782 = vadd.f32 0.0, %v781
    %v783 = vpop.f32.mrb[0].mxu0
    %v784 = vadd.f32 0.0, %v783
    %v785 = vpop.f32.mrb[0].mxu0
    %v786 = vadd.f32 0.0, %v785
    %787 = vmatprep.mubr.bf16.mxu0 0
    %788 = vmatmul.mubr.bf16.gmra.mrb[0].mxu0 %v220
    %v789 = vpop.f32.mrb[0].mxu0
    %v790 = vadd.f32 0.0, %v789
    %v791 = vpop.f32.mrb[0].mxu0
    %v792 = vadd.f32 0.0, %v791
    %v793 = vpop.f32.mrb[0].mxu0
    %v794 = vadd.f32 0.0, %v793
    %v795 = vpop.f32.mrb[0].mxu0
    %v796 = vadd.f32 0.0, %v795
    %797 = vmatprep.mubr.bf16.mxu0 0
    %798 = vmatmul.mubr.bf16.gmra.mrb[0].mxu0 %v223
    %v799 = vpop.f32.mrb[0].mxu0
    %v800 = vadd.f32 0.0, %v799
    %v801 = vpop.f32.mrb[0].mxu0
    %v802 = vadd.f32 0.0, %v801
    %v803 = vpop.f32.mrb[0].mxu0
    %v804 = vadd.f32 0.0, %v803
    %v805 = vpop.f32.mrb[0].mxu0
    %v806 = vadd.f32 0.0, %v805
    %807 = vmatprep.mubr.bf16.mxu0 0
    %808 = vmatmul.mubr.bf16.gmra.mrb[0].mxu0 %v226
    %v809 = vpop.f32.mrb[0].mxu0
    %v810 = vadd.f32 0.0, %v809
    %v811 = vpop.f32.mrb[0].mxu0
    %v812 = vadd.f32 0.0, %v811
    %v813 = vpop.f32.mrb[0].mxu0
    %v814 = vadd.f32 0.0, %v813
    %v815 = vpop.f32.mrb[0].mxu0
    %v816 = vadd.f32 0.0, %v815
    %817 = vmatprep.mubr.bf16.mxu0 0
    %818 = vmatmul.mubr.bf16.gmra.mrb[0].mxu0 %v229
    %v819 = vpop.f32.mrb[0].mxu0
    %v820 = vadd.f32 0.0, %v819
    %v821 = vpop.f32.mrb[0].mxu0
    %v822 = vadd.f32 0.0, %v821
    %v823 = vpop.f32.mrb[0].mxu0
    %v824 = vadd.f32 0.0, %v823
    %v825 = vpop.f32.mrb[0].mxu0
    %v826 = vadd.f32 0.0, %v825
    %827 = vmatprep.mubr.bf16.mxu0 0
    %828 = vmatmul.mubr.bf16.gmra.mrb[0].mxu0 %v232
    %v829 = vpop.f32.mrb[0].mxu0
    %v830 = vadd.f32 0.0, %v829
    %v831 = vpop.f32.mrb[0].mxu0
    %v832 = vadd.f32 0.0, %v831
    %v833 = vpop.f32.mrb[0].mxu0
    %v834 = vadd.f32 0.0, %v833
    %v835 = vpop.f32.mrb[0].mxu0
    %v836 = vadd.f32 0.0, %v835
    %837 = vmatprep.mubr.bf16.mxu0 0
    %838 = vmatmul.mubr.bf16.gmra.mrb[0].mxu0 %v235
    %v839 = vpop.f32.mrb[0].mxu0
    %v840 = vadd.f32 0.0, %v839
    %v841 = vpop.f32.mrb[0].mxu0
    %v842 = vadd.f32 0.0, %v841
    %v843 = vpop.f32.mrb[0].mxu0
    %v844 = vadd.f32 0.0, %v843
    %v845 = vpop.f32.mrb[0].mxu0
    %v846 = vadd.f32 0.0, %v845
    %847 = vmatprep.mubr.bf16.mxu0 0
    %848 = vmatmul.mubr.bf16.gmra.mrb[0].mxu0 %v238
    %v849 = vpop.f32.mrb[0].mxu0
    %v850 = vadd.f32 0.0, %v849
    %v851 = vpop.f32.mrb[0].mxu0
    %v852 = vadd.f32 0.0, %v851
    %v853 = vpop.f32.mrb[0].mxu0
    %v854 = vadd.f32 0.0, %v853
    %v855 = vpop.f32.mrb[0].mxu0
    %v856 = vadd.f32 0.0, %v855
    %857 = vmatprep.mubr.bf16.mxu0 0
    %858 = vmatmul.mubr.bf16.gmra.mrb[0].mxu0 %v241
    %v859 = vpop.f32.mrb[0].mxu0
    %v860 = vadd.f32 0.0, %v859
    %v861 = vpop.f32.mrb[0].mxu0
    %v862 = vadd.f32 0.0, %v861
    %v863 = vpop.f32.mrb[0].mxu0
    %v864 = vadd.f32 0.0, %v863
    %v865 = vpop.f32.mrb[0].mxu0
    %v866 = vadd.f32 0.0, %v865
    %867 = vmatprep.mubr.bf16.mxu0 0
    %868 = vmatmul.mubr.bf16.gmra.mrb[0].mxu0 %v244
    %v869 = vpop.f32.mrb[0].mxu0
    %v870 = vadd.f32 0.0, %v869
    %v871 = vpop.f32.mrb[0].mxu0
    %v872 = vadd.f32 0.0, %v871
    %v873 = vpop.f32.mrb[0].mxu0
    %v874 = vadd.f32 0.0, %v873
    %v875 = vpop.f32.mrb[0].mxu0
    %v876 = vadd.f32 0.0, %v875
    %877 = vmatprep.mubr.bf16.mxu0 0
    %878 = vmatmul.mubr.bf16.gmra.mrb[0].mxu0 %v247
    %v879 = vpop.f32.mrb[0].mxu0
    %v880 = vadd.f32 0.0, %v879
    %v881 = vpop.f32.mrb[0].mxu0
    %v882 = vadd.f32 0.0, %v881
    %v883 = vpop.f32.mrb[0].mxu0
    %v884 = vadd.f32 0.0, %v883
    %v885 = vpop.f32.mrb[0].mxu0
    %v886 = vadd.f32 0.0, %v885
    %887 = vdwg.mxu0
    %888 = vmatprep.subr.bf16.mxu0 %v55
    %889 = vmatpush1.bf16.msra.mxu0 %v54
    %890 = vmatprep.subr.bf16.mxu0 %v63
    %891 = vmatpush1.bf16.msra.mxu0 %v62
    %892 = vmatprep.subr.bf16.mxu0 0
    %893 = vmatpush1.bf16.msra.mxu0 0
    %894 = vmatprep.subr.bf16.mxu0 0
    %895 = vmatpush1.bf16.msra.mxu0 0
    %896 = vmatprep.subr.bf16.mxu0 0
    %897 = vmatpush1.bf16.msra.mxu0 0
    %898 = vmatprep.subr.bf16.mxu0 0
    %899 = vmatpush1.bf16.msra.mxu0 0
    %900 = vmatprep.subr.bf16.mxu0 0
    %901 = vmatpush1.bf16.msra.mxu0 0
    %902 = vmatprep.subr.bf16.mxu0 0
    %903 = vmatpush1.bf16.msra.mxu0 0
    %904 = vmatprep.subr.bf16.mxu0 0
    %905 = vmatpush1.bf16.msra.mxu0 0
    %906 = vmatprep.subr.bf16.mxu0 0
    %907 = vmatpush1.bf16.msra.mxu0 0
    %908 = vmatprep.subr.bf16.mxu0 0
    %909 = vmatpush1.bf16.msra.mxu0 0
    %910 = vmatprep.subr.bf16.mxu0 0
    %911 = vmatpush1.bf16.msra.mxu0 0
    %912 = vmatprep.subr.bf16.mxu0 0
    %913 = vmatpush1.bf16.msra.mxu0 0
    %914 = vmatprep.subr.bf16.mxu0 0
    %915 = vmatpush1.bf16.msra.mxu0 0
    %916 = vmatprep.subr.bf16.mxu0 0
    %917 = vmatpush1.bf16.msra.mxu0 0
    %918 = vmatprep.subr.bf16.mxu0 0
    %919 = vmatpush1.bf16.msra.mxu0 0
    %920 = vmatprep.mubr.bf16.mxu0 0
    %921 = vmatmul.mubr.bf16.gmra.mrb[0].mxu0 %v196
    %v922 = vpop.f32.mrb[0].mxu0
    %v923 = vadd.f32 0.0, %v922
    %v924 = vpop.f32.mrb[0].mxu0
    %v925 = vpop.f32.mrb[0].mxu0
    %v926 = vadd.f32 0.0, %v925
    %v927 = vpop.f32.mrb[0].mxu0
    %928 = vmatprep.mubr.bf16.mxu0 0
    %929 = vmatmul.mubr.bf16.gmra.mrb[0].mxu0 %v199
    %v930 = vpop.f32.mrb[0].mxu0
    %v931 = vadd.f32 0.0, %v930
    %v932 = vpop.f32.mrb[0].mxu0
    %v933 = vpop.f32.mrb[0].mxu0
    %v934 = vadd.f32 0.0, %v933
    %v935 = vpop.f32.mrb[0].mxu0
    %936 = vmatprep.mubr.bf16.mxu0 0
    %937 = vmatmul.mubr.bf16.gmra.mrb[0].mxu0 %v202
    %v938 = vpop.f32.mrb[0].mxu0
    %v939 = vadd.f32 0.0, %v938
    %v940 = vpop.f32.mrb[0].mxu0
    %v941 = vadd.f32 0.0, %v940
    %v942 = vpop.f32.mrb[0].mxu0
    %v943 = vadd.f32 0.0, %v942
    %v944 = vpop.f32.mrb[0].mxu0
    %v945 = vadd.f32 0.0, %v944
    %946 = vmatprep.mubr.bf16.mxu0 0
    %947 = vmatmul.mubr.bf16.gmra.mrb[0].mxu0 %v205
    %v948 = vpop.f32.mrb[0].mxu0
    %v949 = vadd.f32 0.0, %v948
    %v950 = vpop.f32.mrb[0].mxu0
    %v951 = vadd.f32 0.0, %v950
    %v952 = vpop.f32.mrb[0].mxu0
    %v953 = vadd.f32 0.0, %v952
    %v954 = vpop.f32.mrb[0].mxu0
    %v955 = vadd.f32 0.0, %v954
    %956 = vmatprep.mubr.bf16.mxu0 0
    %957 = vmatmul.mubr.bf16.gmra.mrb[0].mxu0 %v208
    %v958 = vpop.f32.mrb[0].mxu0
    %v959 = vadd.f32 0.0, %v958
    %v960 = vpop.f32.mrb[0].mxu0
    %v961 = vadd.f32 0.0, %v960
    %v962 = vpop.f32.mrb[0].mxu0
    %v963 = vadd.f32 0.0, %v962
    %v964 = vpop.f32.mrb[0].mxu0
    %v965 = vadd.f32 0.0, %v964
    %966 = vmatprep.mubr.bf16.mxu0 0
    %967 = vmatmul.mubr.bf16.gmra.mrb[0].mxu0 %v211
    %v968 = vpop.f32.mrb[0].mxu0
    %v969 = vadd.f32 0.0, %v968
    %v970 = vpop.f32.mrb[0].mxu0
    %v971 = vadd.f32 0.0, %v970
    %v972 = vpop.f32.mrb[0].mxu0
    %v973 = vadd.f32 0.0, %v972
    %v974 = vpop.f32.mrb[0].mxu0
    %v975 = vadd.f32 0.0, %v974
    %976 = vmatprep.mubr.bf16.mxu0 0
    %977 = vmatmul.mubr.bf16.gmra.mrb[0].mxu0 %v214
    %v978 = vpop.f32.mrb[0].mxu0
    %v979 = vadd.f32 0.0, %v978
    %v980 = vpop.f32.mrb[0].mxu0
    %v981 = vadd.f32 0.0, %v980
    %v982 = vpop.f32.mrb[0].mxu0
    %v983 = vadd.f32 0.0, %v982
    %v984 = vpop.f32.mrb[0].mxu0
    %v985 = vadd.f32 0.0, %v984
    %986 = vmatprep.mubr.bf16.mxu0 0
    %987 = vmatmul.mubr.bf16.gmra.mrb[0].mxu0 %v217
    %v988 = vpop.f32.mrb[0].mxu0
    %v989 = vadd.f32 0.0, %v988
    %v990 = vpop.f32.mrb[0].mxu0
    %v991 = vadd.f32 0.0, %v990
    %v992 = vpop.f32.mrb[0].mxu0
    %v993 = vadd.f32 0.0, %v992
    %v994 = vpop.f32.mrb[0].mxu0
    %v995 = vadd.f32 0.0, %v994
    %996 = vmatprep.mubr.bf16.mxu0 0
    %997 = vmatmul.mubr.bf16.gmra.mrb[0].mxu0 %v220
    %v998 = vpop.f32.mrb[0].mxu0
    %v999 = vadd.f32 0.0, %v998
    %v1000 = vpop.f32.mrb[0].mxu0
    %v1001 = vadd.f32 0.0, %v1000
    %v1002 = vpop.f32.mrb[0].mxu0
    %v1003 = vadd.f32 0.0, %v1002
    %v1004 = vpop.f32.mrb[0].mxu0
    %v1005 = vadd.f32 0.0, %v1004
    %1006 = vmatprep.mubr.bf16.mxu0 0
    %1007 = vmatmul.mubr.bf16.gmra.mrb[0].mxu0 %v223
    %v1008 = vpop.f32.mrb[0].mxu0
    %v1009 = vadd.f32 0.0, %v1008
    %v1010 = vpop.f32.mrb[0].mxu0
    %v1011 = vadd.f32 0.0, %v1010
    %v1012 = vpop.f32.mrb[0].mxu0
    %v1013 = vadd.f32 0.0, %v1012
    %v1014 = vpop.f32.mrb[0].mxu0
    %v1015 = vadd.f32 0.0, %v1014
    %1016 = vmatprep.mubr.bf16.mxu0 0
    %1017 = vmatmul.mubr.bf16.gmra.mrb[0].mxu0 %v226
    %v1018 = vpop.f32.mrb[0].mxu0
    %v1019 = vadd.f32 0.0, %v1018
    %v1020 = vpop.f32.mrb[0].mxu0
    %v1021 = vadd.f32 0.0, %v1020
    %v1022 = vpop.f32.mrb[0].mxu0
    %v1023 = vadd.f32 0.0, %v1022
    %v1024 = vpop.f32.mrb[0].mxu0
    %v1025 = vadd.f32 0.0, %v1024
    %1026 = vmatprep.mubr.bf16.mxu0 0
    %1027 = vmatmul.mubr.bf16.gmra.mrb[0].mxu0 %v229
    %v1028 = vpop.f32.mrb[0].mxu0
    %v1029 = vadd.f32 0.0, %v1028
    %v1030 = vpop.f32.mrb[0].mxu0
    %v1031 = vadd.f32 0.0, %v1030
    %v1032 = vpop.f32.mrb[0].mxu0
    %v1033 = vadd.f32 0.0, %v1032
    %v1034 = vpop.f32.mrb[0].mxu0
    %v1035 = vadd.f32 0.0, %v1034
    %1036 = vmatprep.mubr.bf16.mxu0 0
    %1037 = vmatmul.mubr.bf16.gmra.mrb[0].mxu0 %v232
    %v1038 = vpop.f32.mrb[0].mxu0
    %v1039 = vadd.f32 0.0, %v1038
    %v1040 = vpop.f32.mrb[0].mxu0
    %v1041 = vadd.f32 0.0, %v1040
    %v1042 = vpop.f32.mrb[0].mxu0
    %v1043 = vadd.f32 0.0, %v1042
    %v1044 = vpop.f32.mrb[0].mxu0
    %v1045 = vadd.f32 0.0, %v1044
    %1046 = vmatprep.mubr.bf16.mxu0 0
    %1047 = vmatmul.mubr.bf16.gmra.mrb[0].mxu0 %v235
    %v1048 = vpop.f32.mrb[0].mxu0
    %v1049 = vadd.f32 0.0, %v1048
    %v1050 = vpop.f32.mrb[0].mxu0
    %v1051 = vadd.f32 0.0, %v1050
    %v1052 = vpop.f32.mrb[0].mxu0
    %v1053 = vadd.f32 0.0, %v1052
    %v1054 = vpop.f32.mrb[0].mxu0
    %v1055 = vadd.f32 0.0, %v1054
    %1056 = vmatprep.mubr.bf16.mxu0 0
    %1057 = vmatmul.mubr.bf16.gmra.mrb[0].mxu0 %v238
    %v1058 = vpop.f32.mrb[0].mxu0
    %v1059 = vadd.f32 0.0, %v1058
    %v1060 = vpop.f32.mrb[0].mxu0
    %v1061 = vadd.f32 0.0, %v1060
    %v1062 = vpop.f32.mrb[0].mxu0
    %v1063 = vadd.f32 0.0, %v1062
    %v1064 = vpop.f32.mrb[0].mxu0
    %v1065 = vadd.f32 0.0, %v1064
    %1066 = vmatprep.mubr.bf16.mxu0 0
    %1067 = vmatmul.mubr.bf16.gmra.mrb[0].mxu0 %v241
    %v1068 = vpop.f32.mrb[0].mxu0
    %v1069 = vadd.f32 0.0, %v1068
    %v1070 = vpop.f32.mrb[0].mxu0
    %v1071 = vadd.f32 0.0, %v1070
    %v1072 = vpop.f32.mrb[0].mxu0
    %v1073 = vadd.f32 0.0, %v1072
    %v1074 = vpop.f32.mrb[0].mxu0
    %v1075 = vadd.f32 0.0, %v1074
    %1076 = vmatprep.mubr.bf16.mxu0 0
    %1077 = vmatmul.mubr.bf16.gmra.mrb[0].mxu0 %v244
    %v1078 = vpop.f32.mrb[0].mxu0
    %v1079 = vadd.f32 0.0, %v1078
    %v1080 = vpop.f32.mrb[0].mxu0
    %v1081 = vadd.f32 0.0, %v1080
    %v1082 = vpop.f32.mrb[0].mxu0
    %v1083 = vadd.f32 0.0, %v1082
    %v1084 = vpop.f32.mrb[0].mxu0
    %v1085 = vadd.f32 0.0, %v1084
    %1086 = vmatprep.mubr.bf16.mxu0 0
    %1087 = vmatmul.mubr.bf16.gmra.mrb[0].mxu0 %v247
    %v1088 = vpop.f32.mrb[0].mxu0
    %v1089 = vadd.f32 0.0, %v1088
    %v1090 = vpop.f32.mrb[0].mxu0
    %v1091 = vadd.f32 0.0, %v1090
    %v1092 = vpop.f32.mrb[0].mxu0
    %v1093 = vadd.f32 0.0, %v1092
    %v1094 = vpop.f32.mrb[0].mxu0
    %v1095 = vadd.f32 0.0, %v1094
    %1096 = vdwg.mxu0
    %1129 = vrot.lane.b32.xlu0 %v304, 127
    %v1130 = vpop.permute.xlu0 %1129
    %1131 = vrot.lane.b32.xlu0 %v306, 127
    %v1132 = vpop.permute.xlu0 %1131
    %1133 = vrot.lane.b32.xlu0 %v517, 127
    %v1134 = vpop.permute.xlu0 %1133
    %1135 = vrot.lane.b32.xlu0 %v519, 127
    %v1136 = vpop.permute.xlu0 %1135
    %1137 = vrot.lane.b32.xlu0 %v730, 127
    %v1138 = vpop.permute.xlu0 %1137
    %1139 = vrot.lane.b32.xlu0 %v732, 127
    %v1140 = vpop.permute.xlu0 %1139
    %1141 = vrot.lane.b32.xlu0 %v939, 127
    %v1142 = vpop.permute.xlu0 %1141
    %1143 = vrot.lane.b32.xlu0 %v941, 127
    %v1144 = vpop.permute.xlu0 %1143
    %1145 = vrot.lane.b32.xlu0 %v308, 127
    %v1146 = vpop.permute.xlu0 %1145
    %1147 = vrot.lane.b32.xlu0 %v310, 127
    %v1148 = vpop.permute.xlu0 %1147
    %1149 = vrot.lane.b32.xlu0 %v521, 127
    %v1150 = vpop.permute.xlu0 %1149
    %1151 = vrot.lane.b32.xlu0 %v523, 127
    %v1152 = vpop.permute.xlu0 %1151
    %1153 = vrot.lane.b32.xlu0 %v734, 127
    %v1154 = vpop.permute.xlu0 %1153
    %1155 = vrot.lane.b32.xlu0 %v736, 127
    %v1156 = vpop.permute.xlu0 %1155
    %1157 = vrot.lane.b32.xlu0 %v943, 127
    %v1158 = vpop.permute.xlu0 %1157
    %1159 = vrot.lane.b32.xlu0 %v945, 127
    %v1160 = vpop.permute.xlu0 %1159
    %1161 = vrot.lane.b32.xlu0 %v314, 127
    %v1162 = vpop.permute.xlu0 %1161
    %1163 = vrot.lane.b32.xlu0 %v316, 127
    %v1164 = vpop.permute.xlu0 %1163
    %1165 = vrot.lane.b32.xlu0 %v527, 127
    %v1166 = vpop.permute.xlu0 %1165
    %1167 = vrot.lane.b32.xlu0 %v529, 127
    %v1168 = vpop.permute.xlu0 %1167
    %1169 = vrot.lane.b32.xlu0 %v740, 127
    %v1170 = vpop.permute.xlu0 %1169
    %1171 = vrot.lane.b32.xlu0 %v742, 127
    %v1172 = vpop.permute.xlu0 %1171
    %1173 = vrot.lane.b32.xlu0 %v949, 127
    %v1174 = vpop.permute.xlu0 %1173
    %1175 = vrot.lane.b32.xlu0 %v951, 127
    %v1176 = vpop.permute.xlu0 %1175
    %1177 = vrot.lane.b32.xlu0 %v318, 127
    %v1178 = vpop.permute.xlu0 %1177
    %1179 = vrot.lane.b32.xlu0 %v320, 127
    %v1180 = vpop.permute.xlu0 %1179
    %1181 = vrot.lane.b32.xlu0 %v531, 127
    %v1182 = vpop.permute.xlu0 %1181
    %1183 = vrot.lane.b32.xlu0 %v533, 127
    %v1184 = vpop.permute.xlu0 %1183
    %1185 = vrot.lane.b32.xlu0 %v744, 127
    %v1186 = vpop.permute.xlu0 %1185
    %1187 = vrot.lane.b32.xlu0 %v746, 127
    %v1188 = vpop.permute.xlu0 %1187
    %1189 = vrot.lane.b32.xlu0 %v953, 127
    %v1190 = vpop.permute.xlu0 %1189
    %1191 = vrot.lane.b32.xlu0 %v955, 127
    %v1192 = vpop.permute.xlu0 %1191
    %vm1193 = vcmask 1039360
    %v1194 = vsel %vm1193, %v1130, %v1132
    %v1195 = vsel %vm1193, %v1132, %v1134
    %v1196 = vsel %vm1193, %v1134, %v1136
    %v1197 = vsel %vm1193, %v1136, %v1138
    %v1198 = vsel %vm1193, %v1138, %v1140
    %v1199 = vsel %vm1193, %v1140, %v1142
    %v1200 = vsel %vm1193, %v1142, %v1144
    %v1201 = vsel %vm1193, %v1146, %v1148
    %v1202 = vsel %vm1193, %v1148, %v1150
    %v1203 = vsel %vm1193, %v1150, %v1152
    %v1204 = vsel %vm1193, %v1152, %v1154
    %v1205 = vsel %vm1193, %v1154, %v1156
    %v1206 = vsel %vm1193, %v1156, %v1158
    %v1207 = vsel %vm1193, %v1158, %v1160
    %v1208 = vsel %vm1193, %v1162, %v1164
    %v1209 = vsel %vm1193, %v1164, %v1166
    %v1210 = vsel %vm1193, %v1166, %v1168
    %v1211 = vsel %vm1193, %v1168, %v1170
    %v1212 = vsel %vm1193, %v1170, %v1172
    %v1213 = vsel %vm1193, %v1172, %v1174
    %v1214 = vsel %vm1193, %v1174, %v1176
    %v1215 = vsel %vm1193, %v1178, %v1180
    %v1216 = vsel %vm1193, %v1180, %v1182
    %v1217 = vsel %vm1193, %v1182, %v1184
    %v1218 = vsel %vm1193, %v1184, %v1186
    %v1219 = vsel %vm1193, %v1186, %v1188
    %v1220 = vsel %vm1193, %v1188, %v1190
    %v1221 = vsel %vm1193, %v1190, %v1192
    %v1250 = vadd.f32 %v284, %v1194
    %v1251 = vadd.f32 %v286, %v1195
    %v1252 = vadd.f32 %v497, %v1196
    %v1253 = vadd.f32 %v499, %v1197
    %v1254 = vadd.f32 %v710, %v1198
    %v1255 = vadd.f32 %v712, %v1199
    %v1256 = vadd.f32 %v923, %v1200
    %v1257 = vadd.f32 %v288, %v1201
    %v1258 = vadd.f32 %v290, %v1202
    %v1259 = vadd.f32 %v501, %v1203
    %v1260 = vadd.f32 %v503, %v1204
    %v1261 = vadd.f32 %v714, %v1205
    %v1262 = vadd.f32 %v716, %v1206
    %v1263 = vadd.f32 %v926, %v1207
    %v1264 = vadd.f32 %v294, %v1208
    %v1265 = vadd.f32 %v296, %v1209
    %v1266 = vadd.f32 %v507, %v1210
    %v1267 = vadd.f32 %v509, %v1211
    %v1268 = vadd.f32 %v720, %v1212
    %v1269 = vadd.f32 %v722, %v1213
    %v1270 = vadd.f32 %v931, %v1214
    %v1271 = vadd.f32 %v298, %v1215
    %v1272 = vadd.f32 %v300, %v1216
    %v1273 = vadd.f32 %v511, %v1217
    %v1274 = vadd.f32 %v513, %v1218
    %v1275 = vadd.f32 %v724, %v1219
    %v1276 = vadd.f32 %v726, %v1220
    %v1277 = vadd.f32 %v934, %v1221
    %1310 = vrot.lane.b32.xlu0 %v324, 126
    %v1311 = vpop.permute.xlu0 %1310
    %1312 = vrot.lane.b32.xlu0 %v326, 126
    %v1313 = vpop.permute.xlu0 %1312
    %1314 = vrot.lane.b32.xlu0 %v537, 126
    %v1315 = vpop.permute.xlu0 %1314
    %1316 = vrot.lane.b32.xlu0 %v539, 126
    %v1317 = vpop.permute.xlu0 %1316
    %1318 = vrot.lane.b32.xlu0 %v750, 126
    %v1319 = vpop.permute.xlu0 %1318
    %1320 = vrot.lane.b32.xlu0 %v752, 126
    %v1321 = vpop.permute.xlu0 %1320
    %1322 = vrot.lane.b32.xlu0 %v959, 126
    %v1323 = vpop.permute.xlu0 %1322
    %1324 = vrot.lane.b32.xlu0 %v961, 126
    %v1325 = vpop.permute.xlu0 %1324
    %1326 = vrot.lane.b32.xlu0 %v328, 126
    %v1327 = vpop.permute.xlu0 %1326
    %1328 = vrot.lane.b32.xlu0 %v330, 126
    %v1329 = vpop.permute.xlu0 %1328
    %1330 = vrot.lane.b32.xlu0 %v541, 126
    %v1331 = vpop.permute.xlu0 %1330
    %1332 = vrot.lane.b32.xlu0 %v543, 126
    %v1333 = vpop.permute.xlu0 %1332
    %1334 = vrot.lane.b32.xlu0 %v754, 126
    %v1335 = vpop.permute.xlu0 %1334
    %1336 = vrot.lane.b32.xlu0 %v756, 126
    %v1337 = vpop.permute.xlu0 %1336
    %1338 = vrot.lane.b32.xlu0 %v963, 126
    %v1339 = vpop.permute.xlu0 %1338
    %1340 = vrot.lane.b32.xlu0 %v965, 126
    %v1341 = vpop.permute.xlu0 %1340
    %1342 = vrot.lane.b32.xlu0 %v334, 126
    %v1343 = vpop.permute.xlu0 %1342
    %1344 = vrot.lane.b32.xlu0 %v336, 126
    %v1345 = vpop.permute.xlu0 %1344
    %1346 = vrot.lane.b32.xlu0 %v547, 126
    %v1347 = vpop.permute.xlu0 %1346
    %1348 = vrot.lane.b32.xlu0 %v549, 126
    %v1349 = vpop.permute.xlu0 %1348
    %1350 = vrot.lane.b32.xlu0 %v760, 126
    %v1351 = vpop.permute.xlu0 %1350
    %1352 = vrot.lane.b32.xlu0 %v762, 126
    %v1353 = vpop.permute.xlu0 %1352
    %1354 = vrot.lane.b32.xlu0 %v969, 126
    %v1355 = vpop.permute.xlu0 %1354
    %1356 = vrot.lane.b32.xlu0 %v971, 126
    %v1357 = vpop.permute.xlu0 %1356
    %1358 = vrot.lane.b32.xlu0 %v338, 126
    %v1359 = vpop.permute.xlu0 %1358
    %1360 = vrot.lane.b32.xlu0 %v340, 126
    %v1361 = vpop.permute.xlu0 %1360
    %1362 = vrot.lane.b32.xlu0 %v551, 126
    %v1363 = vpop.permute.xlu0 %1362
    %1364 = vrot.lane.b32.xlu0 %v553, 126
    %v1365 = vpop.permute.xlu0 %1364
    %1366 = vrot.lane.b32.xlu0 %v764, 126
    %v1367 = vpop.permute.xlu0 %1366
    %1368 = vrot.lane.b32.xlu0 %v766, 126
    %v1369 = vpop.permute.xlu0 %1368
    %1370 = vrot.lane.b32.xlu0 %v973, 126
    %v1371 = vpop.permute.xlu0 %1370
    %1372 = vrot.lane.b32.xlu0 %v975, 126
    %v1373 = vpop.permute.xlu0 %1372
    %vm1374 = vcmask 1031168
    %v1375 = vsel %vm1374, %v1311, %v1313
    %v1376 = vsel %vm1374, %v1313, %v1315
    %v1377 = vsel %vm1374, %v1315, %v1317
    %v1378 = vsel %vm1374, %v1317, %v1319
    %v1379 = vsel %vm1374, %v1319, %v1321
    %v1380 = vsel %vm1374, %v1321, %v1323
    %v1381 = vsel %vm1374, %v1323, %v1325
    %v1382 = vsel %vm1374, %v1327, %v1329
    %v1383 = vsel %vm1374, %v1329, %v1331
    %v1384 = vsel %vm1374, %v1331, %v1333
    %v1385 = vsel %vm1374, %v1333, %v1335
    %v1386 = vsel %vm1374, %v1335, %v1337
    %v1387 = vsel %vm1374, %v1337, %v1339
    %v1388 = vsel %vm1374, %v1339, %v1341
    %v1389 = vsel %vm1374, %v1343, %v1345
    %v1390 = vsel %vm1374, %v1345, %v1347
    %v1391 = vsel %vm1374, %v1347, %v1349
    %v1392 = vsel %vm1374, %v1349, %v1351
    %v1393 = vsel %vm1374, %v1351, %v1353
    %v1394 = vsel %vm1374, %v1353, %v1355
    %v1395 = vsel %vm1374, %v1355, %v1357
    %v1396 = vsel %vm1374, %v1359, %v1361
    %v1397 = vsel %vm1374, %v1361, %v1363
    %v1398 = vsel %vm1374, %v1363, %v1365
    %v1399 = vsel %vm1374, %v1365, %v1367
    %v1400 = vsel %vm1374, %v1367, %v1369
    %v1401 = vsel %vm1374, %v1369, %v1371
    %v1402 = vsel %vm1374, %v1371, %v1373
    %v1431 = vadd.f32 %v1250, %v1375
    %v1432 = vadd.f32 %v1251, %v1376
    %v1433 = vadd.f32 %v1252, %v1377
    %v1434 = vadd.f32 %v1253, %v1378
    %v1435 = vadd.f32 %v1254, %v1379
    %v1436 = vadd.f32 %v1255, %v1380
    %v1437 = vadd.f32 %v1256, %v1381
    %v1438 = vadd.f32 %v1257, %v1382
    %v1439 = vadd.f32 %v1258, %v1383
    %v1440 = vadd.f32 %v1259, %v1384
    %v1441 = vadd.f32 %v1260, %v1385
    %v1442 = vadd.f32 %v1261, %v1386
    %v1443 = vadd.f32 %v1262, %v1387
    %v1444 = vadd.f32 %v1263, %v1388
    %v1445 = vadd.f32 %v1264, %v1389
    %v1446 = vadd.f32 %v1265, %v1390
    %v1447 = vadd.f32 %v1266, %v1391
    %v1448 = vadd.f32 %v1267, %v1392
    %v1449 = vadd.f32 %v1268, %v1393
    %v1450 = vadd.f32 %v1269, %v1394
    %v1451 = vadd.f32 %v1270, %v1395
    %v1452 = vadd.f32 %v1271, %v1396
    %v1453 = vadd.f32 %v1272, %v1397
    %v1454 = vadd.f32 %v1273, %v1398
    %v1455 = vadd.f32 %v1274, %v1399
    %v1456 = vadd.f32 %v1275, %v1400
    %v1457 = vadd.f32 %v1276, %v1401
    %v1458 = vadd.f32 %v1277, %v1402
    %1491 = vrot.lane.b32.xlu0 %v344, 110
    %v1492 = vpop.permute.xlu0 %1491
    %1493 = vrot.lane.b32.xlu0 %v346, 110
    %v1494 = vpop.permute.xlu0 %1493
    %1495 = vrot.lane.b32.xlu0 %v557, 110
    %v1496 = vpop.permute.xlu0 %1495
    %1497 = vrot.lane.b32.xlu0 %v559, 110
    %v1498 = vpop.permute.xlu0 %1497
    %1499 = vrot.lane.b32.xlu0 %v770, 110
    %v1500 = vpop.permute.xlu0 %1499
    %1501 = vrot.lane.b32.xlu0 %v772, 110
    %v1502 = vpop.permute.xlu0 %1501
    %1503 = vrot.lane.b32.xlu0 %v979, 110
    %v1504 = vpop.permute.xlu0 %1503
    %1505 = vrot.lane.b32.xlu0 %v981, 110
    %v1506 = vpop.permute.xlu0 %1505
    %1507 = vrot.lane.b32.xlu0 %v348, 110
    %v1508 = vpop.permute.xlu0 %1507
    %1509 = vrot.lane.b32.xlu0 %v350, 110
    %v1510 = vpop.permute.xlu0 %1509
    %1511 = vrot.lane.b32.xlu0 %v561, 110
    %v1512 = vpop.permute.xlu0 %1511
    %1513 = vrot.lane.b32.xlu0 %v563, 110
    %v1514 = vpop.permute.xlu0 %1513
    %1515 = vrot.lane.b32.xlu0 %v774, 110
    %v1516 = vpop.permute.xlu0 %1515
    %1517 = vrot.lane.b32.xlu0 %v776, 110
    %v1518 = vpop.permute.xlu0 %1517
    %1519 = vrot.lane.b32.xlu0 %v983, 110
    %v1520 = vpop.permute.xlu0 %1519
    %1521 = vrot.lane.b32.xlu0 %v985, 110
    %v1522 = vpop.permute.xlu0 %1521
    %1523 = vrot.lane.b32.xlu0 %v354, 110
    %v1524 = vpop.permute.xlu0 %1523
    %1525 = vrot.lane.b32.xlu0 %v356, 110
    %v1526 = vpop.permute.xlu0 %1525
    %1527 = vrot.lane.b32.xlu0 %v567, 110
    %v1528 = vpop.permute.xlu0 %1527
    %1529 = vrot.lane.b32.xlu0 %v569, 110
    %v1530 = vpop.permute.xlu0 %1529
    %1531 = vrot.lane.b32.xlu0 %v780, 110
    %v1532 = vpop.permute.xlu0 %1531
    %1533 = vrot.lane.b32.xlu0 %v782, 110
    %v1534 = vpop.permute.xlu0 %1533
    %1535 = vrot.lane.b32.xlu0 %v989, 110
    %v1536 = vpop.permute.xlu0 %1535
    %1537 = vrot.lane.b32.xlu0 %v991, 110
    %v1538 = vpop.permute.xlu0 %1537
    %1539 = vrot.lane.b32.xlu0 %v358, 110
    %v1540 = vpop.permute.xlu0 %1539
    %1541 = vrot.lane.b32.xlu0 %v360, 110
    %v1542 = vpop.permute.xlu0 %1541
    %1543 = vrot.lane.b32.xlu0 %v571, 110
    %v1544 = vpop.permute.xlu0 %1543
    %1545 = vrot.lane.b32.xlu0 %v573, 110
    %v1546 = vpop.permute.xlu0 %1545
    %1547 = vrot.lane.b32.xlu0 %v784, 110
    %v1548 = vpop.permute.xlu0 %1547
    %1549 = vrot.lane.b32.xlu0 %v786, 110
    %v1550 = vpop.permute.xlu0 %1549
    %1551 = vrot.lane.b32.xlu0 %v993, 110
    %v1552 = vpop.permute.xlu0 %1551
    %1553 = vrot.lane.b32.xlu0 %v995, 110
    %v1554 = vpop.permute.xlu0 %1553
    %vm1555 = vcmask 900096
    %v1556 = vsel %vm1555, %v1492, %v1494
    %v1557 = vsel %vm1555, %v1494, %v1496
    %v1558 = vsel %vm1555, %v1496, %v1498
    %v1559 = vsel %vm1555, %v1498, %v1500
    %v1560 = vsel %vm1555, %v1500, %v1502
    %v1561 = vsel %vm1555, %v1502, %v1504
    %v1562 = vsel %vm1555, %v1504, %v1506
    %v1563 = vsel %vm1555, %v1508, %v1510
    %v1564 = vsel %vm1555, %v1510, %v1512
    %v1565 = vsel %vm1555, %v1512, %v1514
    %v1566 = vsel %vm1555, %v1514, %v1516
    %v1567 = vsel %vm1555, %v1516, %v1518
    %v1568 = vsel %vm1555, %v1518, %v1520
    %v1569 = vsel %vm1555, %v1520, %v1522
    %v1570 = vsel %vm1555, %v1524, %v1526
    %v1571 = vsel %vm1555, %v1526, %v1528
    %v1572 = vsel %vm1555, %v1528, %v1530
    %v1573 = vsel %vm1555, %v1530, %v1532
    %v1574 = vsel %vm1555, %v1532, %v1534
    %v1575 = vsel %vm1555, %v1534, %v1536
    %v1576 = vsel %vm1555, %v1536, %v1538
    %v1577 = vsel %vm1555, %v1540, %v1542
    %v1578 = vsel %vm1555, %v1542, %v1544
    %v1579 = vsel %vm1555, %v1544, %v1546
    %v1580 = vsel %vm1555, %v1546, %v1548
    %v1581 = vsel %vm1555, %v1548, %v1550
    %v1582 = vsel %vm1555, %v1550, %v1552
    %v1583 = vsel %vm1555, %v1552, %v1554
    %v1612 = vadd.f32 %v1431, %v1556
    %v1613 = vadd.f32 %v1432, %v1557
    %v1614 = vadd.f32 %v1433, %v1558
    %v1615 = vadd.f32 %v1434, %v1559
    %v1616 = vadd.f32 %v1435, %v1560
    %v1617 = vadd.f32 %v1436, %v1561
    %v1618 = vadd.f32 %v1437, %v1562
    %v1619 = vadd.f32 %v1438, %v1563
    %v1620 = vadd.f32 %v1439, %v1564
    %v1621 = vadd.f32 %v1440, %v1565
    %v1622 = vadd.f32 %v1441, %v1566
    %v1623 = vadd.f32 %v1442, %v1567
    %v1624 = vadd.f32 %v1443, %v1568
    %v1625 = vadd.f32 %v1444, %v1569
    %v1626 = vadd.f32 %v1445, %v1570
    %v1627 = vadd.f32 %v1446, %v1571
    %v1628 = vadd.f32 %v1447, %v1572
    %v1629 = vadd.f32 %v1448, %v1573
    %v1630 = vadd.f32 %v1449, %v1574
    %v1631 = vadd.f32 %v1450, %v1575
    %v1632 = vadd.f32 %v1451, %v1576
    %v1633 = vadd.f32 %v1452, %v1577
    %v1634 = vadd.f32 %v1453, %v1578
    %v1635 = vadd.f32 %v1454, %v1579
    %v1636 = vadd.f32 %v1455, %v1580
    %v1637 = vadd.f32 %v1456, %v1581
    %v1638 = vadd.f32 %v1457, %v1582
    %v1639 = vadd.f32 %v1458, %v1583
    %1672 = vrot.lane.b32.xlu0 %v364, 109
    %v1673 = vpop.permute.xlu0 %1672
    %1674 = vrot.lane.b32.xlu0 %v366, 109
    %v1675 = vpop.permute.xlu0 %1674
    %1676 = vrot.lane.b32.xlu0 %v577, 109
    %v1677 = vpop.permute.xlu0 %1676
    %1678 = vrot.lane.b32.xlu0 %v579, 109
    %v1679 = vpop.permute.xlu0 %1678
    %1680 = vrot.lane.b32.xlu0 %v790, 109
    %v1681 = vpop.permute.xlu0 %1680
    %1682 = vrot.lane.b32.xlu0 %v792, 109
    %v1683 = vpop.permute.xlu0 %1682
    %1684 = vrot.lane.b32.xlu0 %v999, 109
    %v1685 = vpop.permute.xlu0 %1684
    %1686 = vrot.lane.b32.xlu0 %v1001, 109
    %v1687 = vpop.permute.xlu0 %1686
    %1688 = vrot.lane.b32.xlu0 %v368, 109
    %v1689 = vpop.permute.xlu0 %1688
    %1690 = vrot.lane.b32.xlu0 %v370, 109
    %v1691 = vpop.permute.xlu0 %1690
    %1692 = vrot.lane.b32.xlu0 %v581, 109
    %v1693 = vpop.permute.xlu0 %1692
    %1694 = vrot.lane.b32.xlu0 %v583, 109
    %v1695 = vpop.permute.xlu0 %1694
    %1696 = vrot.lane.b32.xlu0 %v794, 109
    %v1697 = vpop.permute.xlu0 %1696
    %1698 = vrot.lane.b32.xlu0 %v796, 109
    %v1699 = vpop.permute.xlu0 %1698
    %1700 = vrot.lane.b32.xlu0 %v1003, 109
    %v1701 = vpop.permute.xlu0 %1700
    %1702 = vrot.lane.b32.xlu0 %v1005, 109
    %v1703 = vpop.permute.xlu0 %1702
    %1704 = vrot.lane.b32.xlu0 %v374, 109
    %v1705 = vpop.permute.xlu0 %1704
    %1706 = vrot.lane.b32.xlu0 %v376, 109
    %v1707 = vpop.permute.xlu0 %1706
    %1708 = vrot.lane.b32.xlu0 %v587, 109
    %v1709 = vpop.permute.xlu0 %1708
    %1710 = vrot.lane.b32.xlu0 %v589, 109
    %v1711 = vpop.permute.xlu0 %1710
    %1712 = vrot.lane.b32.xlu0 %v800, 109
    %v1713 = vpop.permute.xlu0 %1712
    %1714 = vrot.lane.b32.xlu0 %v802, 109
    %v1715 = vpop.permute.xlu0 %1714
    %1716 = vrot.lane.b32.xlu0 %v1009, 109
    %v1717 = vpop.permute.xlu0 %1716
    %1718 = vrot.lane.b32.xlu0 %v1011, 109
    %v1719 = vpop.permute.xlu0 %1718
    %1720 = vrot.lane.b32.xlu0 %v378, 109
    %v1721 = vpop.permute.xlu0 %1720
    %1722 = vrot.lane.b32.xlu0 %v380, 109
    %v1723 = vpop.permute.xlu0 %1722
    %1724 = vrot.lane.b32.xlu0 %v591, 109
    %v1725 = vpop.permute.xlu0 %1724
    %1726 = vrot.lane.b32.xlu0 %v593, 109
    %v1727 = vpop.permute.xlu0 %1726
    %1728 = vrot.lane.b32.xlu0 %v804, 109
    %v1729 = vpop.permute.xlu0 %1728
    %1730 = vrot.lane.b32.xlu0 %v806, 109
    %v1731 = vpop.permute.xlu0 %1730
    %1732 = vrot.lane.b32.xlu0 %v1013, 109
    %v1733 = vpop.permute.xlu0 %1732
    %1734 = vrot.lane.b32.xlu0 %v1015, 109
    %v1735 = vpop.permute.xlu0 %1734
    %vm1736 = vcmask 891904
    %v1737 = vsel %vm1736, %v1673, %v1675
    %v1738 = vsel %vm1736, %v1675, %v1677
    %v1739 = vsel %vm1736, %v1677, %v1679
    %v1740 = vsel %vm1736, %v1679, %v1681
    %v1741 = vsel %vm1736, %v1681, %v1683
    %v1742 = vsel %vm1736, %v1683, %v1685
    %v1743 = vsel %vm1736, %v1685, %v1687
    %v1744 = vsel %vm1736, %v1689, %v1691
    %v1745 = vsel %vm1736, %v1691, %v1693
    %v1746 = vsel %vm1736, %v1693, %v1695
    %v1747 = vsel %vm1736, %v1695, %v1697
    %v1748 = vsel %vm1736, %v1697, %v1699
    %v1749 = vsel %vm1736, %v1699, %v1701
    %v1750 = vsel %vm1736, %v1701, %v1703
    %v1751 = vsel %vm1736, %v1705, %v1707
    %v1752 = vsel %vm1736, %v1707, %v1709
    %v1753 = vsel %vm1736, %v1709, %v1711
    %v1754 = vsel %vm1736, %v1711, %v1713
    %v1755 = vsel %vm1736, %v1713, %v1715
    %v1756 = vsel %vm1736, %v1715, %v1717
    %v1757 = vsel %vm1736, %v1717, %v1719
    %v1758 = vsel %vm1736, %v1721, %v1723
    %v1759 = vsel %vm1736, %v1723, %v1725
    %v1760 = vsel %vm1736, %v1725, %v1727
    %v1761 = vsel %vm1736, %v1727, %v1729
    %v1762 = vsel %vm1736, %v1729, %v1731
    %v1763 = vsel %vm1736, %v1731, %v1733
    %v1764 = vsel %vm1736, %v1733, %v1735
    %v1793 = vadd.f32 %v1612, %v1737
    %v1794 = vadd.f32 %v1613, %v1738
    %v1795 = vadd.f32 %v1614, %v1739
    %v1796 = vadd.f32 %v1615, %v1740
    %v1797 = vadd.f32 %v1616, %v1741
    %v1798 = vadd.f32 %v1617, %v1742
    %v1799 = vadd.f32 %v1618, %v1743
    %v1800 = vadd.f32 %v1619, %v1744
    %v1801 = vadd.f32 %v1620, %v1745
    %v1802 = vadd.f32 %v1621, %v1746
    %v1803 = vadd.f32 %v1622, %v1747
    %v1804 = vadd.f32 %v1623, %v1748
    %v1805 = vadd.f32 %v1624, %v1749
    %v1806 = vadd.f32 %v1625, %v1750
    %v1807 = vadd.f32 %v1626, %v1751
    %v1808 = vadd.f32 %v1627, %v1752
    %v1809 = vadd.f32 %v1628, %v1753
    %v1810 = vadd.f32 %v1629, %v1754
    %v1811 = vadd.f32 %v1630, %v1755
    %v1812 = vadd.f32 %v1631, %v1756
    %v1813 = vadd.f32 %v1632, %v1757
    %v1814 = vadd.f32 %v1633, %v1758
    %v1815 = vadd.f32 %v1634, %v1759
    %v1816 = vadd.f32 %v1635, %v1760
    %v1817 = vadd.f32 %v1636, %v1761
    %v1818 = vadd.f32 %v1637, %v1762
    %v1819 = vadd.f32 %v1638, %v1763
    %v1820 = vadd.f32 %v1639, %v1764
    %1853 = vrot.lane.b32.xlu0 %v384, 108
    %v1854 = vpop.permute.xlu0 %1853
    %1855 = vrot.lane.b32.xlu0 %v386, 108
    %v1856 = vpop.permute.xlu0 %1855
    %1857 = vrot.lane.b32.xlu0 %v597, 108
    %v1858 = vpop.permute.xlu0 %1857
    %1859 = vrot.lane.b32.xlu0 %v599, 108
    %v1860 = vpop.permute.xlu0 %1859
    %1861 = vrot.lane.b32.xlu0 %v810, 108
    %v1862 = vpop.permute.xlu0 %1861
    %1863 = vrot.lane.b32.xlu0 %v812, 108
    %v1864 = vpop.permute.xlu0 %1863
    %1865 = vrot.lane.b32.xlu0 %v1019, 108
    %v1866 = vpop.permute.xlu0 %1865
    %1867 = vrot.lane.b32.xlu0 %v1021, 108
    %v1868 = vpop.permute.xlu0 %1867
    %1869 = vrot.lane.b32.xlu0 %v388, 108
    %v1870 = vpop.permute.xlu0 %1869
    %1871 = vrot.lane.b32.xlu0 %v390, 108
    %v1872 = vpop.permute.xlu0 %1871
    %1873 = vrot.lane.b32.xlu0 %v601, 108
    %v1874 = vpop.permute.xlu0 %1873
    %1875 = vrot.lane.b32.xlu0 %v603, 108
    %v1876 = vpop.permute.xlu0 %1875
    %1877 = vrot.lane.b32.xlu0 %v814, 108
    %v1878 = vpop.permute.xlu0 %1877
    %1879 = vrot.lane.b32.xlu0 %v816, 108
    %v1880 = vpop.permute.xlu0 %1879
    %1881 = vrot.lane.b32.xlu0 %v1023, 108
    %v1882 = vpop.permute.xlu0 %1881
    %1883 = vrot.lane.b32.xlu0 %v1025, 108
    %v1884 = vpop.permute.xlu0 %1883
    %1885 = vrot.lane.b32.xlu0 %v394, 108
    %v1886 = vpop.permute.xlu0 %1885
    %1887 = vrot.lane.b32.xlu0 %v396, 108
    %v1888 = vpop.permute.xlu0 %1887
    %1889 = vrot.lane.b32.xlu0 %v607, 108
    %v1890 = vpop.permute.xlu0 %1889
    %1891 = vrot.lane.b32.xlu0 %v609, 108
    %v1892 = vpop.permute.xlu0 %1891
    %1893 = vrot.lane.b32.xlu0 %v820, 108
    %v1894 = vpop.permute.xlu0 %1893
    %1895 = vrot.lane.b32.xlu0 %v822, 108
    %v1896 = vpop.permute.xlu0 %1895
    %1897 = vrot.lane.b32.xlu0 %v1029, 108
    %v1898 = vpop.permute.xlu0 %1897
    %1899 = vrot.lane.b32.xlu0 %v1031, 108
    %v1900 = vpop.permute.xlu0 %1899
    %1901 = vrot.lane.b32.xlu0 %v398, 108
    %v1902 = vpop.permute.xlu0 %1901
    %1903 = vrot.lane.b32.xlu0 %v400, 108
    %v1904 = vpop.permute.xlu0 %1903
    %1905 = vrot.lane.b32.xlu0 %v611, 108
    %v1906 = vpop.permute.xlu0 %1905
    %1907 = vrot.lane.b32.xlu0 %v613, 108
    %v1908 = vpop.permute.xlu0 %1907
    %1909 = vrot.lane.b32.xlu0 %v824, 108
    %v1910 = vpop.permute.xlu0 %1909
    %1911 = vrot.lane.b32.xlu0 %v826, 108
    %v1912 = vpop.permute.xlu0 %1911
    %1913 = vrot.lane.b32.xlu0 %v1033, 108
    %v1914 = vpop.permute.xlu0 %1913
    %1915 = vrot.lane.b32.xlu0 %v1035, 108
    %v1916 = vpop.permute.xlu0 %1915
    %vm1917 = vcmask 883712
    %v1918 = vsel %vm1917, %v1854, %v1856
    %v1919 = vsel %vm1917, %v1856, %v1858
    %v1920 = vsel %vm1917, %v1858, %v1860
    %v1921 = vsel %vm1917, %v1860, %v1862
    %v1922 = vsel %vm1917, %v1862, %v1864
    %v1923 = vsel %vm1917, %v1864, %v1866
    %v1924 = vsel %vm1917, %v1866, %v1868
    %v1925 = vsel %vm1917, %v1870, %v1872
    %v1926 = vsel %vm1917, %v1872, %v1874
    %v1927 = vsel %vm1917, %v1874, %v1876
    %v1928 = vsel %vm1917, %v1876, %v1878
    %v1929 = vsel %vm1917, %v1878, %v1880
    %v1930 = vsel %vm1917, %v1880, %v1882
    %v1931 = vsel %vm1917, %v1882, %v1884
    %v1932 = vsel %vm1917, %v1886, %v1888
    %v1933 = vsel %vm1917, %v1888, %v1890
    %v1934 = vsel %vm1917, %v1890, %v1892
    %v1935 = vsel %vm1917, %v1892, %v1894
    %v1936 = vsel %vm1917, %v1894, %v1896
    %v1937 = vsel %vm1917, %v1896, %v1898
    %v1938 = vsel %vm1917, %v1898, %v1900
    %v1939 = vsel %vm1917, %v1902, %v1904
    %v1940 = vsel %vm1917, %v1904, %v1906
    %v1941 = vsel %vm1917, %v1906, %v1908
    %v1942 = vsel %vm1917, %v1908, %v1910
    %v1943 = vsel %vm1917, %v1910, %v1912
    %v1944 = vsel %vm1917, %v1912, %v1914
    %v1945 = vsel %vm1917, %v1914, %v1916
    %v1974 = vadd.f32 %v1793, %v1918
    %v1975 = vadd.f32 %v1794, %v1919
    %v1976 = vadd.f32 %v1795, %v1920
    %v1977 = vadd.f32 %v1796, %v1921
    %v1978 = vadd.f32 %v1797, %v1922
    %v1979 = vadd.f32 %v1798, %v1923
    %v1980 = vadd.f32 %v1799, %v1924
    %v1981 = vadd.f32 %v1800, %v1925
    %v1982 = vadd.f32 %v1801, %v1926
    %v1983 = vadd.f32 %v1802, %v1927
    %v1984 = vadd.f32 %v1803, %v1928
    %v1985 = vadd.f32 %v1804, %v1929
    %v1986 = vadd.f32 %v1805, %v1930
    %v1987 = vadd.f32 %v1806, %v1931
    %v1988 = vadd.f32 %v1807, %v1932
    %v1989 = vadd.f32 %v1808, %v1933
    %v1990 = vadd.f32 %v1809, %v1934
    %v1991 = vadd.f32 %v1810, %v1935
    %v1992 = vadd.f32 %v1811, %v1936
    %v1993 = vadd.f32 %v1812, %v1937
    %v1994 = vadd.f32 %v1813, %v1938
    %v1995 = vadd.f32 %v1814, %v1939
    %v1996 = vadd.f32 %v1815, %v1940
    %v1997 = vadd.f32 %v1816, %v1941
    %v1998 = vadd.f32 %v1817, %v1942
    %v1999 = vadd.f32 %v1818, %v1943
    %v2000 = vadd.f32 %v1819, %v1944
    %v2001 = vadd.f32 %v1820, %v1945
    %2034 = vrot.lane.b32.xlu0 %v404, 92
    %v2035 = vpop.permute.xlu0 %2034
    %2036 = vrot.lane.b32.xlu0 %v406, 92
    %v2037 = vpop.permute.xlu0 %2036
    %2038 = vrot.lane.b32.xlu0 %v617, 92
    %v2039 = vpop.permute.xlu0 %2038
    %2040 = vrot.lane.b32.xlu0 %v619, 92
    %v2041 = vpop.permute.xlu0 %2040
    %2042 = vrot.lane.b32.xlu0 %v830, 92
    %v2043 = vpop.permute.xlu0 %2042
    %2044 = vrot.lane.b32.xlu0 %v832, 92
    %v2045 = vpop.permute.xlu0 %2044
    %2046 = vrot.lane.b32.xlu0 %v1039, 92
    %v2047 = vpop.permute.xlu0 %2046
    %2048 = vrot.lane.b32.xlu0 %v1041, 92
    %v2049 = vpop.permute.xlu0 %2048
    %2050 = vrot.lane.b32.xlu0 %v408, 92
    %v2051 = vpop.permute.xlu0 %2050
    %2052 = vrot.lane.b32.xlu0 %v410, 92
    %v2053 = vpop.permute.xlu0 %2052
    %2054 = vrot.lane.b32.xlu0 %v621, 92
    %v2055 = vpop.permute.xlu0 %2054
    %2056 = vrot.lane.b32.xlu0 %v623, 92
    %v2057 = vpop.permute.xlu0 %2056
    %2058 = vrot.lane.b32.xlu0 %v834, 92
    %v2059 = vpop.permute.xlu0 %2058
    %2060 = vrot.lane.b32.xlu0 %v836, 92
    %v2061 = vpop.permute.xlu0 %2060
    %2062 = vrot.lane.b32.xlu0 %v1043, 92
    %v2063 = vpop.permute.xlu0 %2062
    %2064 = vrot.lane.b32.xlu0 %v1045, 92
    %v2065 = vpop.permute.xlu0 %2064
    %2066 = vrot.lane.b32.xlu0 %v414, 92
    %v2067 = vpop.permute.xlu0 %2066
    %2068 = vrot.lane.b32.xlu0 %v416, 92
    %v2069 = vpop.permute.xlu0 %2068
    %2070 = vrot.lane.b32.xlu0 %v627, 92
    %v2071 = vpop.permute.xlu0 %2070
    %2072 = vrot.lane.b32.xlu0 %v629, 92
    %v2073 = vpop.permute.xlu0 %2072
    %2074 = vrot.lane.b32.xlu0 %v840, 92
    %v2075 = vpop.permute.xlu0 %2074
    %2076 = vrot.lane.b32.xlu0 %v842, 92
    %v2077 = vpop.permute.xlu0 %2076
    %2078 = vrot.lane.b32.xlu0 %v1049, 92
    %v2079 = vpop.permute.xlu0 %2078
    %2080 = vrot.lane.b32.xlu0 %v1051, 92
    %v2081 = vpop.permute.xlu0 %2080
    %2082 = vrot.lane.b32.xlu0 %v418, 92
    %v2083 = vpop.permute.xlu0 %2082
    %2084 = vrot.lane.b32.xlu0 %v420, 92
    %v2085 = vpop.permute.xlu0 %2084
    %2086 = vrot.lane.b32.xlu0 %v631, 92
    %v2087 = vpop.permute.xlu0 %2086
    %2088 = vrot.lane.b32.xlu0 %v633, 92
    %v2089 = vpop.permute.xlu0 %2088
    %2090 = vrot.lane.b32.xlu0 %v844, 92
    %v2091 = vpop.permute.xlu0 %2090
    %2092 = vrot.lane.b32.xlu0 %v846, 92
    %v2093 = vpop.permute.xlu0 %2092
    %2094 = vrot.lane.b32.xlu0 %v1053, 92
    %v2095 = vpop.permute.xlu0 %2094
    %2096 = vrot.lane.b32.xlu0 %v1055, 92
    %v2097 = vpop.permute.xlu0 %2096
    %vm2098 = vcmask 752640
    %v2099 = vsel %vm2098, %v2035, %v2037
    %v2100 = vsel %vm2098, %v2037, %v2039
    %v2101 = vsel %vm2098, %v2039, %v2041
    %v2102 = vsel %vm2098, %v2041, %v2043
    %v2103 = vsel %vm2098, %v2043, %v2045
    %v2104 = vsel %vm2098, %v2045, %v2047
    %v2105 = vsel %vm2098, %v2047, %v2049
    %v2106 = vsel %vm2098, %v2051, %v2053
    %v2107 = vsel %vm2098, %v2053, %v2055
    %v2108 = vsel %vm2098, %v2055, %v2057
    %v2109 = vsel %vm2098, %v2057, %v2059
    %v2110 = vsel %vm2098, %v2059, %v2061
    %v2111 = vsel %vm2098, %v2061, %v2063
    %v2112 = vsel %vm2098, %v2063, %v2065
    %v2113 = vsel %vm2098, %v2067, %v2069
    %v2114 = vsel %vm2098, %v2069, %v2071
    %v2115 = vsel %vm2098, %v2071, %v2073
    %v2116 = vsel %vm2098, %v2073, %v2075
    %v2117 = vsel %vm2098, %v2075, %v2077
    %v2118 = vsel %vm2098, %v2077, %v2079
    %v2119 = vsel %vm2098, %v2079, %v2081
    %v2120 = vsel %vm2098, %v2083, %v2085
    %v2121 = vsel %vm2098, %v2085, %v2087
    %v2122 = vsel %vm2098, %v2087, %v2089
    %v2123 = vsel %vm2098, %v2089, %v2091
    %v2124 = vsel %vm2098, %v2091, %v2093
    %v2125 = vsel %vm2098, %v2093, %v2095
    %v2126 = vsel %vm2098, %v2095, %v2097
    %v2155 = vadd.f32 %v1974, %v2099
    %v2156 = vadd.f32 %v1975, %v2100
    %v2157 = vadd.f32 %v1976, %v2101
    %v2158 = vadd.f32 %v1977, %v2102
    %v2159 = vadd.f32 %v1978, %v2103
    %v2160 = vadd.f32 %v1979, %v2104
    %v2161 = vadd.f32 %v1980, %v2105
    %v2162 = vadd.f32 %v1981, %v2106
    %v2163 = vadd.f32 %v1982, %v2107
    %v2164 = vadd.f32 %v1983, %v2108
    %v2165 = vadd.f32 %v1984, %v2109
    %v2166 = vadd.f32 %v1985, %v2110
    %v2167 = vadd.f32 %v1986, %v2111
    %v2168 = vadd.f32 %v1987, %v2112
    %v2169 = vadd.f32 %v1988, %v2113
    %v2170 = vadd.f32 %v1989, %v2114
    %v2171 = vadd.f32 %v1990, %v2115
    %v2172 = vadd.f32 %v1991, %v2116
    %v2173 = vadd.f32 %v1992, %v2117
    %v2174 = vadd.f32 %v1993, %v2118
    %v2175 = vadd.f32 %v1994, %v2119
    %v2176 = vadd.f32 %v1995, %v2120
    %v2177 = vadd.f32 %v1996, %v2121
    %v2178 = vadd.f32 %v1997, %v2122
    %v2179 = vadd.f32 %v1998, %v2123
    %v2180 = vadd.f32 %v1999, %v2124
    %v2181 = vadd.f32 %v2000, %v2125
    %v2182 = vadd.f32 %v2001, %v2126
    %2215 = vrot.lane.b32.xlu0 %v424, 91
    %v2216 = vpop.permute.xlu0 %2215
    %2217 = vrot.lane.b32.xlu0 %v426, 91
    %v2218 = vpop.permute.xlu0 %2217
    %2219 = vrot.lane.b32.xlu0 %v637, 91
    %v2220 = vpop.permute.xlu0 %2219
    %2221 = vrot.lane.b32.xlu0 %v639, 91
    %v2222 = vpop.permute.xlu0 %2221
    %2223 = vrot.lane.b32.xlu0 %v850, 91
    %v2224 = vpop.permute.xlu0 %2223
    %2225 = vrot.lane.b32.xlu0 %v852, 91
    %v2226 = vpop.permute.xlu0 %2225
    %2227 = vrot.lane.b32.xlu0 %v1059, 91
    %v2228 = vpop.permute.xlu0 %2227
    %2229 = vrot.lane.b32.xlu0 %v1061, 91
    %v2230 = vpop.permute.xlu0 %2229
    %2231 = vrot.lane.b32.xlu0 %v428, 91
    %v2232 = vpop.permute.xlu0 %2231
    %2233 = vrot.lane.b32.xlu0 %v430, 91
    %v2234 = vpop.permute.xlu0 %2233
    %2235 = vrot.lane.b32.xlu0 %v641, 91
    %v2236 = vpop.permute.xlu0 %2235
    %2237 = vrot.lane.b32.xlu0 %v643, 91
    %v2238 = vpop.permute.xlu0 %2237
    %2239 = vrot.lane.b32.xlu0 %v854, 91
    %v2240 = vpop.permute.xlu0 %2239
    %2241 = vrot.lane.b32.xlu0 %v856, 91
    %v2242 = vpop.permute.xlu0 %2241
    %2243 = vrot.lane.b32.xlu0 %v1063, 91
    %v2244 = vpop.permute.xlu0 %2243
    %2245 = vrot.lane.b32.xlu0 %v1065, 91
    %v2246 = vpop.permute.xlu0 %2245
    %2247 = vrot.lane.b32.xlu0 %v434, 91
    %v2248 = vpop.permute.xlu0 %2247
    %2249 = vrot.lane.b32.xlu0 %v436, 91
    %v2250 = vpop.permute.xlu0 %2249
    %2251 = vrot.lane.b32.xlu0 %v647, 91
    %v2252 = vpop.permute.xlu0 %2251
    %2253 = vrot.lane.b32.xlu0 %v649, 91
    %v2254 = vpop.permute.xlu0 %2253
    %2255 = vrot.lane.b32.xlu0 %v860, 91
    %v2256 = vpop.permute.xlu0 %2255
    %2257 = vrot.lane.b32.xlu0 %v862, 91
    %v2258 = vpop.permute.xlu0 %2257
    %2259 = vrot.lane.b32.xlu0 %v1069, 91
    %v2260 = vpop.permute.xlu0 %2259
    %2261 = vrot.lane.b32.xlu0 %v1071, 91
    %v2262 = vpop.permute.xlu0 %2261
    %2263 = vrot.lane.b32.xlu0 %v438, 91
    %v2264 = vpop.permute.xlu0 %2263
    %2265 = vrot.lane.b32.xlu0 %v440, 91
    %v2266 = vpop.permute.xlu0 %2265
    %2267 = vrot.lane.b32.xlu0 %v651, 91
    %v2268 = vpop.permute.xlu0 %2267
    %2269 = vrot.lane.b32.xlu0 %v653, 91
    %v2270 = vpop.permute.xlu0 %2269
    %2271 = vrot.lane.b32.xlu0 %v864, 91
    %v2272 = vpop.permute.xlu0 %2271
    %2273 = vrot.lane.b32.xlu0 %v866, 91
    %v2274 = vpop.permute.xlu0 %2273
    %2275 = vrot.lane.b32.xlu0 %v1073, 91
    %v2276 = vpop.permute.xlu0 %2275
    %2277 = vrot.lane.b32.xlu0 %v1075, 91
    %v2278 = vpop.permute.xlu0 %2277
    %vm2279 = vcmask 744448
    %v2280 = vsel %vm2279, %v2216, %v2218
    %v2281 = vsel %vm2279, %v2218, %v2220
    %v2282 = vsel %vm2279, %v2220, %v2222
    %v2283 = vsel %vm2279, %v2222, %v2224
    %v2284 = vsel %vm2279, %v2224, %v2226
    %v2285 = vsel %vm2279, %v2226, %v2228
    %v2286 = vsel %vm2279, %v2228, %v2230
    %v2287 = vsel %vm2279, %v2232, %v2234
    %v2288 = vsel %vm2279, %v2234, %v2236
    %v2289 = vsel %vm2279, %v2236, %v2238
    %v2290 = vsel %vm2279, %v2238, %v2240
    %v2291 = vsel %vm2279, %v2240, %v2242
    %v2292 = vsel %vm2279, %v2242, %v2244
    %v2293 = vsel %vm2279, %v2244, %v2246
    %v2294 = vsel %vm2279, %v2248, %v2250
    %v2295 = vsel %vm2279, %v2250, %v2252
    %v2296 = vsel %vm2279, %v2252, %v2254
    %v2297 = vsel %vm2279, %v2254, %v2256
    %v2298 = vsel %vm2279, %v2256, %v2258
    %v2299 = vsel %vm2279, %v2258, %v2260
    %v2300 = vsel %vm2279, %v2260, %v2262
    %v2301 = vsel %vm2279, %v2264, %v2266
    %v2302 = vsel %vm2279, %v2266, %v2268
    %v2303 = vsel %vm2279, %v2268, %v2270
    %v2304 = vsel %vm2279, %v2270, %v2272
    %v2305 = vsel %vm2279, %v2272, %v2274
    %v2306 = vsel %vm2279, %v2274, %v2276
    %v2307 = vsel %vm2279, %v2276, %v2278
    %v2336 = vadd.f32 %v2155, %v2280
    %v2337 = vadd.f32 %v2156, %v2281
    %v2338 = vadd.f32 %v2157, %v2282
    %v2339 = vadd.f32 %v2158, %v2283
    %v2340 = vadd.f32 %v2159, %v2284
    %v2341 = vadd.f32 %v2160, %v2285
    %v2342 = vadd.f32 %v2161, %v2286
    %v2343 = vadd.f32 %v2162, %v2287
    %v2344 = vadd.f32 %v2163, %v2288
    %v2345 = vadd.f32 %v2164, %v2289
    %v2346 = vadd.f32 %v2165, %v2290
    %v2347 = vadd.f32 %v2166, %v2291
    %v2348 = vadd.f32 %v2167, %v2292
    %v2349 = vadd.f32 %v2168, %v2293
    %v2350 = vadd.f32 %v2169, %v2294
    %v2351 = vadd.f32 %v2170, %v2295
    %v2352 = vadd.f32 %v2171, %v2296
    %v2353 = vadd.f32 %v2172, %v2297
    %v2354 = vadd.f32 %v2173, %v2298
    %v2355 = vadd.f32 %v2174, %v2299
    %v2356 = vadd.f32 %v2175, %v2300
    %v2357 = vadd.f32 %v2176, %v2301
    %v2358 = vadd.f32 %v2177, %v2302
    %v2359 = vadd.f32 %v2178, %v2303
    %v2360 = vadd.f32 %v2179, %v2304
    %v2361 = vadd.f32 %v2180, %v2305
    %v2362 = vadd.f32 %v2181, %v2306
    %v2363 = vadd.f32 %v2182, %v2307
    %2396 = vrot.lane.b32.xlu0 %v444, 90
    %v2397 = vpop.permute.xlu0 %2396
    %2398 = vrot.lane.b32.xlu0 %v446, 90
    %v2399 = vpop.permute.xlu0 %2398
    %2400 = vrot.lane.b32.xlu0 %v657, 90
    %v2401 = vpop.permute.xlu0 %2400
    %2402 = vrot.lane.b32.xlu0 %v659, 90
    %v2403 = vpop.permute.xlu0 %2402
    %2404 = vrot.lane.b32.xlu0 %v870, 90
    %v2405 = vpop.permute.xlu0 %2404
    %2406 = vrot.lane.b32.xlu0 %v872, 90
    %v2407 = vpop.permute.xlu0 %2406
    %2408 = vrot.lane.b32.xlu0 %v1079, 90
    %v2409 = vpop.permute.xlu0 %2408
    %2410 = vrot.lane.b32.xlu0 %v1081, 90
    %v2411 = vpop.permute.xlu0 %2410
    %2412 = vrot.lane.b32.xlu0 %v448, 90
    %v2413 = vpop.permute.xlu0 %2412
    %2414 = vrot.lane.b32.xlu0 %v450, 90
    %v2415 = vpop.permute.xlu0 %2414
    %2416 = vrot.lane.b32.xlu0 %v661, 90
    %v2417 = vpop.permute.xlu0 %2416
    %2418 = vrot.lane.b32.xlu0 %v663, 90
    %v2419 = vpop.permute.xlu0 %2418
    %2420 = vrot.lane.b32.xlu0 %v874, 90
    %v2421 = vpop.permute.xlu0 %2420
    %2422 = vrot.lane.b32.xlu0 %v876, 90
    %v2423 = vpop.permute.xlu0 %2422
    %2424 = vrot.lane.b32.xlu0 %v1083, 90
    %v2425 = vpop.permute.xlu0 %2424
    %2426 = vrot.lane.b32.xlu0 %v1085, 90
    %v2427 = vpop.permute.xlu0 %2426
    %2428 = vrot.lane.b32.xlu0 %v454, 90
    %v2429 = vpop.permute.xlu0 %2428
    %2430 = vrot.lane.b32.xlu0 %v456, 90
    %v2431 = vpop.permute.xlu0 %2430
    %2432 = vrot.lane.b32.xlu0 %v667, 90
    %v2433 = vpop.permute.xlu0 %2432
    %2434 = vrot.lane.b32.xlu0 %v669, 90
    %v2435 = vpop.permute.xlu0 %2434
    %2436 = vrot.lane.b32.xlu0 %v880, 90
    %v2437 = vpop.permute.xlu0 %2436
    %2438 = vrot.lane.b32.xlu0 %v882, 90
    %v2439 = vpop.permute.xlu0 %2438
    %2440 = vrot.lane.b32.xlu0 %v1089, 90
    %v2441 = vpop.permute.xlu0 %2440
    %2442 = vrot.lane.b32.xlu0 %v1091, 90
    %v2443 = vpop.permute.xlu0 %2442
    %2444 = vrot.lane.b32.xlu0 %v458, 90
    %v2445 = vpop.permute.xlu0 %2444
    %2446 = vrot.lane.b32.xlu0 %v460, 90
    %v2447 = vpop.permute.xlu0 %2446
    %2448 = vrot.lane.b32.xlu0 %v671, 90
    %v2449 = vpop.permute.xlu0 %2448
    %2450 = vrot.lane.b32.xlu0 %v673, 90
    %v2451 = vpop.permute.xlu0 %2450
    %2452 = vrot.lane.b32.xlu0 %v884, 90
    %v2453 = vpop.permute.xlu0 %2452
    %2454 = vrot.lane.b32.xlu0 %v886, 90
    %v2455 = vpop.permute.xlu0 %2454
    %2456 = vrot.lane.b32.xlu0 %v1093, 90
    %v2457 = vpop.permute.xlu0 %2456
    %2458 = vrot.lane.b32.xlu0 %v1095, 90
    %v2459 = vpop.permute.xlu0 %2458
    %vm2460 = vcmask 736256
    %v2461 = vsel %vm2460, %v2397, %v2399
    %v2462 = vsel %vm2460, %v2399, %v2401
    %v2463 = vsel %vm2460, %v2401, %v2403
    %v2464 = vsel %vm2460, %v2403, %v2405
    %v2465 = vsel %vm2460, %v2405, %v2407
    %v2466 = vsel %vm2460, %v2407, %v2409
    %v2467 = vsel %vm2460, %v2409, %v2411
    %v2468 = vsel %vm2460, %v2413, %v2415
    %v2469 = vsel %vm2460, %v2415, %v2417
    %v2470 = vsel %vm2460, %v2417, %v2419
    %v2471 = vsel %vm2460, %v2419, %v2421
    %v2472 = vsel %vm2460, %v2421, %v2423
    %v2473 = vsel %vm2460, %v2423, %v2425
    %v2474 = vsel %vm2460, %v2425, %v2427
    %v2475 = vsel %vm2460, %v2429, %v2431
    %v2476 = vsel %vm2460, %v2431, %v2433
    %v2477 = vsel %vm2460, %v2433, %v2435
    %v2478 = vsel %vm2460, %v2435, %v2437
    %v2479 = vsel %vm2460, %v2437, %v2439
    %v2480 = vsel %vm2460, %v2439, %v2441
    %v2481 = vsel %vm2460, %v2441, %v2443
    %v2482 = vsel %vm2460, %v2445, %v2447
    %v2483 = vsel %vm2460, %v2447, %v2449
    %v2484 = vsel %vm2460, %v2449, %v2451
    %v2485 = vsel %vm2460, %v2451, %v2453
    %v2486 = vsel %vm2460, %v2453, %v2455
    %v2487 = vsel %vm2460, %v2455, %v2457
    %v2488 = vsel %vm2460, %v2457, %v2459
    %v2517 = vadd.f32 %v2336, %v2461
    %v2518 = vadd.f32 %v2337, %v2462
    %v2519 = vadd.f32 %v2338, %v2463
    %v2520 = vadd.f32 %v2339, %v2464
    %v2521 = vadd.f32 %v2340, %v2465
    %v2522 = vadd.f32 %v2341, %v2466
    %v2523 = vadd.f32 %v2342, %v2467
    %v2524 = vadd.f32 %v2343, %v2468
    %v2525 = vadd.f32 %v2344, %v2469
    %v2526 = vadd.f32 %v2345, %v2470
    %v2527 = vadd.f32 %v2346, %v2471
    %v2528 = vadd.f32 %v2347, %v2472
    %v2529 = vadd.f32 %v2348, %v2473
    %v2530 = vadd.f32 %v2349, %v2474
    %v2531 = vadd.f32 %v2350, %v2475
    %v2532 = vadd.f32 %v2351, %v2476
    %v2533 = vadd.f32 %v2352, %v2477
    %v2534 = vadd.f32 %v2353, %v2478
    %v2535 = vadd.f32 %v2354, %v2479
    %v2536 = vadd.f32 %v2355, %v2480
    %v2537 = vadd.f32 %v2356, %v2481
    %v2538 = vadd.f32 %v2357, %v2482
    %v2539 = vadd.f32 %v2358, %v2483
    %v2540 = vadd.f32 %v2359, %v2484
    %v2541 = vadd.f32 %v2360, %v2485
    %v2542 = vadd.f32 %v2361, %v2486
    %v2543 = vadd.f32 %v2362, %v2487
    %v2544 = vadd.f32 %v2363, %v2488
    %v2545 = vlaneseq
    %v2546 = vand.u32 %v2545, 127
    %v2547 = vadd.s32 %v2546, 128
    %v2548 = vadd.s32 %v2546, 256
    %v2549 = vadd.s32 %v2546, 384
    %v2550 = vadd.s32 %v2546, 512
    %v2551 = vadd.s32 %v2546, 640
    %v2552 = vadd.s32 %v2546, 768
    %v2553 = vcvt.s32.f32 %v2546
    %v2554 = vcvt.s32.f32 %v2547
    %v2555 = vcvt.s32.f32 %v2548
    %v2556 = vcvt.s32.f32 %v2549
    %v2557 = vcvt.s32.f32 %v2550
    %v2558 = vcvt.s32.f32 %v2551
    %v2559 = vcvt.s32.f32 %v2552
    %v2560 = vadd.f32 %v2553, 0.5
    %v2561 = vadd.f32 %v2554, 0.5
    %v2562 = vadd.f32 %v2555, 0.5
    %v2563 = vadd.f32 %v2556, 0.5
    %v2564 = vadd.f32 %v2557, 0.5
    %v2565 = vadd.f32 %v2558, 0.5
    %v2566 = vadd.f32 %v2559, 0.5
    %v2567 = vmul.f32 %v2560, 0.0025
    %v2568 = vmul.f32 %v2561, 0.0025
    %v2569 = vmul.f32 %v2562, 0.0025
    %v2570 = vmul.f32 %v2563, 0.0025
    %v2571 = vmul.f32 %v2564, 0.0025
    %v2572 = vmul.f32 %v2565, 0.0025
    %v2573 = vmul.f32 %v2566, 0.0025
    %v2574 = vfloor.f32 %v2567
    %v2575 = vfloor.f32 %v2568
    %v2576 = vfloor.f32 %v2569
    %v2577 = vfloor.f32 %v2570
    %v2578 = vfloor.f32 %v2571
    %v2579 = vfloor.f32 %v2572
    %v2580 = vfloor.f32 %v2573
    %v2581 = vmul.f32 %v2574, 400.0
    %v2582 = vmul.f32 %v2575, 400.0
    %v2583 = vmul.f32 %v2576, 400.0
    %v2584 = vmul.f32 %v2577, 400.0
    %v2585 = vmul.f32 %v2578, 400.0
    %v2586 = vmul.f32 %v2579, 400.0
    %v2587 = vmul.f32 %v2580, 400.0
    %v2588 = vsub.f32 %v2553, %v2581
    %v2589 = vsub.f32 %v2554, %v2582
    %v2590 = vsub.f32 %v2555, %v2583
    %v2591 = vsub.f32 %v2556, %v2584
    %v2592 = vsub.f32 %v2557, %v2585
    %v2593 = vsub.f32 %v2558, %v2586
    %v2594 = vsub.f32 %v2559, %v2587
    %v2595 = vsub.f32 %v2588, 19.0
    %v2596 = vsub.f32 %v2589, 19.0
    %v2597 = vsub.f32 %v2590, 19.0
    %v2598 = vsub.f32 %v2591, 19.0
    %v2599 = vsub.f32 %v2592, 19.0
    %v2600 = vsub.f32 %v2593, 19.0
    %v2601 = vsub.f32 %v2594, 19.0
    %v2602 = vadd.f32 %v2595, 0.5
    %v2603 = vadd.f32 %v2596, 0.5
    %v2604 = vadd.f32 %v2597, 0.5
    %v2605 = vadd.f32 %v2598, 0.5
    %v2606 = vadd.f32 %v2599, 0.5
    %v2607 = vadd.f32 %v2600, 0.5
    %v2608 = vadd.f32 %v2601, 0.5
    %v2609 = vmul.f32 %v2602, 0.055555556
    %v2610 = vmul.f32 %v2603, 0.055555556
    %v2611 = vmul.f32 %v2604, 0.055555556
    %v2612 = vmul.f32 %v2605, 0.055555556
    %v2613 = vmul.f32 %v2606, 0.055555556
    %v2614 = vmul.f32 %v2607, 0.055555556
    %v2615 = vmul.f32 %v2608, 0.055555556
    %v2616 = vfloor.f32 %v2609
    %v2617 = vfloor.f32 %v2610
    %v2618 = vfloor.f32 %v2611
    %v2619 = vfloor.f32 %v2612
    %v2620 = vfloor.f32 %v2613
    %v2621 = vfloor.f32 %v2614
    %v2622 = vfloor.f32 %v2615
    %v2623 = vmul.f32 %v2616, 18.0
    %v2624 = vmul.f32 %v2617, 18.0
    %v2625 = vmul.f32 %v2618, 18.0
    %v2626 = vmul.f32 %v2619, 18.0
    %v2627 = vmul.f32 %v2620, 18.0
    %v2628 = vmul.f32 %v2621, 18.0
    %v2629 = vmul.f32 %v2622, 18.0
    %v2630 = vsub.f32 %v2595, %v2623
    %v2631 = vsub.f32 %v2596, %v2624
    %v2632 = vsub.f32 %v2597, %v2625
    %v2633 = vsub.f32 %v2598, %v2626
    %v2634 = vsub.f32 %v2599, %v2627
    %v2635 = vsub.f32 %v2600, %v2628
    %v2636 = vsub.f32 %v2601, %v2629
    %vm2637 = vcmp.gt.f32.partialorder %v2616, 0.5
    %vm2638 = vcmp.gt.f32.partialorder %v2617, 0.5
    %vm2639 = vcmp.gt.f32.partialorder %v2618, 0.5
    %vm2640 = vcmp.gt.f32.partialorder %v2619, 0.5
    %vm2641 = vcmp.gt.f32.partialorder %v2620, 0.5
    %vm2642 = vcmp.gt.f32.partialorder %v2621, 0.5
    %vm2643 = vcmp.gt.f32.partialorder %v2622, 0.5
    %vm2644 = vcmp.lt.f32.partialorder %v2616, 16.5
    %vm2645 = vcmp.lt.f32.partialorder %v2617, 16.5
    %vm2646 = vcmp.lt.f32.partialorder %v2618, 16.5
    %vm2647 = vcmp.lt.f32.partialorder %v2619, 16.5
    %vm2648 = vcmp.lt.f32.partialorder %v2620, 16.5
    %vm2649 = vcmp.lt.f32.partialorder %v2621, 16.5
    %vm2650 = vcmp.lt.f32.partialorder %v2622, 16.5
    %vm2651 = vmand %vm2637, %vm2644
    %vm2652 = vmand %vm2638, %vm2645
    %vm2653 = vmand %vm2639, %vm2646
    %vm2654 = vmand %vm2640, %vm2647
    %vm2655 = vmand %vm2641, %vm2648
    %vm2656 = vmand %vm2642, %vm2649
    %vm2657 = vmand %vm2643, %vm2650
    %vm2658 = vcmp.gt.f32.partialorder %v2630, 0.5
    %vm2659 = vcmp.gt.f32.partialorder %v2631, 0.5
    %vm2660 = vcmp.gt.f32.partialorder %v2632, 0.5
    %vm2661 = vcmp.gt.f32.partialorder %v2633, 0.5
    %vm2662 = vcmp.gt.f32.partialorder %v2634, 0.5
    %vm2663 = vcmp.gt.f32.partialorder %v2635, 0.5
    %vm2664 = vcmp.gt.f32.partialorder %v2636, 0.5
    %vm2665 = vmand %vm2651, %vm2658
    %vm2666 = vmand %vm2652, %vm2659
    %vm2667 = vmand %vm2653, %vm2660
    %vm2668 = vmand %vm2654, %vm2661
    %vm2669 = vmand %vm2655, %vm2662
    %vm2670 = vmand %vm2656, %vm2663
    %vm2671 = vmand %vm2657, %vm2664
    %vm2672 = vcmp.lt.f32.partialorder %v2630, 16.5
    %vm2673 = vcmp.lt.f32.partialorder %v2631, 16.5
    %vm2674 = vcmp.lt.f32.partialorder %v2632, 16.5
    %vm2675 = vcmp.lt.f32.partialorder %v2633, 16.5
    %vm2676 = vcmp.lt.f32.partialorder %v2634, 16.5
    %vm2677 = vcmp.lt.f32.partialorder %v2635, 16.5
    %vm2678 = vcmp.lt.f32.partialorder %v2636, 16.5
    %vm2679 = vmand %vm2665, %vm2672
    %vm2680 = vmand %vm2666, %vm2673
    %vm2681 = vmand %vm2667, %vm2674
    %vm2682 = vmand %vm2668, %vm2675
    %vm2683 = vmand %vm2669, %vm2676
    %vm2684 = vmand %vm2670, %vm2677
    %vm2685 = vmand %vm2671, %vm2678
    %vm2686 = vcmp.lt.f32.partialorder %v2553, 799.5
    %vm2687 = vcmp.lt.f32.partialorder %v2554, 799.5
    %vm2688 = vcmp.lt.f32.partialorder %v2555, 799.5
    %vm2689 = vcmp.lt.f32.partialorder %v2556, 799.5
    %vm2690 = vcmp.lt.f32.partialorder %v2557, 799.5
    %vm2691 = vcmp.lt.f32.partialorder %v2558, 799.5
    %vm2692 = vcmp.lt.f32.partialorder %v2559, 799.5
    %vm2693 = vmand %vm2679, %vm2686
    %vm2694 = vmand %vm2680, %vm2687
    %vm2695 = vmand %vm2681, %vm2688
    %vm2696 = vmand %vm2682, %vm2689
    %vm2697 = vmand %vm2683, %vm2690
    %vm2698 = vmand %vm2684, %vm2691
    %vm2699 = vmand %vm2685, %vm2692
    %v2700 = vsel %vm2693, 1, 0
    %v2701 = vsel %vm2694, 1, 0
    %v2702 = vsel %vm2695, 1, 0
    %v2703 = vsel %vm2696, 1, 0
    %v2704 = vsel %vm2697, 1, 0
    %v2705 = vsel %vm2698, 1, 0
    %v2706 = vsel %vm2699, 1, 0
    %v2707 = vcvt.s32.f32 %v2700
    %v2708 = vcvt.s32.f32 %v2701
    %v2709 = vcvt.s32.f32 %v2702
    %v2710 = vcvt.s32.f32 %v2703
    %v2711 = vcvt.s32.f32 %v2704
    %v2712 = vcvt.s32.f32 %v2705
    %v2713 = vcvt.s32.f32 %v2706
    %2715 = vset.pattern.permute.xlu0 0
    %2716 = vperm.xlu0 %2715, %v64
    %v2717 = vpop.permute.xlu0 %2716
    %2720 = vset.pattern.permute.xlu0 0
    %2721 = vperm.xlu0 %2720, %v65
    %v2722 = vpop.permute.xlu0 %2721
    %2725 = vset.pattern.permute.xlu0 0
    %2726 = vperm.xlu0 %2725, %v66
    %v2727 = vpop.permute.xlu0 %2726
    %2730 = vset.pattern.permute.xlu0 0
    %2731 = vperm.xlu0 %2730, %v67
    %v2732 = vpop.permute.xlu0 %2731
    %v2734 = vadd.f32 %v2517, %v2717
    %v2735 = vadd.f32 %v2518, %v2717
    %v2736 = vadd.f32 %v2519, %v2717
    %v2737 = vadd.f32 %v2520, %v2717
    %v2738 = vadd.f32 %v2521, %v2717
    %v2739 = vadd.f32 %v2522, %v2717
    %v2740 = vadd.f32 %v2523, %v2717
    %v2741 = vadd.f32 %v2524, %v2722
    %v2742 = vadd.f32 %v2525, %v2722
    %v2743 = vadd.f32 %v2526, %v2722
    %v2744 = vadd.f32 %v2527, %v2722
    %v2745 = vadd.f32 %v2528, %v2722
    %v2746 = vadd.f32 %v2529, %v2722
    %v2747 = vadd.f32 %v2530, %v2722
    %v2748 = vadd.f32 %v2531, %v2727
    %v2749 = vadd.f32 %v2532, %v2727
    %v2750 = vadd.f32 %v2533, %v2727
    %v2751 = vadd.f32 %v2534, %v2727
    %v2752 = vadd.f32 %v2535, %v2727
    %v2753 = vadd.f32 %v2536, %v2727
    %v2754 = vadd.f32 %v2537, %v2727
    %v2755 = vadd.f32 %v2538, %v2732
    %v2756 = vadd.f32 %v2539, %v2732
    %v2757 = vadd.f32 %v2540, %v2732
    %v2758 = vadd.f32 %v2541, %v2732
    %v2759 = vadd.f32 %v2542, %v2732
    %v2760 = vadd.f32 %v2543, %v2732
    %v2761 = vadd.f32 %v2544, %v2732
    %v2762 = vmax.f32 %v2734, 0.0
    %v2763 = vmax.f32 %v2735, 0.0
    %v2764 = vmax.f32 %v2736, 0.0
    %v2765 = vmax.f32 %v2737, 0.0
    %v2766 = vmax.f32 %v2738, 0.0
    %v2767 = vmax.f32 %v2739, 0.0
    %v2768 = vmax.f32 %v2740, 0.0
    %v2769 = vmax.f32 %v2741, 0.0
    %v2770 = vmax.f32 %v2742, 0.0
    %v2771 = vmax.f32 %v2743, 0.0
    %v2772 = vmax.f32 %v2744, 0.0
    %v2773 = vmax.f32 %v2745, 0.0
    %v2774 = vmax.f32 %v2746, 0.0
    %v2775 = vmax.f32 %v2747, 0.0
    %v2776 = vmax.f32 %v2748, 0.0
    %v2777 = vmax.f32 %v2749, 0.0
    %v2778 = vmax.f32 %v2750, 0.0
    %v2779 = vmax.f32 %v2751, 0.0
    %v2780 = vmax.f32 %v2752, 0.0
    %v2781 = vmax.f32 %v2753, 0.0
    %v2782 = vmax.f32 %v2754, 0.0
    %v2783 = vmax.f32 %v2755, 0.0
    %v2784 = vmax.f32 %v2756, 0.0
    %v2785 = vmax.f32 %v2757, 0.0
    %v2786 = vmax.f32 %v2758, 0.0
    %v2787 = vmax.f32 %v2759, 0.0
    %v2788 = vmax.f32 %v2760, 0.0
    %v2789 = vmax.f32 %v2761, 0.0
    %v2790 = vmul.f32 %v2762, %v2707
    %v2791 = vmul.f32 %v2763, %v2708
    %v2792 = vmul.f32 %v2764, %v2709
    %v2793 = vmul.f32 %v2765, %v2710
    %v2794 = vmul.f32 %v2766, %v2711
    %v2795 = vmul.f32 %v2767, %v2712
    %v2796 = vmul.f32 %v2768, %v2713
    %v2797 = vmul.f32 %v2769, %v2707
    %v2798 = vmul.f32 %v2770, %v2708
    %v2799 = vmul.f32 %v2771, %v2709
    %v2800 = vmul.f32 %v2772, %v2710
    %v2801 = vmul.f32 %v2773, %v2711
    %v2802 = vmul.f32 %v2774, %v2712
    %v2803 = vmul.f32 %v2775, %v2713
    %v2804 = vmul.f32 %v2776, %v2707
    %v2805 = vmul.f32 %v2777, %v2708
    %v2806 = vmul.f32 %v2778, %v2709
    %v2807 = vmul.f32 %v2779, %v2710
    %v2808 = vmul.f32 %v2780, %v2711
    %v2809 = vmul.f32 %v2781, %v2712
    %v2810 = vmul.f32 %v2782, %v2713
    %v2811 = vmul.f32 %v2783, %v2707
    %v2812 = vmul.f32 %v2784, %v2708
    %v2813 = vmul.f32 %v2785, %v2709
    %v2814 = vmul.f32 %v2786, %v2710
    %v2815 = vmul.f32 %v2787, %v2711
    %v2816 = vmul.f32 %v2788, %v2712
    %v2817 = vmul.f32 %v2789, %v2713
    %v2818 = vpack.c.bf16 %v2797, %v2790
    %v2819 = vpack.c.bf16 %v2798, %v2791
    %v2820 = vpack.c.bf16 %v2799, %v2792
    %v2821 = vpack.c.bf16 %v2800, %v2793
    %v2822 = vpack.c.bf16 %v2801, %v2794
    %v2823 = vpack.c.bf16 %v2802, %v2795
    %v2824 = vpack.c.bf16 %v2803, %v2796
    %v2825 = vpack.c.bf16 %v2811, %v2804
    %v2826 = vpack.c.bf16 %v2812, %v2805
    %v2827 = vpack.c.bf16 %v2813, %v2806
    %v2828 = vpack.c.bf16 %v2814, %v2807
    %v2829 = vpack.c.bf16 %v2815, %v2808
    %v2830 = vpack.c.bf16 %v2816, %v2809
    %v2831 = vpack.c.bf16 %v2817, %v2810
    %v2832 = vld [vmem:[%s1 + $0x90] sm:$0xf]
    %v2833 = vld [vmem:[%s1 + $0x94] sm:$0xf]
    %v2834 = vld [vmem:[%s1 + $0x98] sm:$0xf]
    %v2835 = vld [vmem:[%s1 + $0x9c] sm:$0xf]
    %v2836 = vld [vmem:[%s1 + $0xa0] sm:$0xf]
    %v2837 = vld [vmem:[%s1 + $0xa4] sm:$0xf]
    %v2838 = vld [vmem:[%s1 + $0xa8] sm:$0xf]
    %v2839 = vld [vmem:[%s1 + $0xac] sm:$0xf]
    %v2840 = vld [vmem:[%s1 + $0xb0] sm:$0xf]
    %v2841 = vld [vmem:[%s1 + $0xb4] sm:$0xf]
    %v2842 = vld [vmem:[%s1 + $0xb8] sm:$0xf]
    %v2843 = vld [vmem:[%s1 + $0xbc] sm:$0xf]
    %v2844 = vld [vmem:[%s1 + $0xc0] sm:$0xf]
    %v2845 = vld [vmem:[%s1 + $0xc4] sm:$0xf]
    %v2846 = vld [vmem:[%s1 + $0xc8] sm:$0xf]
    %v2847 = vld [vmem:[%s1 + $0xcc] sm:$0xf]
    %v2848 = vld [vmem:[%s1 + $0xd0] sm:$0xf]
    %v2849 = vld [vmem:[%s1 + $0xd4] sm:$0xf]
    %v2850 = vld [vmem:[%s1 + $0xd8] sm:$0xf]
    %v2851 = vld [vmem:[%s1 + $0xdc] sm:$0xf]
    %v2852 = vld [vmem:[%s1 + $0xe0] sm:$0xf]
    %v2853 = vld [vmem:[%s1 + $0xe4] sm:$0xf]
    %v2854 = vld [vmem:[%s1 + $0xe8] sm:$0xf]
    %v2855 = vld [vmem:[%s1 + $0xec] sm:$0xf]
    %v2856 = vld [vmem:[%s1 + $0xf0] sm:$0xf]
    %v2857 = vld [vmem:[%s1 + $0xf4] sm:$0xf]
    %v2858 = vld [vmem:[%s1 + $0xf8] sm:$0xf]
    %v2859 = vld [vmem:[%s1 + $0xfc] sm:$0xf]
    %v2860 = vld [vmem:[%s1 + $0x100] sm:$0xf]
    %v2861 = vld [vmem:[%s1 + $0x104] sm:$0xf]
    %v2862 = vld [vmem:[%s1 + $0x108] sm:$0xf]
    %v2863 = vld [vmem:[%s1 + $0x10c] sm:$0xf]
    %v2864 = vld [vmem:[%s1 + $0x110] sm:$0xf]
    %v2865 = vld [vmem:[%s1 + $0x114] sm:$0xf]
    %v2866 = vld [vmem:[%s1 + $0x118] sm:$0xf]
    %v2867 = vld [vmem:[%s1 + $0x11c] sm:$0xf]
    %v2904 = vunpack.c.l.b16 %v2832
    %v2905 = vunpack.c.l.b16 %v2833
    %v2906 = vunpack.c.l.b16 %v2834
    %v2907 = vunpack.c.l.b16 %v2835
    %v2908 = vunpack.c.l.b16 %v2836
    %v2909 = vunpack.c.l.b16 %v2837
    %v2910 = vunpack.c.l.b16 %v2838
    %v2911 = vunpack.c.l.b16 %v2839
    %v2912 = vunpack.c.l.b16 %v2840
    %v2913 = vunpack.c.l.b16 %v2841
    %v2914 = vunpack.c.l.b16 %v2842
    %v2915 = vunpack.c.l.b16 %v2843
    %v2916 = vunpack.c.l.b16 %v2844
    %v2917 = vunpack.c.l.b16 %v2845
    %v2918 = vunpack.c.l.b16 %v2846
    %v2919 = vunpack.c.l.b16 %v2847
    %v2920 = vunpack.c.l.b16 %v2848
    %v2921 = vunpack.c.l.b16 %v2849
    %v2922 = vunpack.c.l.b16 %v2850
    %v2923 = vunpack.c.l.b16 %v2851
    %v2924 = vunpack.c.l.b16 %v2852
    %v2925 = vunpack.c.l.b16 %v2853
    %v2926 = vunpack.c.l.b16 %v2854
    %v2927 = vunpack.c.l.b16 %v2855
    %v2928 = vunpack.c.l.b16 %v2856
    %v2929 = vunpack.c.l.b16 %v2857
    %v2930 = vunpack.c.l.b16 %v2858
    %v2931 = vunpack.c.l.b16 %v2859
    %v2932 = vunpack.c.l.b16 %v2860
    %v2933 = vunpack.c.l.b16 %v2861
    %v2934 = vunpack.c.l.b16 %v2862
    %v2935 = vunpack.c.l.b16 %v2863
    %v2936 = vunpack.c.l.b16 %v2864
    %v2937 = vunpack.c.l.b16 %v2865
    %v2938 = vunpack.c.l.b16 %v2866
    %v2939 = vunpack.c.l.b16 %v2867
    %v2940 = vpack.c.b16 %v2905, %v2904
    %v2941 = vpack.c.b16 %v2907, %v2906
    %v2942 = vpack.c.b16 %v2909, %v2908
    %v2943 = vpack.c.b16 %v2911, %v2910
    %v2944 = vpack.c.b16 %v2913, %v2912
    %v2945 = vpack.c.b16 %v2915, %v2914
    %v2946 = vpack.c.b16 %v2917, %v2916
    %v2947 = vpack.c.b16 %v2919, %v2918
    %v2948 = vpack.c.b16 %v2921, %v2920
    %v2949 = vpack.c.b16 %v2923, %v2922
    %v2950 = vpack.c.b16 %v2925, %v2924
    %v2951 = vpack.c.b16 %v2927, %v2926
    %v2952 = vpack.c.b16 %v2929, %v2928
    %v2953 = vpack.c.b16 %v2931, %v2930
    %v2954 = vpack.c.b16 %v2933, %v2932
    %v2955 = vpack.c.b16 %v2935, %v2934
    %v2956 = vpack.c.b16 %v2937, %v2936
    %v2957 = vpack.c.b16 %v2939, %v2938
    %v2959 = vsel %vm194, %v2940, 0
    %v2962 = vsel %vm194, %v2941, 0
    %v2965 = vsel %vm194, %v2942, 0
    %v2968 = vsel %vm194, %v2943, 0
    %v2971 = vsel %vm194, %v2944, 0
    %v2974 = vsel %vm194, %v2945, 0
    %v2977 = vsel %vm194, %v2946, 0
    %v2980 = vsel %vm194, %v2947, 0
    %v2983 = vsel %vm194, %v2948, 0
    %v2986 = vsel %vm194, %v2949, 0
    %v2989 = vsel %vm194, %v2950, 0
    %v2992 = vsel %vm194, %v2951, 0
    %v2995 = vsel %vm194, %v2952, 0
    %v2998 = vsel %vm194, %v2953, 0
    %v3001 = vsel %vm194, %v2954, 0
    %v3004 = vsel %vm194, %v2955, 0
    %v3007 = vsel %vm194, %v2956, 0
    %v3010 = vsel %vm194, %v2957, 0
    %3012 = vmatprep.subr.bf16.mxu0 %v2819
    %3013 = vmatpush1.bf16.msra.mxu0 %v2818
    %3014 = vmatprep.subr.bf16.mxu0 %v2826
    %3015 = vmatpush1.bf16.msra.mxu0 %v2825
    %3016 = vmatprep.subr.bf16.mxu0 0
    %3017 = vmatpush1.bf16.msra.mxu0 0
    %3018 = vmatprep.subr.bf16.mxu0 0
    %3019 = vmatpush1.bf16.msra.mxu0 0
    %3020 = vmatprep.subr.bf16.mxu0 0
    %3021 = vmatpush1.bf16.msra.mxu0 0
    %3022 = vmatprep.subr.bf16.mxu0 0
    %3023 = vmatpush1.bf16.msra.mxu0 0
    %3024 = vmatprep.subr.bf16.mxu0 0
    %3025 = vmatpush1.bf16.msra.mxu0 0
    %3026 = vmatprep.subr.bf16.mxu0 0
    %3027 = vmatpush1.bf16.msra.mxu0 0
    %3028 = vmatprep.subr.bf16.mxu0 0
    %3029 = vmatpush1.bf16.msra.mxu0 0
    %3030 = vmatprep.subr.bf16.mxu0 0
    %3031 = vmatpush1.bf16.msra.mxu0 0
    %3032 = vmatprep.subr.bf16.mxu0 0
    %3033 = vmatpush1.bf16.msra.mxu0 0
    %3034 = vmatprep.subr.bf16.mxu0 0
    %3035 = vmatpush1.bf16.msra.mxu0 0
    %3036 = vmatprep.subr.bf16.mxu0 0
    %3037 = vmatpush1.bf16.msra.mxu0 0
    %3038 = vmatprep.subr.bf16.mxu0 0
    %3039 = vmatpush1.bf16.msra.mxu0 0
    %3040 = vmatprep.subr.bf16.mxu0 0
    %3041 = vmatpush1.bf16.msra.mxu0 0
    %3042 = vmatprep.subr.bf16.mxu0 0
    %3043 = vmatpush1.bf16.msra.mxu0 0
    %3044 = vmatprep.mubr.bf16.mxu0 0
    %3045 = vmatmul.mubr.bf16.gmra.mrb[0].mxu0 %v2959
    %v3046 = vpop.f32.mrb[0].mxu0
    %v3047 = vadd.f32 0.0, %v3046
    %v3048 = vpop.f32.mrb[0].mxu0
    %v3049 = vadd.f32 0.0, %v3048
    %v3050 = vpop.f32.mrb[0].mxu0
    %v3051 = vadd.f32 0.0, %v3050
    %v3052 = vpop.f32.mrb[0].mxu0
    %v3053 = vadd.f32 0.0, %v3052
    %3054 = vmatprep.mubr.bf16.mxu0 0
    %3055 = vmatmul.mubr.bf16.gmra.mrb[0].mxu0 %v2962
    %v3056 = vpop.f32.mrb[0].mxu0
    %v3057 = vadd.f32 0.0, %v3056
    %v3058 = vpop.f32.mrb[0].mxu0
    %v3059 = vadd.f32 0.0, %v3058
    %v3060 = vpop.f32.mrb[0].mxu0
    %v3061 = vadd.f32 0.0, %v3060
    %v3062 = vpop.f32.mrb[0].mxu0
    %v3063 = vadd.f32 0.0, %v3062
    %3064 = vmatprep.mubr.bf16.mxu0 0
    %3065 = vmatmul.mubr.bf16.gmra.mrb[0].mxu0 %v2965
    %v3066 = vpop.f32.mrb[0].mxu0
    %v3067 = vadd.f32 0.0, %v3066
    %v3068 = vpop.f32.mrb[0].mxu0
    %v3069 = vadd.f32 0.0, %v3068
    %v3070 = vpop.f32.mrb[0].mxu0
    %v3071 = vadd.f32 0.0, %v3070
    %v3072 = vpop.f32.mrb[0].mxu0
    %v3073 = vadd.f32 0.0, %v3072
    %3074 = vmatprep.mubr.bf16.mxu0 0
    %3075 = vmatmul.mubr.bf16.gmra.mrb[0].mxu0 %v2968
    %v3076 = vpop.f32.mrb[0].mxu0
    %v3077 = vadd.f32 0.0, %v3076
    %v3078 = vpop.f32.mrb[0].mxu0
    %v3079 = vadd.f32 0.0, %v3078
    %v3080 = vpop.f32.mrb[0].mxu0
    %v3081 = vadd.f32 0.0, %v3080
    %v3082 = vpop.f32.mrb[0].mxu0
    %v3083 = vadd.f32 0.0, %v3082
    %3084 = vmatprep.mubr.bf16.mxu0 0
    %3085 = vmatmul.mubr.bf16.gmra.mrb[0].mxu0 %v2971
    %v3086 = vpop.f32.mrb[0].mxu0
    %v3087 = vadd.f32 0.0, %v3086
    %v3088 = vpop.f32.mrb[0].mxu0
    %v3089 = vadd.f32 0.0, %v3088
    %v3090 = vpop.f32.mrb[0].mxu0
    %v3091 = vadd.f32 0.0, %v3090
    %v3092 = vpop.f32.mrb[0].mxu0
    %v3093 = vadd.f32 0.0, %v3092
    %3094 = vmatprep.mubr.bf16.mxu0 0
    %3095 = vmatmul.mubr.bf16.gmra.mrb[0].mxu0 %v2974
    %v3096 = vpop.f32.mrb[0].mxu0
    %v3097 = vadd.f32 0.0, %v3096
    %v3098 = vpop.f32.mrb[0].mxu0
    %v3099 = vadd.f32 0.0, %v3098
    %v3100 = vpop.f32.mrb[0].mxu0
    %v3101 = vadd.f32 0.0, %v3100
    %v3102 = vpop.f32.mrb[0].mxu0
    %v3103 = vadd.f32 0.0, %v3102
    %3104 = vmatprep.mubr.bf16.mxu0 0
    %3105 = vmatmul.mubr.bf16.gmra.mrb[0].mxu0 %v2977
    %v3106 = vpop.f32.mrb[0].mxu0
    %v3107 = vadd.f32 0.0, %v3106
    %v3108 = vpop.f32.mrb[0].mxu0
    %v3109 = vadd.f32 0.0, %v3108
    %v3110 = vpop.f32.mrb[0].mxu0
    %v3111 = vadd.f32 0.0, %v3110
    %v3112 = vpop.f32.mrb[0].mxu0
    %v3113 = vadd.f32 0.0, %v3112
    %3114 = vmatprep.mubr.bf16.mxu0 0
    %3115 = vmatmul.mubr.bf16.gmra.mrb[0].mxu0 %v2980
    %v3116 = vpop.f32.mrb[0].mxu0
    %v3117 = vadd.f32 0.0, %v3116
    %v3118 = vpop.f32.mrb[0].mxu0
    %v3119 = vadd.f32 0.0, %v3118
    %v3120 = vpop.f32.mrb[0].mxu0
    %v3121 = vadd.f32 0.0, %v3120
    %v3122 = vpop.f32.mrb[0].mxu0
    %v3123 = vadd.f32 0.0, %v3122
    %3124 = vmatprep.mubr.bf16.mxu0 0
    %3125 = vmatmul.mubr.bf16.gmra.mrb[0].mxu0 %v2983
    %v3126 = vpop.f32.mrb[0].mxu0
    %v3127 = vadd.f32 0.0, %v3126
    %v3128 = vpop.f32.mrb[0].mxu0
    %v3129 = vadd.f32 0.0, %v3128
    %v3130 = vpop.f32.mrb[0].mxu0
    %v3131 = vadd.f32 0.0, %v3130
    %v3132 = vpop.f32.mrb[0].mxu0
    %v3133 = vadd.f32 0.0, %v3132
    %3134 = vmatprep.mubr.bf16.mxu0 0
    %3135 = vmatmul.mubr.bf16.gmra.mrb[0].mxu0 %v2986
    %v3136 = vpop.f32.mrb[0].mxu0
    %v3137 = vadd.f32 0.0, %v3136
    %v3138 = vpop.f32.mrb[0].mxu0
    %v3139 = vadd.f32 0.0, %v3138
    %v3140 = vpop.f32.mrb[0].mxu0
    %v3141 = vadd.f32 0.0, %v3140
    %v3142 = vpop.f32.mrb[0].mxu0
    %v3143 = vadd.f32 0.0, %v3142
    %3144 = vmatprep.mubr.bf16.mxu0 0
    %3145 = vmatmul.mubr.bf16.gmra.mrb[0].mxu0 %v2989
    %v3146 = vpop.f32.mrb[0].mxu0
    %v3147 = vadd.f32 0.0, %v3146
    %v3148 = vpop.f32.mrb[0].mxu0
    %v3149 = vadd.f32 0.0, %v3148
    %v3150 = vpop.f32.mrb[0].mxu0
    %v3151 = vadd.f32 0.0, %v3150
    %v3152 = vpop.f32.mrb[0].mxu0
    %v3153 = vadd.f32 0.0, %v3152
    %3154 = vmatprep.mubr.bf16.mxu0 0
    %3155 = vmatmul.mubr.bf16.gmra.mrb[0].mxu0 %v2992
    %v3156 = vpop.f32.mrb[0].mxu0
    %v3157 = vadd.f32 0.0, %v3156
    %v3158 = vpop.f32.mrb[0].mxu0
    %v3159 = vadd.f32 0.0, %v3158
    %v3160 = vpop.f32.mrb[0].mxu0
    %v3161 = vadd.f32 0.0, %v3160
    %v3162 = vpop.f32.mrb[0].mxu0
    %v3163 = vadd.f32 0.0, %v3162
    %3164 = vmatprep.mubr.bf16.mxu0 0
    %3165 = vmatmul.mubr.bf16.gmra.mrb[0].mxu0 %v2995
    %v3166 = vpop.f32.mrb[0].mxu0
    %v3167 = vadd.f32 0.0, %v3166
    %v3168 = vpop.f32.mrb[0].mxu0
    %v3169 = vadd.f32 0.0, %v3168
    %v3170 = vpop.f32.mrb[0].mxu0
    %v3171 = vadd.f32 0.0, %v3170
    %v3172 = vpop.f32.mrb[0].mxu0
    %v3173 = vadd.f32 0.0, %v3172
    %3174 = vmatprep.mubr.bf16.mxu0 0
    %3175 = vmatmul.mubr.bf16.gmra.mrb[0].mxu0 %v2998
    %v3176 = vpop.f32.mrb[0].mxu0
    %v3177 = vadd.f32 0.0, %v3176
    %v3178 = vpop.f32.mrb[0].mxu0
    %v3179 = vadd.f32 0.0, %v3178
    %v3180 = vpop.f32.mrb[0].mxu0
    %v3181 = vadd.f32 0.0, %v3180
    %v3182 = vpop.f32.mrb[0].mxu0
    %v3183 = vadd.f32 0.0, %v3182
    %3184 = vmatprep.mubr.bf16.mxu0 0
    %3185 = vmatmul.mubr.bf16.gmra.mrb[0].mxu0 %v3001
    %v3186 = vpop.f32.mrb[0].mxu0
    %v3187 = vadd.f32 0.0, %v3186
    %v3188 = vpop.f32.mrb[0].mxu0
    %v3189 = vadd.f32 0.0, %v3188
    %v3190 = vpop.f32.mrb[0].mxu0
    %v3191 = vadd.f32 0.0, %v3190
    %v3192 = vpop.f32.mrb[0].mxu0
    %v3193 = vadd.f32 0.0, %v3192
    %3194 = vmatprep.mubr.bf16.mxu0 0
    %3195 = vmatmul.mubr.bf16.gmra.mrb[0].mxu0 %v3004
    %v3196 = vpop.f32.mrb[0].mxu0
    %v3197 = vadd.f32 0.0, %v3196
    %v3198 = vpop.f32.mrb[0].mxu0
    %v3199 = vadd.f32 0.0, %v3198
    %v3200 = vpop.f32.mrb[0].mxu0
    %v3201 = vadd.f32 0.0, %v3200
    %v3202 = vpop.f32.mrb[0].mxu0
    %v3203 = vadd.f32 0.0, %v3202
    %3204 = vmatprep.mubr.bf16.mxu0 0
    %3205 = vmatmul.mubr.bf16.gmra.mrb[0].mxu0 %v3007
    %v3206 = vpop.f32.mrb[0].mxu0
    %v3207 = vadd.f32 0.0, %v3206
    %v3208 = vpop.f32.mrb[0].mxu0
    %v3209 = vadd.f32 0.0, %v3208
    %v3210 = vpop.f32.mrb[0].mxu0
    %v3211 = vadd.f32 0.0, %v3210
    %v3212 = vpop.f32.mrb[0].mxu0
    %v3213 = vadd.f32 0.0, %v3212
    %3214 = vmatprep.mubr.bf16.mxu0 0
    %3215 = vmatmul.mubr.bf16.gmra.mrb[0].mxu0 %v3010
    %v3216 = vpop.f32.mrb[0].mxu0
    %v3217 = vadd.f32 0.0, %v3216
    %v3218 = vpop.f32.mrb[0].mxu0
    %v3219 = vadd.f32 0.0, %v3218
    %v3220 = vpop.f32.mrb[0].mxu0
    %v3221 = vadd.f32 0.0, %v3220
    %v3222 = vpop.f32.mrb[0].mxu0
    %v3223 = vadd.f32 0.0, %v3222
    %3224 = vdwg.mxu0
    %3225 = vmatprep.subr.bf16.mxu0 %v2821
    %3226 = vmatpush1.bf16.msra.mxu0 %v2820
    %3227 = vmatprep.subr.bf16.mxu0 %v2828
    %3228 = vmatpush1.bf16.msra.mxu0 %v2827
    %3229 = vmatprep.subr.bf16.mxu0 0
    %3230 = vmatpush1.bf16.msra.mxu0 0
    %3231 = vmatprep.subr.bf16.mxu0 0
    %3232 = vmatpush1.bf16.msra.mxu0 0
    %3233 = vmatprep.subr.bf16.mxu0 0
    %3234 = vmatpush1.bf16.msra.mxu0 0
    %3235 = vmatprep.subr.bf16.mxu0 0
    %3236 = vmatpush1.bf16.msra.mxu0 0
    %3237 = vmatprep.subr.bf16.mxu0 0
    %3238 = vmatpush1.bf16.msra.mxu0 0
    %3239 = vmatprep.subr.bf16.mxu0 0
    %3240 = vmatpush1.bf16.msra.mxu0 0
    %3241 = vmatprep.subr.bf16.mxu0 0
    %3242 = vmatpush1.bf16.msra.mxu0 0
    %3243 = vmatprep.subr.bf16.mxu0 0
    %3244 = vmatpush1.bf16.msra.mxu0 0
    %3245 = vmatprep.subr.bf16.mxu0 0
    %3246 = vmatpush1.bf16.msra.mxu0 0
    %3247 = vmatprep.subr.bf16.mxu0 0
    %3248 = vmatpush1.bf16.msra.mxu0 0
    %3249 = vmatprep.subr.bf16.mxu0 0
    %3250 = vmatpush1.bf16.msra.mxu0 0
    %3251 = vmatprep.subr.bf16.mxu0 0
    %3252 = vmatpush1.bf16.msra.mxu0 0
    %3253 = vmatprep.subr.bf16.mxu0 0
    %3254 = vmatpush1.bf16.msra.mxu0 0
    %3255 = vmatprep.subr.bf16.mxu0 0
    %3256 = vmatpush1.bf16.msra.mxu0 0
    %3257 = vmatprep.mubr.bf16.mxu0 0
    %3258 = vmatmul.mubr.bf16.gmra.mrb[0].mxu0 %v2959
    %v3259 = vpop.f32.mrb[0].mxu0
    %v3260 = vadd.f32 0.0, %v3259
    %v3261 = vpop.f32.mrb[0].mxu0
    %v3262 = vadd.f32 0.0, %v3261
    %v3263 = vpop.f32.mrb[0].mxu0
    %v3264 = vadd.f32 0.0, %v3263
    %v3265 = vpop.f32.mrb[0].mxu0
    %v3266 = vadd.f32 0.0, %v3265
    %3267 = vmatprep.mubr.bf16.mxu0 0
    %3268 = vmatmul.mubr.bf16.gmra.mrb[0].mxu0 %v2962
    %v3269 = vpop.f32.mrb[0].mxu0
    %v3270 = vadd.f32 0.0, %v3269
    %v3271 = vpop.f32.mrb[0].mxu0
    %v3272 = vadd.f32 0.0, %v3271
    %v3273 = vpop.f32.mrb[0].mxu0
    %v3274 = vadd.f32 0.0, %v3273
    %v3275 = vpop.f32.mrb[0].mxu0
    %v3276 = vadd.f32 0.0, %v3275
    %3277 = vmatprep.mubr.bf16.mxu0 0
    %3278 = vmatmul.mubr.bf16.gmra.mrb[0].mxu0 %v2965
    %v3279 = vpop.f32.mrb[0].mxu0
    %v3280 = vadd.f32 0.0, %v3279
    %v3281 = vpop.f32.mrb[0].mxu0
    %v3282 = vadd.f32 0.0, %v3281
    %v3283 = vpop.f32.mrb[0].mxu0
    %v3284 = vadd.f32 0.0, %v3283
    %v3285 = vpop.f32.mrb[0].mxu0
    %v3286 = vadd.f32 0.0, %v3285
    %3287 = vmatprep.mubr.bf16.mxu0 0
    %3288 = vmatmul.mubr.bf16.gmra.mrb[0].mxu0 %v2968
    %v3289 = vpop.f32.mrb[0].mxu0
    %v3290 = vadd.f32 0.0, %v3289
    %v3291 = vpop.f32.mrb[0].mxu0
    %v3292 = vadd.f32 0.0, %v3291
    %v3293 = vpop.f32.mrb[0].mxu0
    %v3294 = vadd.f32 0.0, %v3293
    %v3295 = vpop.f32.mrb[0].mxu0
    %v3296 = vadd.f32 0.0, %v3295
    %3297 = vmatprep.mubr.bf16.mxu0 0
    %3298 = vmatmul.mubr.bf16.gmra.mrb[0].mxu0 %v2971
    %v3299 = vpop.f32.mrb[0].mxu0
    %v3300 = vadd.f32 0.0, %v3299
    %v3301 = vpop.f32.mrb[0].mxu0
    %v3302 = vadd.f32 0.0, %v3301
    %v3303 = vpop.f32.mrb[0].mxu0
    %v3304 = vadd.f32 0.0, %v3303
    %v3305 = vpop.f32.mrb[0].mxu0
    %v3306 = vadd.f32 0.0, %v3305
    %3307 = vmatprep.mubr.bf16.mxu0 0
    %3308 = vmatmul.mubr.bf16.gmra.mrb[0].mxu0 %v2974
    %v3309 = vpop.f32.mrb[0].mxu0
    %v3310 = vadd.f32 0.0, %v3309
    %v3311 = vpop.f32.mrb[0].mxu0
    %v3312 = vadd.f32 0.0, %v3311
    %v3313 = vpop.f32.mrb[0].mxu0
    %v3314 = vadd.f32 0.0, %v3313
    %v3315 = vpop.f32.mrb[0].mxu0
    %v3316 = vadd.f32 0.0, %v3315
    %3317 = vmatprep.mubr.bf16.mxu0 0
    %3318 = vmatmul.mubr.bf16.gmra.mrb[0].mxu0 %v2977
    %v3319 = vpop.f32.mrb[0].mxu0
    %v3320 = vadd.f32 0.0, %v3319
    %v3321 = vpop.f32.mrb[0].mxu0
    %v3322 = vadd.f32 0.0, %v3321
    %v3323 = vpop.f32.mrb[0].mxu0
    %v3324 = vadd.f32 0.0, %v3323
    %v3325 = vpop.f32.mrb[0].mxu0
    %v3326 = vadd.f32 0.0, %v3325
    %3327 = vmatprep.mubr.bf16.mxu0 0
    %3328 = vmatmul.mubr.bf16.gmra.mrb[0].mxu0 %v2980
    %v3329 = vpop.f32.mrb[0].mxu0
    %v3330 = vadd.f32 0.0, %v3329
    %v3331 = vpop.f32.mrb[0].mxu0
    %v3332 = vadd.f32 0.0, %v3331
    %v3333 = vpop.f32.mrb[0].mxu0
    %v3334 = vadd.f32 0.0, %v3333
    %v3335 = vpop.f32.mrb[0].mxu0
    %v3336 = vadd.f32 0.0, %v3335
    %3337 = vmatprep.mubr.bf16.mxu0 0
    %3338 = vmatmul.mubr.bf16.gmra.mrb[0].mxu0 %v2983
    %v3339 = vpop.f32.mrb[0].mxu0
    %v3340 = vadd.f32 0.0, %v3339
    %v3341 = vpop.f32.mrb[0].mxu0
    %v3342 = vadd.f32 0.0, %v3341
    %v3343 = vpop.f32.mrb[0].mxu0
    %v3344 = vadd.f32 0.0, %v3343
    %v3345 = vpop.f32.mrb[0].mxu0
    %v3346 = vadd.f32 0.0, %v3345
    %3347 = vmatprep.mubr.bf16.mxu0 0
    %3348 = vmatmul.mubr.bf16.gmra.mrb[0].mxu0 %v2986
    %v3349 = vpop.f32.mrb[0].mxu0
    %v3350 = vadd.f32 0.0, %v3349
    %v3351 = vpop.f32.mrb[0].mxu0
    %v3352 = vadd.f32 0.0, %v3351
    %v3353 = vpop.f32.mrb[0].mxu0
    %v3354 = vadd.f32 0.0, %v3353
    %v3355 = vpop.f32.mrb[0].mxu0
    %v3356 = vadd.f32 0.0, %v3355
    %3357 = vmatprep.mubr.bf16.mxu0 0
    %3358 = vmatmul.mubr.bf16.gmra.mrb[0].mxu0 %v2989
    %v3359 = vpop.f32.mrb[0].mxu0
    %v3360 = vadd.f32 0.0, %v3359
    %v3361 = vpop.f32.mrb[0].mxu0
    %v3362 = vadd.f32 0.0, %v3361
    %v3363 = vpop.f32.mrb[0].mxu0
    %v3364 = vadd.f32 0.0, %v3363
    %v3365 = vpop.f32.mrb[0].mxu0
    %v3366 = vadd.f32 0.0, %v3365
    %3367 = vmatprep.mubr.bf16.mxu0 0
    %3368 = vmatmul.mubr.bf16.gmra.mrb[0].mxu0 %v2992
    %v3369 = vpop.f32.mrb[0].mxu0
    %v3370 = vadd.f32 0.0, %v3369
    %v3371 = vpop.f32.mrb[0].mxu0
    %v3372 = vadd.f32 0.0, %v3371
    %v3373 = vpop.f32.mrb[0].mxu0
    %v3374 = vadd.f32 0.0, %v3373
    %v3375 = vpop.f32.mrb[0].mxu0
    %v3376 = vadd.f32 0.0, %v3375
    %3377 = vmatprep.mubr.bf16.mxu0 0
    %3378 = vmatmul.mubr.bf16.gmra.mrb[0].mxu0 %v2995
    %v3379 = vpop.f32.mrb[0].mxu0
    %v3380 = vadd.f32 0.0, %v3379
    %v3381 = vpop.f32.mrb[0].mxu0
    %v3382 = vadd.f32 0.0, %v3381
    %v3383 = vpop.f32.mrb[0].mxu0
    %v3384 = vadd.f32 0.0, %v3383
    %v3385 = vpop.f32.mrb[0].mxu0
    %v3386 = vadd.f32 0.0, %v3385
    %3387 = vmatprep.mubr.bf16.mxu0 0
    %3388 = vmatmul.mubr.bf16.gmra.mrb[0].mxu0 %v2998
    %v3389 = vpop.f32.mrb[0].mxu0
    %v3390 = vadd.f32 0.0, %v3389
    %v3391 = vpop.f32.mrb[0].mxu0
    %v3392 = vadd.f32 0.0, %v3391
    %v3393 = vpop.f32.mrb[0].mxu0
    %v3394 = vadd.f32 0.0, %v3393
    %v3395 = vpop.f32.mrb[0].mxu0
    %v3396 = vadd.f32 0.0, %v3395
    %3397 = vmatprep.mubr.bf16.mxu0 0
    %3398 = vmatmul.mubr.bf16.gmra.mrb[0].mxu0 %v3001
    %v3399 = vpop.f32.mrb[0].mxu0
    %v3400 = vadd.f32 0.0, %v3399
    %v3401 = vpop.f32.mrb[0].mxu0
    %v3402 = vadd.f32 0.0, %v3401
    %v3403 = vpop.f32.mrb[0].mxu0
    %v3404 = vadd.f32 0.0, %v3403
    %v3405 = vpop.f32.mrb[0].mxu0
    %v3406 = vadd.f32 0.0, %v3405
    %3407 = vmatprep.mubr.bf16.mxu0 0
    %3408 = vmatmul.mubr.bf16.gmra.mrb[0].mxu0 %v3004
    %v3409 = vpop.f32.mrb[0].mxu0
    %v3410 = vadd.f32 0.0, %v3409
    %v3411 = vpop.f32.mrb[0].mxu0
    %v3412 = vadd.f32 0.0, %v3411
    %v3413 = vpop.f32.mrb[0].mxu0
    %v3414 = vadd.f32 0.0, %v3413
    %v3415 = vpop.f32.mrb[0].mxu0
    %v3416 = vadd.f32 0.0, %v3415
    %3417 = vmatprep.mubr.bf16.mxu0 0
    %3418 = vmatmul.mubr.bf16.gmra.mrb[0].mxu0 %v3007
    %v3419 = vpop.f32.mrb[0].mxu0
    %v3420 = vadd.f32 0.0, %v3419
    %v3421 = vpop.f32.mrb[0].mxu0
    %v3422 = vadd.f32 0.0, %v3421
    %v3423 = vpop.f32.mrb[0].mxu0
    %v3424 = vadd.f32 0.0, %v3423
    %v3425 = vpop.f32.mrb[0].mxu0
    %v3426 = vadd.f32 0.0, %v3425
    %3427 = vmatprep.mubr.bf16.mxu0 0
    %3428 = vmatmul.mubr.bf16.gmra.mrb[0].mxu0 %v3010
    %v3429 = vpop.f32.mrb[0].mxu0
    %v3430 = vadd.f32 0.0, %v3429
    %v3431 = vpop.f32.mrb[0].mxu0
    %v3432 = vadd.f32 0.0, %v3431
    %v3433 = vpop.f32.mrb[0].mxu0
    %v3434 = vadd.f32 0.0, %v3433
    %v3435 = vpop.f32.mrb[0].mxu0
    %v3436 = vadd.f32 0.0, %v3435
    %3437 = vdwg.mxu0
    %3438 = vmatprep.subr.bf16.mxu0 %v2823
    %3439 = vmatpush1.bf16.msra.mxu0 %v2822
    %3440 = vmatprep.subr.bf16.mxu0 %v2830
    %3441 = vmatpush1.bf16.msra.mxu0 %v2829
    %3442 = vmatprep.subr.bf16.mxu0 0
    %3443 = vmatpush1.bf16.msra.mxu0 0
    %3444 = vmatprep.subr.bf16.mxu0 0
    %3445 = vmatpush1.bf16.msra.mxu0 0
    %3446 = vmatprep.subr.bf16.mxu0 0
    %3447 = vmatpush1.bf16.msra.mxu0 0
    %3448 = vmatprep.subr.bf16.mxu0 0
    %3449 = vmatpush1.bf16.msra.mxu0 0
    %3450 = vmatprep.subr.bf16.mxu0 0
    %3451 = vmatpush1.bf16.msra.mxu0 0
    %3452 = vmatprep.subr.bf16.mxu0 0
    %3453 = vmatpush1.bf16.msra.mxu0 0
    %3454 = vmatprep.subr.bf16.mxu0 0
    %3455 = vmatpush1.bf16.msra.mxu0 0
    %3456 = vmatprep.subr.bf16.mxu0 0
    %3457 = vmatpush1.bf16.msra.mxu0 0
    %3458 = vmatprep.subr.bf16.mxu0 0
    %3459 = vmatpush1.bf16.msra.mxu0 0
    %3460 = vmatprep.subr.bf16.mxu0 0
    %3461 = vmatpush1.bf16.msra.mxu0 0
    %3462 = vmatprep.subr.bf16.mxu0 0
    %3463 = vmatpush1.bf16.msra.mxu0 0
    %3464 = vmatprep.subr.bf16.mxu0 0
    %3465 = vmatpush1.bf16.msra.mxu0 0
    %3466 = vmatprep.subr.bf16.mxu0 0
    %3467 = vmatpush1.bf16.msra.mxu0 0
    %3468 = vmatprep.subr.bf16.mxu0 0
    %3469 = vmatpush1.bf16.msra.mxu0 0
    %3470 = vmatprep.mubr.bf16.mxu0 0
    %3471 = vmatmul.mubr.bf16.gmra.mrb[0].mxu0 %v2959
    %v3472 = vpop.f32.mrb[0].mxu0
    %v3473 = vadd.f32 0.0, %v3472
    %v3474 = vpop.f32.mrb[0].mxu0
    %v3475 = vadd.f32 0.0, %v3474
    %v3476 = vpop.f32.mrb[0].mxu0
    %v3477 = vadd.f32 0.0, %v3476
    %v3478 = vpop.f32.mrb[0].mxu0
    %v3479 = vadd.f32 0.0, %v3478
    %3480 = vmatprep.mubr.bf16.mxu0 0
    %3481 = vmatmul.mubr.bf16.gmra.mrb[0].mxu0 %v2962
    %v3482 = vpop.f32.mrb[0].mxu0
    %v3483 = vadd.f32 0.0, %v3482
    %v3484 = vpop.f32.mrb[0].mxu0
    %v3485 = vadd.f32 0.0, %v3484
    %v3486 = vpop.f32.mrb[0].mxu0
    %v3487 = vadd.f32 0.0, %v3486
    %v3488 = vpop.f32.mrb[0].mxu0
    %v3489 = vadd.f32 0.0, %v3488
    %3490 = vmatprep.mubr.bf16.mxu0 0
    %3491 = vmatmul.mubr.bf16.gmra.mrb[0].mxu0 %v2965
    %v3492 = vpop.f32.mrb[0].mxu0
    %v3493 = vadd.f32 0.0, %v3492
    %v3494 = vpop.f32.mrb[0].mxu0
    %v3495 = vadd.f32 0.0, %v3494
    %v3496 = vpop.f32.mrb[0].mxu0
    %v3497 = vadd.f32 0.0, %v3496
    %v3498 = vpop.f32.mrb[0].mxu0
    %v3499 = vadd.f32 0.0, %v3498
    %3500 = vmatprep.mubr.bf16.mxu0 0
    %3501 = vmatmul.mubr.bf16.gmra.mrb[0].mxu0 %v2968
    %v3502 = vpop.f32.mrb[0].mxu0
    %v3503 = vadd.f32 0.0, %v3502
    %v3504 = vpop.f32.mrb[0].mxu0
    %v3505 = vadd.f32 0.0, %v3504
    %v3506 = vpop.f32.mrb[0].mxu0
    %v3507 = vadd.f32 0.0, %v3506
    %v3508 = vpop.f32.mrb[0].mxu0
    %v3509 = vadd.f32 0.0, %v3508
    %3510 = vmatprep.mubr.bf16.mxu0 0
    %3511 = vmatmul.mubr.bf16.gmra.mrb[0].mxu0 %v2971
    %v3512 = vpop.f32.mrb[0].mxu0
    %v3513 = vadd.f32 0.0, %v3512
    %v3514 = vpop.f32.mrb[0].mxu0
    %v3515 = vadd.f32 0.0, %v3514
    %v3516 = vpop.f32.mrb[0].mxu0
    %v3517 = vadd.f32 0.0, %v3516
    %v3518 = vpop.f32.mrb[0].mxu0
    %v3519 = vadd.f32 0.0, %v3518
    %3520 = vmatprep.mubr.bf16.mxu0 0
    %3521 = vmatmul.mubr.bf16.gmra.mrb[0].mxu0 %v2974
    %v3522 = vpop.f32.mrb[0].mxu0
    %v3523 = vadd.f32 0.0, %v3522
    %v3524 = vpop.f32.mrb[0].mxu0
    %v3525 = vadd.f32 0.0, %v3524
    %v3526 = vpop.f32.mrb[0].mxu0
    %v3527 = vadd.f32 0.0, %v3526
    %v3528 = vpop.f32.mrb[0].mxu0
    %v3529 = vadd.f32 0.0, %v3528
    %3530 = vmatprep.mubr.bf16.mxu0 0
    %3531 = vmatmul.mubr.bf16.gmra.mrb[0].mxu0 %v2977
    %v3532 = vpop.f32.mrb[0].mxu0
    %v3533 = vadd.f32 0.0, %v3532
    %v3534 = vpop.f32.mrb[0].mxu0
    %v3535 = vadd.f32 0.0, %v3534
    %v3536 = vpop.f32.mrb[0].mxu0
    %v3537 = vadd.f32 0.0, %v3536
    %v3538 = vpop.f32.mrb[0].mxu0
    %v3539 = vadd.f32 0.0, %v3538
    %3540 = vmatprep.mubr.bf16.mxu0 0
    %3541 = vmatmul.mubr.bf16.gmra.mrb[0].mxu0 %v2980
    %v3542 = vpop.f32.mrb[0].mxu0
    %v3543 = vadd.f32 0.0, %v3542
    %v3544 = vpop.f32.mrb[0].mxu0
    %v3545 = vadd.f32 0.0, %v3544
    %v3546 = vpop.f32.mrb[0].mxu0
    %v3547 = vadd.f32 0.0, %v3546
    %v3548 = vpop.f32.mrb[0].mxu0
    %v3549 = vadd.f32 0.0, %v3548
    %3550 = vmatprep.mubr.bf16.mxu0 0
    %3551 = vmatmul.mubr.bf16.gmra.mrb[0].mxu0 %v2983
    %v3552 = vpop.f32.mrb[0].mxu0
    %v3553 = vadd.f32 0.0, %v3552
    %v3554 = vpop.f32.mrb[0].mxu0
    %v3555 = vadd.f32 0.0, %v3554
    %v3556 = vpop.f32.mrb[0].mxu0
    %v3557 = vadd.f32 0.0, %v3556
    %v3558 = vpop.f32.mrb[0].mxu0
    %v3559 = vadd.f32 0.0, %v3558
    %3560 = vmatprep.mubr.bf16.mxu0 0
    %3561 = vmatmul.mubr.bf16.gmra.mrb[0].mxu0 %v2986
    %v3562 = vpop.f32.mrb[0].mxu0
    %v3563 = vadd.f32 0.0, %v3562
    %v3564 = vpop.f32.mrb[0].mxu0
    %v3565 = vadd.f32 0.0, %v3564
    %v3566 = vpop.f32.mrb[0].mxu0
    %v3567 = vadd.f32 0.0, %v3566
    %v3568 = vpop.f32.mrb[0].mxu0
    %v3569 = vadd.f32 0.0, %v3568
    %3570 = vmatprep.mubr.bf16.mxu0 0
    %3571 = vmatmul.mubr.bf16.gmra.mrb[0].mxu0 %v2989
    %v3572 = vpop.f32.mrb[0].mxu0
    %v3573 = vadd.f32 0.0, %v3572
    %v3574 = vpop.f32.mrb[0].mxu0
    %v3575 = vadd.f32 0.0, %v3574
    %v3576 = vpop.f32.mrb[0].mxu0
    %v3577 = vadd.f32 0.0, %v3576
    %v3578 = vpop.f32.mrb[0].mxu0
    %v3579 = vadd.f32 0.0, %v3578
    %3580 = vmatprep.mubr.bf16.mxu0 0
    %3581 = vmatmul.mubr.bf16.gmra.mrb[0].mxu0 %v2992
    %v3582 = vpop.f32.mrb[0].mxu0
    %v3583 = vadd.f32 0.0, %v3582
    %v3584 = vpop.f32.mrb[0].mxu0
    %v3585 = vadd.f32 0.0, %v3584
    %v3586 = vpop.f32.mrb[0].mxu0
    %v3587 = vadd.f32 0.0, %v3586
    %v3588 = vpop.f32.mrb[0].mxu0
    %v3589 = vadd.f32 0.0, %v3588
    %3590 = vmatprep.mubr.bf16.mxu0 0
    %3591 = vmatmul.mubr.bf16.gmra.mrb[0].mxu0 %v2995
    %v3592 = vpop.f32.mrb[0].mxu0
    %v3593 = vadd.f32 0.0, %v3592
    %v3594 = vpop.f32.mrb[0].mxu0
    %v3595 = vadd.f32 0.0, %v3594
    %v3596 = vpop.f32.mrb[0].mxu0
    %v3597 = vadd.f32 0.0, %v3596
    %v3598 = vpop.f32.mrb[0].mxu0
    %v3599 = vadd.f32 0.0, %v3598
    %3600 = vmatprep.mubr.bf16.mxu0 0
    %3601 = vmatmul.mubr.bf16.gmra.mrb[0].mxu0 %v2998
    %v3602 = vpop.f32.mrb[0].mxu0
    %v3603 = vadd.f32 0.0, %v3602
    %v3604 = vpop.f32.mrb[0].mxu0
    %v3605 = vadd.f32 0.0, %v3604
    %v3606 = vpop.f32.mrb[0].mxu0
    %v3607 = vadd.f32 0.0, %v3606
    %v3608 = vpop.f32.mrb[0].mxu0
    %v3609 = vadd.f32 0.0, %v3608
    %3610 = vmatprep.mubr.bf16.mxu0 0
    %3611 = vmatmul.mubr.bf16.gmra.mrb[0].mxu0 %v3001
    %v3612 = vpop.f32.mrb[0].mxu0
    %v3613 = vadd.f32 0.0, %v3612
    %v3614 = vpop.f32.mrb[0].mxu0
    %v3615 = vadd.f32 0.0, %v3614
    %v3616 = vpop.f32.mrb[0].mxu0
    %v3617 = vadd.f32 0.0, %v3616
    %v3618 = vpop.f32.mrb[0].mxu0
    %v3619 = vadd.f32 0.0, %v3618
    %3620 = vmatprep.mubr.bf16.mxu0 0
    %3621 = vmatmul.mubr.bf16.gmra.mrb[0].mxu0 %v3004
    %v3622 = vpop.f32.mrb[0].mxu0
    %v3623 = vadd.f32 0.0, %v3622
    %v3624 = vpop.f32.mrb[0].mxu0
    %v3625 = vadd.f32 0.0, %v3624
    %v3626 = vpop.f32.mrb[0].mxu0
    %v3627 = vadd.f32 0.0, %v3626
    %v3628 = vpop.f32.mrb[0].mxu0
    %v3629 = vadd.f32 0.0, %v3628
    %3630 = vmatprep.mubr.bf16.mxu0 0
    %3631 = vmatmul.mubr.bf16.gmra.mrb[0].mxu0 %v3007
    %v3632 = vpop.f32.mrb[0].mxu0
    %v3633 = vadd.f32 0.0, %v3632
    %v3634 = vpop.f32.mrb[0].mxu0
    %v3635 = vadd.f32 0.0, %v3634
    %v3636 = vpop.f32.mrb[0].mxu0
    %v3637 = vadd.f32 0.0, %v3636
    %v3638 = vpop.f32.mrb[0].mxu0
    %v3639 = vadd.f32 0.0, %v3638
    %3640 = vmatprep.mubr.bf16.mxu0 0
    %3641 = vmatmul.mubr.bf16.gmra.mrb[0].mxu0 %v3010
    %v3642 = vpop.f32.mrb[0].mxu0
    %v3643 = vadd.f32 0.0, %v3642
    %v3644 = vpop.f32.mrb[0].mxu0
    %v3645 = vadd.f32 0.0, %v3644
    %v3646 = vpop.f32.mrb[0].mxu0
    %v3647 = vadd.f32 0.0, %v3646
    %v3648 = vpop.f32.mrb[0].mxu0
    %v3649 = vadd.f32 0.0, %v3648
    %3650 = vdwg.mxu0
    %3651 = vmatprep.subr.bf16.mxu0 0
    %3652 = vmatpush1.bf16.msra.mxu0 %v2824
    %3653 = vmatprep.subr.bf16.mxu0 0
    %3654 = vmatpush1.bf16.msra.mxu0 %v2831
    %3655 = vmatprep.subr.bf16.mxu0 0
    %3656 = vmatpush1.bf16.msra.mxu0 0
    %3657 = vmatprep.subr.bf16.mxu0 0
    %3658 = vmatpush1.bf16.msra.mxu0 0
    %3659 = vmatprep.subr.bf16.mxu0 0
    %3660 = vmatpush1.bf16.msra.mxu0 0
    %3661 = vmatprep.subr.bf16.mxu0 0
    %3662 = vmatpush1.bf16.msra.mxu0 0
    %3663 = vmatprep.subr.bf16.mxu0 0
    %3664 = vmatpush1.bf16.msra.mxu0 0
    %3665 = vmatprep.subr.bf16.mxu0 0
    %3666 = vmatpush1.bf16.msra.mxu0 0
    %3667 = vmatprep.subr.bf16.mxu0 0
    %3668 = vmatpush1.bf16.msra.mxu0 0
    %3669 = vmatprep.subr.bf16.mxu0 0
    %3670 = vmatpush1.bf16.msra.mxu0 0
    %3671 = vmatprep.subr.bf16.mxu0 0
    %3672 = vmatpush1.bf16.msra.mxu0 0
    %3673 = vmatprep.subr.bf16.mxu0 0
    %3674 = vmatpush1.bf16.msra.mxu0 0
    %3675 = vmatprep.subr.bf16.mxu0 0
    %3676 = vmatpush1.bf16.msra.mxu0 0
    %3677 = vmatprep.subr.bf16.mxu0 0
    %3678 = vmatpush1.bf16.msra.mxu0 0
    %3679 = vmatprep.subr.bf16.mxu0 0
    %3680 = vmatpush1.bf16.msra.mxu0 0
    %3681 = vmatprep.subr.bf16.mxu0 0
    %3682 = vmatpush1.bf16.msra.mxu0 0
    %3683 = vmatprep.mubr.bf16.mxu0 0
    %3684 = vmatmul.mubr.bf16.gmra.mrb[0].mxu0 %v2959
    %v3685 = vpop.f32.mrb[0].mxu0
    %v3686 = vpop.f32.mrb[0].mxu0
    %v3687 = vpop.f32.mrb[0].mxu0
    %v3688 = vpop.f32.mrb[0].mxu0
    %3689 = vmatprep.mubr.bf16.mxu0 0
    %3690 = vmatmul.mubr.bf16.gmra.mrb[0].mxu0 %v2962
    %v3691 = vpop.f32.mrb[0].mxu0
    %v3692 = vpop.f32.mrb[0].mxu0
    %v3693 = vpop.f32.mrb[0].mxu0
    %v3694 = vpop.f32.mrb[0].mxu0
    %3695 = vmatprep.mubr.bf16.mxu0 0
    %3696 = vmatmul.mubr.bf16.gmra.mrb[0].mxu0 %v2965
    %v3697 = vpop.f32.mrb[0].mxu0
    %v3698 = vadd.f32 0.0, %v3697
    %v3699 = vpop.f32.mrb[0].mxu0
    %v3700 = vpop.f32.mrb[0].mxu0
    %v3701 = vadd.f32 0.0, %v3700
    %v3702 = vpop.f32.mrb[0].mxu0
    %3703 = vmatprep.mubr.bf16.mxu0 0
    %3704 = vmatmul.mubr.bf16.gmra.mrb[0].mxu0 %v2968
    %v3705 = vpop.f32.mrb[0].mxu0
    %v3706 = vadd.f32 0.0, %v3705
    %v3707 = vpop.f32.mrb[0].mxu0
    %v3708 = vpop.f32.mrb[0].mxu0
    %v3709 = vadd.f32 0.0, %v3708
    %v3710 = vpop.f32.mrb[0].mxu0
    %3711 = vmatprep.mubr.bf16.mxu0 0
    %3712 = vmatmul.mubr.bf16.gmra.mrb[0].mxu0 %v2971
    %v3713 = vpop.f32.mrb[0].mxu0
    %v3714 = vadd.f32 0.0, %v3713
    %v3715 = vpop.f32.mrb[0].mxu0
    %v3716 = vpop.f32.mrb[0].mxu0
    %v3717 = vadd.f32 0.0, %v3716
    %v3718 = vpop.f32.mrb[0].mxu0
    %3719 = vmatprep.mubr.bf16.mxu0 0
    %3720 = vmatmul.mubr.bf16.gmra.mrb[0].mxu0 %v2974
    %v3721 = vpop.f32.mrb[0].mxu0
    %v3722 = vadd.f32 0.0, %v3721
    %v3723 = vpop.f32.mrb[0].mxu0
    %v3724 = vpop.f32.mrb[0].mxu0
    %v3725 = vadd.f32 0.0, %v3724
    %v3726 = vpop.f32.mrb[0].mxu0
    %3727 = vmatprep.mubr.bf16.mxu0 0
    %3728 = vmatmul.mubr.bf16.gmra.mrb[0].mxu0 %v2977
    %v3729 = vpop.f32.mrb[0].mxu0
    %v3730 = vadd.f32 0.0, %v3729
    %v3731 = vpop.f32.mrb[0].mxu0
    %v3732 = vpop.f32.mrb[0].mxu0
    %v3733 = vadd.f32 0.0, %v3732
    %v3734 = vpop.f32.mrb[0].mxu0
    %3735 = vmatprep.mubr.bf16.mxu0 0
    %3736 = vmatmul.mubr.bf16.gmra.mrb[0].mxu0 %v2980
    %v3737 = vpop.f32.mrb[0].mxu0
    %v3738 = vadd.f32 0.0, %v3737
    %v3739 = vpop.f32.mrb[0].mxu0
    %v3740 = vpop.f32.mrb[0].mxu0
    %v3741 = vadd.f32 0.0, %v3740
    %v3742 = vpop.f32.mrb[0].mxu0
    %3743 = vmatprep.mubr.bf16.mxu0 0
    %3744 = vmatmul.mubr.bf16.gmra.mrb[0].mxu0 %v2983
    %v3745 = vpop.f32.mrb[0].mxu0
    %v3746 = vadd.f32 0.0, %v3745
    %v3747 = vpop.f32.mrb[0].mxu0
    %v3748 = vpop.f32.mrb[0].mxu0
    %v3749 = vadd.f32 0.0, %v3748
    %v3750 = vpop.f32.mrb[0].mxu0
    %3751 = vmatprep.mubr.bf16.mxu0 0
    %3752 = vmatmul.mubr.bf16.gmra.mrb[0].mxu0 %v2986
    %v3753 = vpop.f32.mrb[0].mxu0
    %v3754 = vadd.f32 0.0, %v3753
    %v3755 = vpop.f32.mrb[0].mxu0
    %v3756 = vpop.f32.mrb[0].mxu0
    %v3757 = vadd.f32 0.0, %v3756
    %v3758 = vpop.f32.mrb[0].mxu0
    %3759 = vmatprep.mubr.bf16.mxu0 0
    %3760 = vmatmul.mubr.bf16.gmra.mrb[0].mxu0 %v2989
    %v3761 = vpop.f32.mrb[0].mxu0
    %v3762 = vadd.f32 0.0, %v3761
    %v3763 = vpop.f32.mrb[0].mxu0
    %v3764 = vpop.f32.mrb[0].mxu0
    %v3765 = vadd.f32 0.0, %v3764
    %v3766 = vpop.f32.mrb[0].mxu0
    %3767 = vmatprep.mubr.bf16.mxu0 0
    %3768 = vmatmul.mubr.bf16.gmra.mrb[0].mxu0 %v2992
    %v3769 = vpop.f32.mrb[0].mxu0
    %v3770 = vadd.f32 0.0, %v3769
    %v3771 = vpop.f32.mrb[0].mxu0
    %v3772 = vpop.f32.mrb[0].mxu0
    %v3773 = vadd.f32 0.0, %v3772
    %v3774 = vpop.f32.mrb[0].mxu0
    %3775 = vmatprep.mubr.bf16.mxu0 0
    %3776 = vmatmul.mubr.bf16.gmra.mrb[0].mxu0 %v2995
    %v3777 = vpop.f32.mrb[0].mxu0
    %v3778 = vadd.f32 0.0, %v3777
    %v3779 = vpop.f32.mrb[0].mxu0
    %v3780 = vpop.f32.mrb[0].mxu0
    %v3781 = vadd.f32 0.0, %v3780
    %v3782 = vpop.f32.mrb[0].mxu0
    %3783 = vmatprep.mubr.bf16.mxu0 0
    %3784 = vmatmul.mubr.bf16.gmra.mrb[0].mxu0 %v2998
    %v3785 = vpop.f32.mrb[0].mxu0
    %v3786 = vadd.f32 0.0, %v3785
    %v3787 = vpop.f32.mrb[0].mxu0
    %v3788 = vpop.f32.mrb[0].mxu0
    %v3789 = vadd.f32 0.0, %v3788
    %v3790 = vpop.f32.mrb[0].mxu0
    %3791 = vmatprep.mubr.bf16.mxu0 0
    %3792 = vmatmul.mubr.bf16.gmra.mrb[0].mxu0 %v3001
    %v3793 = vpop.f32.mrb[0].mxu0
    %v3794 = vadd.f32 0.0, %v3793
    %v3795 = vpop.f32.mrb[0].mxu0
    %v3796 = vpop.f32.mrb[0].mxu0
    %v3797 = vadd.f32 0.0, %v3796
    %v3798 = vpop.f32.mrb[0].mxu0
    %3799 = vmatprep.mubr.bf16.mxu0 0
    %3800 = vmatmul.mubr.bf16.gmra.mrb[0].mxu0 %v3004
    %v3801 = vpop.f32.mrb[0].mxu0
    %v3802 = vadd.f32 0.0, %v3801
    %v3803 = vpop.f32.mrb[0].mxu0
    %v3804 = vpop.f32.mrb[0].mxu0
    %v3805 = vadd.f32 0.0, %v3804
    %v3806 = vpop.f32.mrb[0].mxu0
    %3807 = vmatprep.mubr.bf16.mxu0 0
    %3808 = vmatmul.mubr.bf16.gmra.mrb[0].mxu0 %v3007
    %v3809 = vpop.f32.mrb[0].mxu0
    %v3810 = vadd.f32 0.0, %v3809
    %v3811 = vpop.f32.mrb[0].mxu0
    %v3812 = vpop.f32.mrb[0].mxu0
    %v3813 = vadd.f32 0.0, %v3812
    %v3814 = vpop.f32.mrb[0].mxu0
    %3815 = vmatprep.mubr.bf16.mxu0 0
    %3816 = vmatmul.mubr.bf16.gmra.mrb[0].mxu0 %v3010
    %v3817 = vpop.f32.mrb[0].mxu0
    %v3818 = vadd.f32 0.0, %v3817
    %v3819 = vpop.f32.mrb[0].mxu0
    %v3820 = vpop.f32.mrb[0].mxu0
    %v3821 = vadd.f32 0.0, %v3820
    %v3822 = vpop.f32.mrb[0].mxu0
    %3823 = vdwg.mxu0
    %3852 = vrot.lane.b32.xlu0 %v3067, 127
    %v3853 = vpop.permute.xlu0 %3852
    %3854 = vrot.lane.b32.xlu0 %v3069, 127
    %v3855 = vpop.permute.xlu0 %3854
    %3856 = vrot.lane.b32.xlu0 %v3280, 127
    %v3857 = vpop.permute.xlu0 %3856
    %3858 = vrot.lane.b32.xlu0 %v3282, 127
    %v3859 = vpop.permute.xlu0 %3858
    %3860 = vrot.lane.b32.xlu0 %v3493, 127
    %v3861 = vpop.permute.xlu0 %3860
    %3862 = vrot.lane.b32.xlu0 %v3495, 127
    %v3863 = vpop.permute.xlu0 %3862
    %3864 = vrot.lane.b32.xlu0 %v3698, 127
    %v3865 = vpop.permute.xlu0 %3864
    %3866 = vrot.lane.b32.xlu0 %v3071, 127
    %v3867 = vpop.permute.xlu0 %3866
    %3868 = vrot.lane.b32.xlu0 %v3073, 127
    %v3869 = vpop.permute.xlu0 %3868
    %3870 = vrot.lane.b32.xlu0 %v3284, 127
    %v3871 = vpop.permute.xlu0 %3870
    %3872 = vrot.lane.b32.xlu0 %v3286, 127
    %v3873 = vpop.permute.xlu0 %3872
    %3874 = vrot.lane.b32.xlu0 %v3497, 127
    %v3875 = vpop.permute.xlu0 %3874
    %3876 = vrot.lane.b32.xlu0 %v3499, 127
    %v3877 = vpop.permute.xlu0 %3876
    %3878 = vrot.lane.b32.xlu0 %v3701, 127
    %v3879 = vpop.permute.xlu0 %3878
    %3880 = vrot.lane.b32.xlu0 %v3077, 127
    %v3881 = vpop.permute.xlu0 %3880
    %3882 = vrot.lane.b32.xlu0 %v3079, 127
    %v3883 = vpop.permute.xlu0 %3882
    %3884 = vrot.lane.b32.xlu0 %v3290, 127
    %v3885 = vpop.permute.xlu0 %3884
    %3886 = vrot.lane.b32.xlu0 %v3292, 127
    %v3887 = vpop.permute.xlu0 %3886
    %3888 = vrot.lane.b32.xlu0 %v3503, 127
    %v3889 = vpop.permute.xlu0 %3888
    %3890 = vrot.lane.b32.xlu0 %v3505, 127
    %v3891 = vpop.permute.xlu0 %3890
    %3892 = vrot.lane.b32.xlu0 %v3706, 127
    %v3893 = vpop.permute.xlu0 %3892
    %3894 = vrot.lane.b32.xlu0 %v3081, 127
    %v3895 = vpop.permute.xlu0 %3894
    %3896 = vrot.lane.b32.xlu0 %v3083, 127
    %v3897 = vpop.permute.xlu0 %3896
    %3898 = vrot.lane.b32.xlu0 %v3294, 127
    %v3899 = vpop.permute.xlu0 %3898
    %3900 = vrot.lane.b32.xlu0 %v3296, 127
    %v3901 = vpop.permute.xlu0 %3900
    %3902 = vrot.lane.b32.xlu0 %v3507, 127
    %v3903 = vpop.permute.xlu0 %3902
    %3904 = vrot.lane.b32.xlu0 %v3509, 127
    %v3905 = vpop.permute.xlu0 %3904
    %3906 = vrot.lane.b32.xlu0 %v3709, 127
    %v3907 = vpop.permute.xlu0 %3906
    %v3908 = vsel %vm1193, %v3853, %v3855
    %v3909 = vsel %vm1193, %v3855, %v3857
    %v3910 = vsel %vm1193, %v3857, %v3859
    %v3911 = vsel %vm1193, %v3859, %v3861
    %v3912 = vsel %vm1193, %v3861, %v3863
    %v3913 = vsel %vm1193, %v3863, %v3865
    %v3914 = vsel %vm1193, %v3867, %v3869
    %v3915 = vsel %vm1193, %v3869, %v3871
    %v3916 = vsel %vm1193, %v3871, %v3873
    %v3917 = vsel %vm1193, %v3873, %v3875
    %v3918 = vsel %vm1193, %v3875, %v3877
    %v3919 = vsel %vm1193, %v3877, %v3879
    %v3920 = vsel %vm1193, %v3881, %v3883
    %v3921 = vsel %vm1193, %v3883, %v3885
    %v3922 = vsel %vm1193, %v3885, %v3887
    %v3923 = vsel %vm1193, %v3887, %v3889
    %v3924 = vsel %vm1193, %v3889, %v3891
    %v3925 = vsel %vm1193, %v3891, %v3893
    %v3926 = vsel %vm1193, %v3895, %v3897
    %v3927 = vsel %vm1193, %v3897, %v3899
    %v3928 = vsel %vm1193, %v3899, %v3901
    %v3929 = vsel %vm1193, %v3901, %v3903
    %v3930 = vsel %vm1193, %v3903, %v3905
    %v3931 = vsel %vm1193, %v3905, %v3907
    %v3956 = vadd.f32 %v3047, %v3908
    %v3957 = vadd.f32 %v3049, %v3909
    %v3958 = vadd.f32 %v3260, %v3910
    %v3959 = vadd.f32 %v3262, %v3911
    %v3960 = vadd.f32 %v3473, %v3912
    %v3961 = vadd.f32 %v3475, %v3913
    %v3962 = vadd.f32 %v3051, %v3914
    %v3963 = vadd.f32 %v3053, %v3915
    %v3964 = vadd.f32 %v3264, %v3916
    %v3965 = vadd.f32 %v3266, %v3917
    %v3966 = vadd.f32 %v3477, %v3918
    %v3967 = vadd.f32 %v3479, %v3919
    %v3968 = vadd.f32 %v3057, %v3920
    %v3969 = vadd.f32 %v3059, %v3921
    %v3970 = vadd.f32 %v3270, %v3922
    %v3971 = vadd.f32 %v3272, %v3923
    %v3972 = vadd.f32 %v3483, %v3924
    %v3973 = vadd.f32 %v3485, %v3925
    %v3974 = vadd.f32 %v3061, %v3926
    %v3975 = vadd.f32 %v3063, %v3927
    %v3976 = vadd.f32 %v3274, %v3928
    %v3977 = vadd.f32 %v3276, %v3929
    %v3978 = vadd.f32 %v3487, %v3930
    %v3979 = vadd.f32 %v3489, %v3931
    %4008 = vrot.lane.b32.xlu0 %v3087, 126
    %v4009 = vpop.permute.xlu0 %4008
    %4010 = vrot.lane.b32.xlu0 %v3089, 126
    %v4011 = vpop.permute.xlu0 %4010
    %4012 = vrot.lane.b32.xlu0 %v3300, 126
    %v4013 = vpop.permute.xlu0 %4012
    %4014 = vrot.lane.b32.xlu0 %v3302, 126
    %v4015 = vpop.permute.xlu0 %4014
    %4016 = vrot.lane.b32.xlu0 %v3513, 126
    %v4017 = vpop.permute.xlu0 %4016
    %4018 = vrot.lane.b32.xlu0 %v3515, 126
    %v4019 = vpop.permute.xlu0 %4018
    %4020 = vrot.lane.b32.xlu0 %v3714, 126
    %v4021 = vpop.permute.xlu0 %4020
    %4022 = vrot.lane.b32.xlu0 %v3091, 126
    %v4023 = vpop.permute.xlu0 %4022
    %4024 = vrot.lane.b32.xlu0 %v3093, 126
    %v4025 = vpop.permute.xlu0 %4024
    %4026 = vrot.lane.b32.xlu0 %v3304, 126
    %v4027 = vpop.permute.xlu0 %4026
    %4028 = vrot.lane.b32.xlu0 %v3306, 126
    %v4029 = vpop.permute.xlu0 %4028
    %4030 = vrot.lane.b32.xlu0 %v3517, 126
    %v4031 = vpop.permute.xlu0 %4030
    %4032 = vrot.lane.b32.xlu0 %v3519, 126
    %v4033 = vpop.permute.xlu0 %4032
    %4034 = vrot.lane.b32.xlu0 %v3717, 126
    %v4035 = vpop.permute.xlu0 %4034
    %4036 = vrot.lane.b32.xlu0 %v3097, 126
    %v4037 = vpop.permute.xlu0 %4036
    %4038 = vrot.lane.b32.xlu0 %v3099, 126
    %v4039 = vpop.permute.xlu0 %4038
    %4040 = vrot.lane.b32.xlu0 %v3310, 126
    %v4041 = vpop.permute.xlu0 %4040
    %4042 = vrot.lane.b32.xlu0 %v3312, 126
    %v4043 = vpop.permute.xlu0 %4042
    %4044 = vrot.lane.b32.xlu0 %v3523, 126
    %v4045 = vpop.permute.xlu0 %4044
    %4046 = vrot.lane.b32.xlu0 %v3525, 126
    %v4047 = vpop.permute.xlu0 %4046
    %4048 = vrot.lane.b32.xlu0 %v3722, 126
    %v4049 = vpop.permute.xlu0 %4048
    %4050 = vrot.lane.b32.xlu0 %v3101, 126
    %v4051 = vpop.permute.xlu0 %4050
    %4052 = vrot.lane.b32.xlu0 %v3103, 126
    %v4053 = vpop.permute.xlu0 %4052
    %4054 = vrot.lane.b32.xlu0 %v3314, 126
    %v4055 = vpop.permute.xlu0 %4054
    %4056 = vrot.lane.b32.xlu0 %v3316, 126
    %v4057 = vpop.permute.xlu0 %4056
    %4058 = vrot.lane.b32.xlu0 %v3527, 126
    %v4059 = vpop.permute.xlu0 %4058
    %4060 = vrot.lane.b32.xlu0 %v3529, 126
    %v4061 = vpop.permute.xlu0 %4060
    %4062 = vrot.lane.b32.xlu0 %v3725, 126
    %v4063 = vpop.permute.xlu0 %4062
    %v4064 = vsel %vm1374, %v4009, %v4011
    %v4065 = vsel %vm1374, %v4011, %v4013
    %v4066 = vsel %vm1374, %v4013, %v4015
    %v4067 = vsel %vm1374, %v4015, %v4017
    %v4068 = vsel %vm1374, %v4017, %v4019
    %v4069 = vsel %vm1374, %v4019, %v4021
    %v4070 = vsel %vm1374, %v4023, %v4025
    %v4071 = vsel %vm1374, %v4025, %v4027
    %v4072 = vsel %vm1374, %v4027, %v4029
    %v4073 = vsel %vm1374, %v4029, %v4031
    %v4074 = vsel %vm1374, %v4031, %v4033
    %v4075 = vsel %vm1374, %v4033, %v4035
    %v4076 = vsel %vm1374, %v4037, %v4039
    %v4077 = vsel %vm1374, %v4039, %v4041
    %v4078 = vsel %vm1374, %v4041, %v4043
    %v4079 = vsel %vm1374, %v4043, %v4045
    %v4080 = vsel %vm1374, %v4045, %v4047
    %v4081 = vsel %vm1374, %v4047, %v4049
    %v4082 = vsel %vm1374, %v4051, %v4053
    %v4083 = vsel %vm1374, %v4053, %v4055
    %v4084 = vsel %vm1374, %v4055, %v4057
    %v4085 = vsel %vm1374, %v4057, %v4059
    %v4086 = vsel %vm1374, %v4059, %v4061
    %v4087 = vsel %vm1374, %v4061, %v4063
    %v4112 = vadd.f32 %v3956, %v4064
    %v4113 = vadd.f32 %v3957, %v4065
    %v4114 = vadd.f32 %v3958, %v4066
    %v4115 = vadd.f32 %v3959, %v4067
    %v4116 = vadd.f32 %v3960, %v4068
    %v4117 = vadd.f32 %v3961, %v4069
    %v4118 = vadd.f32 %v3962, %v4070
    %v4119 = vadd.f32 %v3963, %v4071
    %v4120 = vadd.f32 %v3964, %v4072
    %v4121 = vadd.f32 %v3965, %v4073
    %v4122 = vadd.f32 %v3966, %v4074
    %v4123 = vadd.f32 %v3967, %v4075
    %v4124 = vadd.f32 %v3968, %v4076
    %v4125 = vadd.f32 %v3969, %v4077
    %v4126 = vadd.f32 %v3970, %v4078
    %v4127 = vadd.f32 %v3971, %v4079
    %v4128 = vadd.f32 %v3972, %v4080
    %v4129 = vadd.f32 %v3973, %v4081
    %v4130 = vadd.f32 %v3974, %v4082
    %v4131 = vadd.f32 %v3975, %v4083
    %v4132 = vadd.f32 %v3976, %v4084
    %v4133 = vadd.f32 %v3977, %v4085
    %v4134 = vadd.f32 %v3978, %v4086
    %v4135 = vadd.f32 %v3979, %v4087
    %4164 = vrot.lane.b32.xlu0 %v3107, 110
    %v4165 = vpop.permute.xlu0 %4164
    %4166 = vrot.lane.b32.xlu0 %v3109, 110
    %v4167 = vpop.permute.xlu0 %4166
    %4168 = vrot.lane.b32.xlu0 %v3320, 110
    %v4169 = vpop.permute.xlu0 %4168
    %4170 = vrot.lane.b32.xlu0 %v3322, 110
    %v4171 = vpop.permute.xlu0 %4170
    %4172 = vrot.lane.b32.xlu0 %v3533, 110
    %v4173 = vpop.permute.xlu0 %4172
    %4174 = vrot.lane.b32.xlu0 %v3535, 110
    %v4175 = vpop.permute.xlu0 %4174
    %4176 = vrot.lane.b32.xlu0 %v3730, 110
    %v4177 = vpop.permute.xlu0 %4176
    %4178 = vrot.lane.b32.xlu0 %v3111, 110
    %v4179 = vpop.permute.xlu0 %4178
    %4180 = vrot.lane.b32.xlu0 %v3113, 110
    %v4181 = vpop.permute.xlu0 %4180
    %4182 = vrot.lane.b32.xlu0 %v3324, 110
    %v4183 = vpop.permute.xlu0 %4182
    %4184 = vrot.lane.b32.xlu0 %v3326, 110
    %v4185 = vpop.permute.xlu0 %4184
    %4186 = vrot.lane.b32.xlu0 %v3537, 110
    %v4187 = vpop.permute.xlu0 %4186
    %4188 = vrot.lane.b32.xlu0 %v3539, 110
    %v4189 = vpop.permute.xlu0 %4188
    %4190 = vrot.lane.b32.xlu0 %v3733, 110
    %v4191 = vpop.permute.xlu0 %4190
    %4192 = vrot.lane.b32.xlu0 %v3117, 110
    %v4193 = vpop.permute.xlu0 %4192
    %4194 = vrot.lane.b32.xlu0 %v3119, 110
    %v4195 = vpop.permute.xlu0 %4194
    %4196 = vrot.lane.b32.xlu0 %v3330, 110
    %v4197 = vpop.permute.xlu0 %4196
    %4198 = vrot.lane.b32.xlu0 %v3332, 110
    %v4199 = vpop.permute.xlu0 %4198
    %4200 = vrot.lane.b32.xlu0 %v3543, 110
    %v4201 = vpop.permute.xlu0 %4200
    %4202 = vrot.lane.b32.xlu0 %v3545, 110
    %v4203 = vpop.permute.xlu0 %4202
    %4204 = vrot.lane.b32.xlu0 %v3738, 110
    %v4205 = vpop.permute.xlu0 %4204
    %4206 = vrot.lane.b32.xlu0 %v3121, 110
    %v4207 = vpop.permute.xlu0 %4206
    %4208 = vrot.lane.b32.xlu0 %v3123, 110
    %v4209 = vpop.permute.xlu0 %4208
    %4210 = vrot.lane.b32.xlu0 %v3334, 110
    %v4211 = vpop.permute.xlu0 %4210
    %4212 = vrot.lane.b32.xlu0 %v3336, 110
    %v4213 = vpop.permute.xlu0 %4212
    %4214 = vrot.lane.b32.xlu0 %v3547, 110
    %v4215 = vpop.permute.xlu0 %4214
    %4216 = vrot.lane.b32.xlu0 %v3549, 110
    %v4217 = vpop.permute.xlu0 %4216
    %4218 = vrot.lane.b32.xlu0 %v3741, 110
    %v4219 = vpop.permute.xlu0 %4218
    %v4220 = vsel %vm1555, %v4165, %v4167
    %v4221 = vsel %vm1555, %v4167, %v4169
    %v4222 = vsel %vm1555, %v4169, %v4171
    %v4223 = vsel %vm1555, %v4171, %v4173
    %v4224 = vsel %vm1555, %v4173, %v4175
    %v4225 = vsel %vm1555, %v4175, %v4177
    %v4226 = vsel %vm1555, %v4179, %v4181
    %v4227 = vsel %vm1555, %v4181, %v4183
    %v4228 = vsel %vm1555, %v4183, %v4185
    %v4229 = vsel %vm1555, %v4185, %v4187
    %v4230 = vsel %vm1555, %v4187, %v4189
    %v4231 = vsel %vm1555, %v4189, %v4191
    %v4232 = vsel %vm1555, %v4193, %v4195
    %v4233 = vsel %vm1555, %v4195, %v4197
    %v4234 = vsel %vm1555, %v4197, %v4199
    %v4235 = vsel %vm1555, %v4199, %v4201
    %v4236 = vsel %vm1555, %v4201, %v4203
    %v4237 = vsel %vm1555, %v4203, %v4205
    %v4238 = vsel %vm1555, %v4207, %v4209
    %v4239 = vsel %vm1555, %v4209, %v4211
    %v4240 = vsel %vm1555, %v4211, %v4213
    %v4241 = vsel %vm1555, %v4213, %v4215
    %v4242 = vsel %vm1555, %v4215, %v4217
    %v4243 = vsel %vm1555, %v4217, %v4219
    %v4268 = vadd.f32 %v4112, %v4220
    %v4269 = vadd.f32 %v4113, %v4221
    %v4270 = vadd.f32 %v4114, %v4222
    %v4271 = vadd.f32 %v4115, %v4223
    %v4272 = vadd.f32 %v4116, %v4224
    %v4273 = vadd.f32 %v4117, %v4225
    %v4274 = vadd.f32 %v4118, %v4226
    %v4275 = vadd.f32 %v4119, %v4227
    %v4276 = vadd.f32 %v4120, %v4228
    %v4277 = vadd.f32 %v4121, %v4229
    %v4278 = vadd.f32 %v4122, %v4230
    %v4279 = vadd.f32 %v4123, %v4231
    %v4280 = vadd.f32 %v4124, %v4232
    %v4281 = vadd.f32 %v4125, %v4233
    %v4282 = vadd.f32 %v4126, %v4234
    %v4283 = vadd.f32 %v4127, %v4235
    %v4284 = vadd.f32 %v4128, %v4236
    %v4285 = vadd.f32 %v4129, %v4237
    %v4286 = vadd.f32 %v4130, %v4238
    %v4287 = vadd.f32 %v4131, %v4239
    %v4288 = vadd.f32 %v4132, %v4240
    %v4289 = vadd.f32 %v4133, %v4241
    %v4290 = vadd.f32 %v4134, %v4242
    %v4291 = vadd.f32 %v4135, %v4243
    %4320 = vrot.lane.b32.xlu0 %v3127, 109
    %v4321 = vpop.permute.xlu0 %4320
    %4322 = vrot.lane.b32.xlu0 %v3129, 109
    %v4323 = vpop.permute.xlu0 %4322
    %4324 = vrot.lane.b32.xlu0 %v3340, 109
    %v4325 = vpop.permute.xlu0 %4324
    %4326 = vrot.lane.b32.xlu0 %v3342, 109
    %v4327 = vpop.permute.xlu0 %4326
    %4328 = vrot.lane.b32.xlu0 %v3553, 109
    %v4329 = vpop.permute.xlu0 %4328
    %4330 = vrot.lane.b32.xlu0 %v3555, 109
    %v4331 = vpop.permute.xlu0 %4330
    %4332 = vrot.lane.b32.xlu0 %v3746, 109
    %v4333 = vpop.permute.xlu0 %4332
    %4334 = vrot.lane.b32.xlu0 %v3131, 109
    %v4335 = vpop.permute.xlu0 %4334
    %4336 = vrot.lane.b32.xlu0 %v3133, 109
    %v4337 = vpop.permute.xlu0 %4336
    %4338 = vrot.lane.b32.xlu0 %v3344, 109
    %v4339 = vpop.permute.xlu0 %4338
    %4340 = vrot.lane.b32.xlu0 %v3346, 109
    %v4341 = vpop.permute.xlu0 %4340
    %4342 = vrot.lane.b32.xlu0 %v3557, 109
    %v4343 = vpop.permute.xlu0 %4342
    %4344 = vrot.lane.b32.xlu0 %v3559, 109
    %v4345 = vpop.permute.xlu0 %4344
    %4346 = vrot.lane.b32.xlu0 %v3749, 109
    %v4347 = vpop.permute.xlu0 %4346
    %4348 = vrot.lane.b32.xlu0 %v3137, 109
    %v4349 = vpop.permute.xlu0 %4348
    %4350 = vrot.lane.b32.xlu0 %v3139, 109
    %v4351 = vpop.permute.xlu0 %4350
    %4352 = vrot.lane.b32.xlu0 %v3350, 109
    %v4353 = vpop.permute.xlu0 %4352
    %4354 = vrot.lane.b32.xlu0 %v3352, 109
    %v4355 = vpop.permute.xlu0 %4354
    %4356 = vrot.lane.b32.xlu0 %v3563, 109
    %v4357 = vpop.permute.xlu0 %4356
    %4358 = vrot.lane.b32.xlu0 %v3565, 109
    %v4359 = vpop.permute.xlu0 %4358
    %4360 = vrot.lane.b32.xlu0 %v3754, 109
    %v4361 = vpop.permute.xlu0 %4360
    %4362 = vrot.lane.b32.xlu0 %v3141, 109
    %v4363 = vpop.permute.xlu0 %4362
    %4364 = vrot.lane.b32.xlu0 %v3143, 109
    %v4365 = vpop.permute.xlu0 %4364
    %4366 = vrot.lane.b32.xlu0 %v3354, 109
    %v4367 = vpop.permute.xlu0 %4366
    %4368 = vrot.lane.b32.xlu0 %v3356, 109
    %v4369 = vpop.permute.xlu0 %4368
    %4370 = vrot.lane.b32.xlu0 %v3567, 109
    %v4371 = vpop.permute.xlu0 %4370
    %4372 = vrot.lane.b32.xlu0 %v3569, 109
    %v4373 = vpop.permute.xlu0 %4372
    %4374 = vrot.lane.b32.xlu0 %v3757, 109
    %v4375 = vpop.permute.xlu0 %4374
    %v4376 = vsel %vm1736, %v4321, %v4323
    %v4377 = vsel %vm1736, %v4323, %v4325
    %v4378 = vsel %vm1736, %v4325, %v4327
    %v4379 = vsel %vm1736, %v4327, %v4329
    %v4380 = vsel %vm1736, %v4329, %v4331
    %v4381 = vsel %vm1736, %v4331, %v4333
    %v4382 = vsel %vm1736, %v4335, %v4337
    %v4383 = vsel %vm1736, %v4337, %v4339
    %v4384 = vsel %vm1736, %v4339, %v4341
    %v4385 = vsel %vm1736, %v4341, %v4343
    %v4386 = vsel %vm1736, %v4343, %v4345
    %v4387 = vsel %vm1736, %v4345, %v4347
    %v4388 = vsel %vm1736, %v4349, %v4351
    %v4389 = vsel %vm1736, %v4351, %v4353
    %v4390 = vsel %vm1736, %v4353, %v4355
    %v4391 = vsel %vm1736, %v4355, %v4357
    %v4392 = vsel %vm1736, %v4357, %v4359
    %v4393 = vsel %vm1736, %v4359, %v4361
    %v4394 = vsel %vm1736, %v4363, %v4365
    %v4395 = vsel %vm1736, %v4365, %v4367
    %v4396 = vsel %vm1736, %v4367, %v4369
    %v4397 = vsel %vm1736, %v4369, %v4371
    %v4398 = vsel %vm1736, %v4371, %v4373
    %v4399 = vsel %vm1736, %v4373, %v4375
    %v4424 = vadd.f32 %v4268, %v4376
    %v4425 = vadd.f32 %v4269, %v4377
    %v4426 = vadd.f32 %v4270, %v4378
    %v4427 = vadd.f32 %v4271, %v4379
    %v4428 = vadd.f32 %v4272, %v4380
    %v4429 = vadd.f32 %v4273, %v4381
    %v4430 = vadd.f32 %v4274, %v4382
    %v4431 = vadd.f32 %v4275, %v4383
    %v4432 = vadd.f32 %v4276, %v4384
    %v4433 = vadd.f32 %v4277, %v4385
    %v4434 = vadd.f32 %v4278, %v4386
    %v4435 = vadd.f32 %v4279, %v4387
    %v4436 = vadd.f32 %v4280, %v4388
    %v4437 = vadd.f32 %v4281, %v4389
    %v4438 = vadd.f32 %v4282, %v4390
    %v4439 = vadd.f32 %v4283, %v4391
    %v4440 = vadd.f32 %v4284, %v4392
    %v4441 = vadd.f32 %v4285, %v4393
    %v4442 = vadd.f32 %v4286, %v4394
    %v4443 = vadd.f32 %v4287, %v4395
    %v4444 = vadd.f32 %v4288, %v4396
    %v4445 = vadd.f32 %v4289, %v4397
    %v4446 = vadd.f32 %v4290, %v4398
    %v4447 = vadd.f32 %v4291, %v4399
    %4476 = vrot.lane.b32.xlu0 %v3147, 108
    %v4477 = vpop.permute.xlu0 %4476
    %4478 = vrot.lane.b32.xlu0 %v3149, 108
    %v4479 = vpop.permute.xlu0 %4478
    %4480 = vrot.lane.b32.xlu0 %v3360, 108
    %v4481 = vpop.permute.xlu0 %4480
    %4482 = vrot.lane.b32.xlu0 %v3362, 108
    %v4483 = vpop.permute.xlu0 %4482
    %4484 = vrot.lane.b32.xlu0 %v3573, 108
    %v4485 = vpop.permute.xlu0 %4484
    %4486 = vrot.lane.b32.xlu0 %v3575, 108
    %v4487 = vpop.permute.xlu0 %4486
    %4488 = vrot.lane.b32.xlu0 %v3762, 108
    %v4489 = vpop.permute.xlu0 %4488
    %4490 = vrot.lane.b32.xlu0 %v3151, 108
    %v4491 = vpop.permute.xlu0 %4490
    %4492 = vrot.lane.b32.xlu0 %v3153, 108
    %v4493 = vpop.permute.xlu0 %4492
    %4494 = vrot.lane.b32.xlu0 %v3364, 108
    %v4495 = vpop.permute.xlu0 %4494
    %4496 = vrot.lane.b32.xlu0 %v3366, 108
    %v4497 = vpop.permute.xlu0 %4496
    %4498 = vrot.lane.b32.xlu0 %v3577, 108
    %v4499 = vpop.permute.xlu0 %4498
    %4500 = vrot.lane.b32.xlu0 %v3579, 108
    %v4501 = vpop.permute.xlu0 %4500
    %4502 = vrot.lane.b32.xlu0 %v3765, 108
    %v4503 = vpop.permute.xlu0 %4502
    %4504 = vrot.lane.b32.xlu0 %v3157, 108
    %v4505 = vpop.permute.xlu0 %4504
    %4506 = vrot.lane.b32.xlu0 %v3159, 108
    %v4507 = vpop.permute.xlu0 %4506
    %4508 = vrot.lane.b32.xlu0 %v3370, 108
    %v4509 = vpop.permute.xlu0 %4508
    %4510 = vrot.lane.b32.xlu0 %v3372, 108
    %v4511 = vpop.permute.xlu0 %4510
    %4512 = vrot.lane.b32.xlu0 %v3583, 108
    %v4513 = vpop.permute.xlu0 %4512
    %4514 = vrot.lane.b32.xlu0 %v3585, 108
    %v4515 = vpop.permute.xlu0 %4514
    %4516 = vrot.lane.b32.xlu0 %v3770, 108
    %v4517 = vpop.permute.xlu0 %4516
    %4518 = vrot.lane.b32.xlu0 %v3161, 108
    %v4519 = vpop.permute.xlu0 %4518
    %4520 = vrot.lane.b32.xlu0 %v3163, 108
    %v4521 = vpop.permute.xlu0 %4520
    %4522 = vrot.lane.b32.xlu0 %v3374, 108
    %v4523 = vpop.permute.xlu0 %4522
    %4524 = vrot.lane.b32.xlu0 %v3376, 108
    %v4525 = vpop.permute.xlu0 %4524
    %4526 = vrot.lane.b32.xlu0 %v3587, 108
    %v4527 = vpop.permute.xlu0 %4526
    %4528 = vrot.lane.b32.xlu0 %v3589, 108
    %v4529 = vpop.permute.xlu0 %4528
    %4530 = vrot.lane.b32.xlu0 %v3773, 108
    %v4531 = vpop.permute.xlu0 %4530
    %v4532 = vsel %vm1917, %v4477, %v4479
    %v4533 = vsel %vm1917, %v4479, %v4481
    %v4534 = vsel %vm1917, %v4481, %v4483
    %v4535 = vsel %vm1917, %v4483, %v4485
    %v4536 = vsel %vm1917, %v4485, %v4487
    %v4537 = vsel %vm1917, %v4487, %v4489
    %v4538 = vsel %vm1917, %v4491, %v4493
    %v4539 = vsel %vm1917, %v4493, %v4495
    %v4540 = vsel %vm1917, %v4495, %v4497
    %v4541 = vsel %vm1917, %v4497, %v4499
    %v4542 = vsel %vm1917, %v4499, %v4501
    %v4543 = vsel %vm1917, %v4501, %v4503
    %v4544 = vsel %vm1917, %v4505, %v4507
    %v4545 = vsel %vm1917, %v4507, %v4509
    %v4546 = vsel %vm1917, %v4509, %v4511
    %v4547 = vsel %vm1917, %v4511, %v4513
    %v4548 = vsel %vm1917, %v4513, %v4515
    %v4549 = vsel %vm1917, %v4515, %v4517
    %v4550 = vsel %vm1917, %v4519, %v4521
    %v4551 = vsel %vm1917, %v4521, %v4523
    %v4552 = vsel %vm1917, %v4523, %v4525
    %v4553 = vsel %vm1917, %v4525, %v4527
    %v4554 = vsel %vm1917, %v4527, %v4529
    %v4555 = vsel %vm1917, %v4529, %v4531
    %v4580 = vadd.f32 %v4424, %v4532
    %v4581 = vadd.f32 %v4425, %v4533
    %v4582 = vadd.f32 %v4426, %v4534
    %v4583 = vadd.f32 %v4427, %v4535
    %v4584 = vadd.f32 %v4428, %v4536
    %v4585 = vadd.f32 %v4429, %v4537
    %v4586 = vadd.f32 %v4430, %v4538
    %v4587 = vadd.f32 %v4431, %v4539
    %v4588 = vadd.f32 %v4432, %v4540
    %v4589 = vadd.f32 %v4433, %v4541
    %v4590 = vadd.f32 %v4434, %v4542
    %v4591 = vadd.f32 %v4435, %v4543
    %v4592 = vadd.f32 %v4436, %v4544
    %v4593 = vadd.f32 %v4437, %v4545
    %v4594 = vadd.f32 %v4438, %v4546
    %v4595 = vadd.f32 %v4439, %v4547
    %v4596 = vadd.f32 %v4440, %v4548
    %v4597 = vadd.f32 %v4441, %v4549
    %v4598 = vadd.f32 %v4442, %v4550
    %v4599 = vadd.f32 %v4443, %v4551
    %v4600 = vadd.f32 %v4444, %v4552
    %v4601 = vadd.f32 %v4445, %v4553
    %v4602 = vadd.f32 %v4446, %v4554
    %v4603 = vadd.f32 %v4447, %v4555
    %4632 = vrot.lane.b32.xlu0 %v3167, 92
    %v4633 = vpop.permute.xlu0 %4632
    %4634 = vrot.lane.b32.xlu0 %v3169, 92
    %v4635 = vpop.permute.xlu0 %4634
    %4636 = vrot.lane.b32.xlu0 %v3380, 92
    %v4637 = vpop.permute.xlu0 %4636
    %4638 = vrot.lane.b32.xlu0 %v3382, 92
    %v4639 = vpop.permute.xlu0 %4638
    %4640 = vrot.lane.b32.xlu0 %v3593, 92
    %v4641 = vpop.permute.xlu0 %4640
    %4642 = vrot.lane.b32.xlu0 %v3595, 92
    %v4643 = vpop.permute.xlu0 %4642
    %4644 = vrot.lane.b32.xlu0 %v3778, 92
    %v4645 = vpop.permute.xlu0 %4644
    %4646 = vrot.lane.b32.xlu0 %v3171, 92
    %v4647 = vpop.permute.xlu0 %4646
    %4648 = vrot.lane.b32.xlu0 %v3173, 92
    %v4649 = vpop.permute.xlu0 %4648
    %4650 = vrot.lane.b32.xlu0 %v3384, 92
    %v4651 = vpop.permute.xlu0 %4650
    %4652 = vrot.lane.b32.xlu0 %v3386, 92
    %v4653 = vpop.permute.xlu0 %4652
    %4654 = vrot.lane.b32.xlu0 %v3597, 92
    %v4655 = vpop.permute.xlu0 %4654
    %4656 = vrot.lane.b32.xlu0 %v3599, 92
    %v4657 = vpop.permute.xlu0 %4656
    %4658 = vrot.lane.b32.xlu0 %v3781, 92
    %v4659 = vpop.permute.xlu0 %4658
    %4660 = vrot.lane.b32.xlu0 %v3177, 92
    %v4661 = vpop.permute.xlu0 %4660
    %4662 = vrot.lane.b32.xlu0 %v3179, 92
    %v4663 = vpop.permute.xlu0 %4662
    %4664 = vrot.lane.b32.xlu0 %v3390, 92
    %v4665 = vpop.permute.xlu0 %4664
    %4666 = vrot.lane.b32.xlu0 %v3392, 92
    %v4667 = vpop.permute.xlu0 %4666
    %4668 = vrot.lane.b32.xlu0 %v3603, 92
    %v4669 = vpop.permute.xlu0 %4668
    %4670 = vrot.lane.b32.xlu0 %v3605, 92
    %v4671 = vpop.permute.xlu0 %4670
    %4672 = vrot.lane.b32.xlu0 %v3786, 92
    %v4673 = vpop.permute.xlu0 %4672
    %4674 = vrot.lane.b32.xlu0 %v3181, 92
    %v4675 = vpop.permute.xlu0 %4674
    %4676 = vrot.lane.b32.xlu0 %v3183, 92
    %v4677 = vpop.permute.xlu0 %4676
    %4678 = vrot.lane.b32.xlu0 %v3394, 92
    %v4679 = vpop.permute.xlu0 %4678
    %4680 = vrot.lane.b32.xlu0 %v3396, 92
    %v4681 = vpop.permute.xlu0 %4680
    %4682 = vrot.lane.b32.xlu0 %v3607, 92
    %v4683 = vpop.permute.xlu0 %4682
    %4684 = vrot.lane.b32.xlu0 %v3609, 92
    %v4685 = vpop.permute.xlu0 %4684
    %4686 = vrot.lane.b32.xlu0 %v3789, 92
    %v4687 = vpop.permute.xlu0 %4686
    %v4688 = vsel %vm2098, %v4633, %v4635
    %v4689 = vsel %vm2098, %v4635, %v4637
    %v4690 = vsel %vm2098, %v4637, %v4639
    %v4691 = vsel %vm2098, %v4639, %v4641
    %v4692 = vsel %vm2098, %v4641, %v4643
    %v4693 = vsel %vm2098, %v4643, %v4645
    %v4694 = vsel %vm2098, %v4647, %v4649
    %v4695 = vsel %vm2098, %v4649, %v4651
    %v4696 = vsel %vm2098, %v4651, %v4653
    %v4697 = vsel %vm2098, %v4653, %v4655
    %v4698 = vsel %vm2098, %v4655, %v4657
    %v4699 = vsel %vm2098, %v4657, %v4659
    %v4700 = vsel %vm2098, %v4661, %v4663
    %v4701 = vsel %vm2098, %v4663, %v4665
    %v4702 = vsel %vm2098, %v4665, %v4667
    %v4703 = vsel %vm2098, %v4667, %v4669
    %v4704 = vsel %vm2098, %v4669, %v4671
    %v4705 = vsel %vm2098, %v4671, %v4673
    %v4706 = vsel %vm2098, %v4675, %v4677
    %v4707 = vsel %vm2098, %v4677, %v4679
    %v4708 = vsel %vm2098, %v4679, %v4681
    %v4709 = vsel %vm2098, %v4681, %v4683
    %v4710 = vsel %vm2098, %v4683, %v4685
    %v4711 = vsel %vm2098, %v4685, %v4687
    %v4736 = vadd.f32 %v4580, %v4688
    %v4737 = vadd.f32 %v4581, %v4689
    %v4738 = vadd.f32 %v4582, %v4690
    %v4739 = vadd.f32 %v4583, %v4691
    %v4740 = vadd.f32 %v4584, %v4692
    %v4741 = vadd.f32 %v4585, %v4693
    %v4742 = vadd.f32 %v4586, %v4694
    %v4743 = vadd.f32 %v4587, %v4695
    %v4744 = vadd.f32 %v4588, %v4696
    %v4745 = vadd.f32 %v4589, %v4697
    %v4746 = vadd.f32 %v4590, %v4698
    %v4747 = vadd.f32 %v4591, %v4699
    %v4748 = vadd.f32 %v4592, %v4700
    %v4749 = vadd.f32 %v4593, %v4701
    %v4750 = vadd.f32 %v4594, %v4702
    %v4751 = vadd.f32 %v4595, %v4703
    %v4752 = vadd.f32 %v4596, %v4704
    %v4753 = vadd.f32 %v4597, %v4705
    %v4754 = vadd.f32 %v4598, %v4706
    %v4755 = vadd.f32 %v4599, %v4707
    %v4756 = vadd.f32 %v4600, %v4708
    %v4757 = vadd.f32 %v4601, %v4709
    %v4758 = vadd.f32 %v4602, %v4710
    %v4759 = vadd.f32 %v4603, %v4711
    %4788 = vrot.lane.b32.xlu0 %v3187, 91
    %v4789 = vpop.permute.xlu0 %4788
    %4790 = vrot.lane.b32.xlu0 %v3189, 91
    %v4791 = vpop.permute.xlu0 %4790
    %4792 = vrot.lane.b32.xlu0 %v3400, 91
    %v4793 = vpop.permute.xlu0 %4792
    %4794 = vrot.lane.b32.xlu0 %v3402, 91
    %v4795 = vpop.permute.xlu0 %4794
    %4796 = vrot.lane.b32.xlu0 %v3613, 91
    %v4797 = vpop.permute.xlu0 %4796
    %4798 = vrot.lane.b32.xlu0 %v3615, 91
    %v4799 = vpop.permute.xlu0 %4798
    %4800 = vrot.lane.b32.xlu0 %v3794, 91
    %v4801 = vpop.permute.xlu0 %4800
    %4802 = vrot.lane.b32.xlu0 %v3191, 91
    %v4803 = vpop.permute.xlu0 %4802
    %4804 = vrot.lane.b32.xlu0 %v3193, 91
    %v4805 = vpop.permute.xlu0 %4804
    %4806 = vrot.lane.b32.xlu0 %v3404, 91
    %v4807 = vpop.permute.xlu0 %4806
    %4808 = vrot.lane.b32.xlu0 %v3406, 91
    %v4809 = vpop.permute.xlu0 %4808
    %4810 = vrot.lane.b32.xlu0 %v3617, 91
    %v4811 = vpop.permute.xlu0 %4810
    %4812 = vrot.lane.b32.xlu0 %v3619, 91
    %v4813 = vpop.permute.xlu0 %4812
    %4814 = vrot.lane.b32.xlu0 %v3797, 91
    %v4815 = vpop.permute.xlu0 %4814
    %4816 = vrot.lane.b32.xlu0 %v3197, 91
    %v4817 = vpop.permute.xlu0 %4816
    %4818 = vrot.lane.b32.xlu0 %v3199, 91
    %v4819 = vpop.permute.xlu0 %4818
    %4820 = vrot.lane.b32.xlu0 %v3410, 91
    %v4821 = vpop.permute.xlu0 %4820
    %4822 = vrot.lane.b32.xlu0 %v3412, 91
    %v4823 = vpop.permute.xlu0 %4822
    %4824 = vrot.lane.b32.xlu0 %v3623, 91
    %v4825 = vpop.permute.xlu0 %4824
    %4826 = vrot.lane.b32.xlu0 %v3625, 91
    %v4827 = vpop.permute.xlu0 %4826
    %4828 = vrot.lane.b32.xlu0 %v3802, 91
    %v4829 = vpop.permute.xlu0 %4828
    %4830 = vrot.lane.b32.xlu0 %v3201, 91
    %v4831 = vpop.permute.xlu0 %4830
    %4832 = vrot.lane.b32.xlu0 %v3203, 91
    %v4833 = vpop.permute.xlu0 %4832
    %4834 = vrot.lane.b32.xlu0 %v3414, 91
    %v4835 = vpop.permute.xlu0 %4834
    %4836 = vrot.lane.b32.xlu0 %v3416, 91
    %v4837 = vpop.permute.xlu0 %4836
    %4838 = vrot.lane.b32.xlu0 %v3627, 91
    %v4839 = vpop.permute.xlu0 %4838
    %4840 = vrot.lane.b32.xlu0 %v3629, 91
    %v4841 = vpop.permute.xlu0 %4840
    %4842 = vrot.lane.b32.xlu0 %v3805, 91
    %v4843 = vpop.permute.xlu0 %4842
    %v4844 = vsel %vm2279, %v4789, %v4791
    %v4845 = vsel %vm2279, %v4791, %v4793
    %v4846 = vsel %vm2279, %v4793, %v4795
    %v4847 = vsel %vm2279, %v4795, %v4797
    %v4848 = vsel %vm2279, %v4797, %v4799
    %v4849 = vsel %vm2279, %v4799, %v4801
    %v4850 = vsel %vm2279, %v4803, %v4805
    %v4851 = vsel %vm2279, %v4805, %v4807
    %v4852 = vsel %vm2279, %v4807, %v4809
    %v4853 = vsel %vm2279, %v4809, %v4811
    %v4854 = vsel %vm2279, %v4811, %v4813
    %v4855 = vsel %vm2279, %v4813, %v4815
    %v4856 = vsel %vm2279, %v4817, %v4819
    %v4857 = vsel %vm2279, %v4819, %v4821
    %v4858 = vsel %vm2279, %v4821, %v4823
    %v4859 = vsel %vm2279, %v4823, %v4825
    %v4860 = vsel %vm2279, %v4825, %v4827
    %v4861 = vsel %vm2279, %v4827, %v4829
    %v4862 = vsel %vm2279, %v4831, %v4833
    %v4863 = vsel %vm2279, %v4833, %v4835
    %v4864 = vsel %vm2279, %v4835, %v4837
    %v4865 = vsel %vm2279, %v4837, %v4839
    %v4866 = vsel %vm2279, %v4839, %v4841
    %v4867 = vsel %vm2279, %v4841, %v4843
    %v4892 = vadd.f32 %v4736, %v4844
    %v4893 = vadd.f32 %v4737, %v4845
    %v4894 = vadd.f32 %v4738, %v4846
    %v4895 = vadd.f32 %v4739, %v4847
    %v4896 = vadd.f32 %v4740, %v4848
    %v4897 = vadd.f32 %v4741, %v4849
    %v4898 = vadd.f32 %v4742, %v4850
    %v4899 = vadd.f32 %v4743, %v4851
    %v4900 = vadd.f32 %v4744, %v4852
    %v4901 = vadd.f32 %v4745, %v4853
    %v4902 = vadd.f32 %v4746, %v4854
    %v4903 = vadd.f32 %v4747, %v4855
    %v4904 = vadd.f32 %v4748, %v4856
    %v4905 = vadd.f32 %v4749, %v4857
    %v4906 = vadd.f32 %v4750, %v4858
    %v4907 = vadd.f32 %v4751, %v4859
    %v4908 = vadd.f32 %v4752, %v4860
    %v4909 = vadd.f32 %v4753, %v4861
    %v4910 = vadd.f32 %v4754, %v4862
    %v4911 = vadd.f32 %v4755, %v4863
    %v4912 = vadd.f32 %v4756, %v4864
    %v4913 = vadd.f32 %v4757, %v4865
    %v4914 = vadd.f32 %v4758, %v4866
    %v4915 = vadd.f32 %v4759, %v4867
    %4944 = vrot.lane.b32.xlu0 %v3207, 90
    %v4945 = vpop.permute.xlu0 %4944
    %4946 = vrot.lane.b32.xlu0 %v3209, 90
    %v4947 = vpop.permute.xlu0 %4946
    %4948 = vrot.lane.b32.xlu0 %v3420, 90
    %v4949 = vpop.permute.xlu0 %4948
    %4950 = vrot.lane.b32.xlu0 %v3422, 90
    %v4951 = vpop.permute.xlu0 %4950
    %4952 = vrot.lane.b32.xlu0 %v3633, 90
    %v4953 = vpop.permute.xlu0 %4952
    %4954 = vrot.lane.b32.xlu0 %v3635, 90
    %v4955 = vpop.permute.xlu0 %4954
    %4956 = vrot.lane.b32.xlu0 %v3810, 90
    %v4957 = vpop.permute.xlu0 %4956
    %4958 = vrot.lane.b32.xlu0 %v3211, 90
    %v4959 = vpop.permute.xlu0 %4958
    %4960 = vrot.lane.b32.xlu0 %v3213, 90
    %v4961 = vpop.permute.xlu0 %4960
    %4962 = vrot.lane.b32.xlu0 %v3424, 90
    %v4963 = vpop.permute.xlu0 %4962
    %4964 = vrot.lane.b32.xlu0 %v3426, 90
    %v4965 = vpop.permute.xlu0 %4964
    %4966 = vrot.lane.b32.xlu0 %v3637, 90
    %v4967 = vpop.permute.xlu0 %4966
    %4968 = vrot.lane.b32.xlu0 %v3639, 90
    %v4969 = vpop.permute.xlu0 %4968
    %4970 = vrot.lane.b32.xlu0 %v3813, 90
    %v4971 = vpop.permute.xlu0 %4970
    %4972 = vrot.lane.b32.xlu0 %v3217, 90
    %v4973 = vpop.permute.xlu0 %4972
    %4974 = vrot.lane.b32.xlu0 %v3219, 90
    %v4975 = vpop.permute.xlu0 %4974
    %4976 = vrot.lane.b32.xlu0 %v3430, 90
    %v4977 = vpop.permute.xlu0 %4976
    %4978 = vrot.lane.b32.xlu0 %v3432, 90
    %v4979 = vpop.permute.xlu0 %4978
    %4980 = vrot.lane.b32.xlu0 %v3643, 90
    %v4981 = vpop.permute.xlu0 %4980
    %4982 = vrot.lane.b32.xlu0 %v3645, 90
    %v4983 = vpop.permute.xlu0 %4982
    %4984 = vrot.lane.b32.xlu0 %v3818, 90
    %v4985 = vpop.permute.xlu0 %4984
    %4986 = vrot.lane.b32.xlu0 %v3221, 90
    %v4987 = vpop.permute.xlu0 %4986
    %4988 = vrot.lane.b32.xlu0 %v3223, 90
    %v4989 = vpop.permute.xlu0 %4988
    %4990 = vrot.lane.b32.xlu0 %v3434, 90
    %v4991 = vpop.permute.xlu0 %4990
    %4992 = vrot.lane.b32.xlu0 %v3436, 90
    %v4993 = vpop.permute.xlu0 %4992
    %4994 = vrot.lane.b32.xlu0 %v3647, 90
    %v4995 = vpop.permute.xlu0 %4994
    %4996 = vrot.lane.b32.xlu0 %v3649, 90
    %v4997 = vpop.permute.xlu0 %4996
    %4998 = vrot.lane.b32.xlu0 %v3821, 90
    %v4999 = vpop.permute.xlu0 %4998
    %v5000 = vsel %vm2460, %v4945, %v4947
    %v5001 = vsel %vm2460, %v4947, %v4949
    %v5002 = vsel %vm2460, %v4949, %v4951
    %v5003 = vsel %vm2460, %v4951, %v4953
    %v5004 = vsel %vm2460, %v4953, %v4955
    %v5005 = vsel %vm2460, %v4955, %v4957
    %v5006 = vsel %vm2460, %v4959, %v4961
    %v5007 = vsel %vm2460, %v4961, %v4963
    %v5008 = vsel %vm2460, %v4963, %v4965
    %v5009 = vsel %vm2460, %v4965, %v4967
    %v5010 = vsel %vm2460, %v4967, %v4969
    %v5011 = vsel %vm2460, %v4969, %v4971
    %v5012 = vsel %vm2460, %v4973, %v4975
    %v5013 = vsel %vm2460, %v4975, %v4977
    %v5014 = vsel %vm2460, %v4977, %v4979
    %v5015 = vsel %vm2460, %v4979, %v4981
    %v5016 = vsel %vm2460, %v4981, %v4983
    %v5017 = vsel %vm2460, %v4983, %v4985
    %v5018 = vsel %vm2460, %v4987, %v4989
    %v5019 = vsel %vm2460, %v4989, %v4991
    %v5020 = vsel %vm2460, %v4991, %v4993
    %v5021 = vsel %vm2460, %v4993, %v4995
    %v5022 = vsel %vm2460, %v4995, %v4997
    %v5023 = vsel %vm2460, %v4997, %v4999
    %v5048 = vadd.f32 %v4892, %v5000
    %v5049 = vadd.f32 %v4893, %v5001
    %v5050 = vadd.f32 %v4894, %v5002
    %v5051 = vadd.f32 %v4895, %v5003
    %v5052 = vadd.f32 %v4896, %v5004
    %v5053 = vadd.f32 %v4897, %v5005
    %v5054 = vadd.f32 %v4898, %v5006
    %v5055 = vadd.f32 %v4899, %v5007
    %v5056 = vadd.f32 %v4900, %v5008
    %v5057 = vadd.f32 %v4901, %v5009
    %v5058 = vadd.f32 %v4902, %v5010
    %v5059 = vadd.f32 %v4903, %v5011
    %v5060 = vadd.f32 %v4904, %v5012
    %v5061 = vadd.f32 %v4905, %v5013
    %v5062 = vadd.f32 %v4906, %v5014
    %v5063 = vadd.f32 %v4907, %v5015
    %v5064 = vadd.f32 %v4908, %v5016
    %v5065 = vadd.f32 %v4909, %v5017
    %v5066 = vadd.f32 %v4910, %v5018
    %v5067 = vadd.f32 %v4911, %v5019
    %v5068 = vadd.f32 %v4912, %v5020
    %v5069 = vadd.f32 %v4913, %v5021
    %v5070 = vadd.f32 %v4914, %v5022
    %v5071 = vadd.f32 %v4915, %v5023
    %5072 = vset.pattern.permute.xlu0 1
    %5073 = vperm.xlu0 %5072, %v64
    %v5074 = vpop.permute.xlu0 %5073
    %5076 = vset.pattern.permute.xlu0 1
    %5077 = vperm.xlu0 %5076, %v65
    %v5078 = vpop.permute.xlu0 %5077
    %5080 = vset.pattern.permute.xlu0 1
    %5081 = vperm.xlu0 %5080, %v66
    %v5082 = vpop.permute.xlu0 %5081
    %5084 = vset.pattern.permute.xlu0 1
    %5085 = vperm.xlu0 %5084, %v67
    %v5086 = vpop.permute.xlu0 %5085
    %v5088 = vadd.f32 %v5048, %v5074
    %v5089 = vadd.f32 %v5049, %v5074
    %v5090 = vadd.f32 %v5050, %v5074
    %v5091 = vadd.f32 %v5051, %v5074
    %v5092 = vadd.f32 %v5052, %v5074
    %v5093 = vadd.f32 %v5053, %v5074
    %v5094 = vadd.f32 %v5054, %v5078
    %v5095 = vadd.f32 %v5055, %v5078
    %v5096 = vadd.f32 %v5056, %v5078
    %v5097 = vadd.f32 %v5057, %v5078
    %v5098 = vadd.f32 %v5058, %v5078
    %v5099 = vadd.f32 %v5059, %v5078
    %v5100 = vadd.f32 %v5060, %v5082
    %v5101 = vadd.f32 %v5061, %v5082
    %v5102 = vadd.f32 %v5062, %v5082
    %v5103 = vadd.f32 %v5063, %v5082
    %v5104 = vadd.f32 %v5064, %v5082
    %v5105 = vadd.f32 %v5065, %v5082
    %v5106 = vadd.f32 %v5066, %v5086
    %v5107 = vadd.f32 %v5067, %v5086
    %v5108 = vadd.f32 %v5068, %v5086
    %v5109 = vadd.f32 %v5069, %v5086
    %v5110 = vadd.f32 %v5070, %v5086
    %v5111 = vadd.f32 %v5071, %v5086
    %5140 = vrot.lane.b32.xlu0 %v16, 90
    %v5141 = vpop.permute.xlu0 %5140
    %5142 = vrot.lane.b32.xlu0 %v17, 90
    %v5143 = vpop.permute.xlu0 %5142
    %5144 = vrot.lane.b32.xlu0 %v18, 90
    %v5145 = vpop.permute.xlu0 %5144
    %5146 = vrot.lane.b32.xlu0 %v19, 90
    %v5147 = vpop.permute.xlu0 %5146
    %5148 = vrot.lane.b32.xlu0 %v20, 90
    %v5149 = vpop.permute.xlu0 %5148
    %5150 = vrot.lane.b32.xlu0 %v21, 90
    %v5151 = vpop.permute.xlu0 %5150
    %5152 = vrot.lane.b32.xlu0 %v22, 90
    %v5153 = vpop.permute.xlu0 %5152
    %5154 = vrot.lane.b32.xlu0 %v24, 90
    %v5155 = vpop.permute.xlu0 %5154
    %5156 = vrot.lane.b32.xlu0 %v25, 90
    %v5157 = vpop.permute.xlu0 %5156
    %5158 = vrot.lane.b32.xlu0 %v26, 90
    %v5159 = vpop.permute.xlu0 %5158
    %5160 = vrot.lane.b32.xlu0 %v27, 90
    %v5161 = vpop.permute.xlu0 %5160
    %5162 = vrot.lane.b32.xlu0 %v28, 90
    %v5163 = vpop.permute.xlu0 %5162
    %5164 = vrot.lane.b32.xlu0 %v29, 90
    %v5165 = vpop.permute.xlu0 %5164
    %5166 = vrot.lane.b32.xlu0 %v30, 90
    %v5167 = vpop.permute.xlu0 %5166
    %5168 = vrot.lane.b32.xlu0 %v32, 90
    %v5169 = vpop.permute.xlu0 %5168
    %5170 = vrot.lane.b32.xlu0 %v33, 90
    %v5171 = vpop.permute.xlu0 %5170
    %5172 = vrot.lane.b32.xlu0 %v34, 90
    %v5173 = vpop.permute.xlu0 %5172
    %5174 = vrot.lane.b32.xlu0 %v35, 90
    %v5175 = vpop.permute.xlu0 %5174
    %5176 = vrot.lane.b32.xlu0 %v36, 90
    %v5177 = vpop.permute.xlu0 %5176
    %5178 = vrot.lane.b32.xlu0 %v37, 90
    %v5179 = vpop.permute.xlu0 %5178
    %5180 = vrot.lane.b32.xlu0 %v38, 90
    %v5181 = vpop.permute.xlu0 %5180
    %5182 = vrot.lane.b32.xlu0 %v40, 90
    %v5183 = vpop.permute.xlu0 %5182
    %5184 = vrot.lane.b32.xlu0 %v41, 90
    %v5185 = vpop.permute.xlu0 %5184
    %5186 = vrot.lane.b32.xlu0 %v42, 90
    %v5187 = vpop.permute.xlu0 %5186
    %5188 = vrot.lane.b32.xlu0 %v43, 90
    %v5189 = vpop.permute.xlu0 %5188
    %5190 = vrot.lane.b32.xlu0 %v44, 90
    %v5191 = vpop.permute.xlu0 %5190
    %5192 = vrot.lane.b32.xlu0 %v45, 90
    %v5193 = vpop.permute.xlu0 %5192
    %5194 = vrot.lane.b32.xlu0 %v46, 90
    %v5195 = vpop.permute.xlu0 %5194
    %v5196 = vsel %vm2460, %v5141, %v5143
    %v5197 = vsel %vm2460, %v5143, %v5145
    %v5198 = vsel %vm2460, %v5145, %v5147
    %v5199 = vsel %vm2460, %v5147, %v5149
    %v5200 = vsel %vm2460, %v5149, %v5151
    %v5201 = vsel %vm2460, %v5151, %v5153
    %v5202 = vsel %vm2460, %v5155, %v5157
    %v5203 = vsel %vm2460, %v5157, %v5159
    %v5204 = vsel %vm2460, %v5159, %v5161
    %v5205 = vsel %vm2460, %v5161, %v5163
    %v5206 = vsel %vm2460, %v5163, %v5165
    %v5207 = vsel %vm2460, %v5165, %v5167
    %v5208 = vsel %vm2460, %v5169, %v5171
    %v5209 = vsel %vm2460, %v5171, %v5173
    %v5210 = vsel %vm2460, %v5173, %v5175
    %v5211 = vsel %vm2460, %v5175, %v5177
    %v5212 = vsel %vm2460, %v5177, %v5179
    %v5213 = vsel %vm2460, %v5179, %v5181
    %v5214 = vsel %vm2460, %v5183, %v5185
    %v5215 = vsel %vm2460, %v5185, %v5187
    %v5216 = vsel %vm2460, %v5187, %v5189
    %v5217 = vsel %vm2460, %v5189, %v5191
    %v5218 = vsel %vm2460, %v5191, %v5193
    %v5219 = vsel %vm2460, %v5193, %v5195
    %v5244 = vadd.f32 %v5088, %v5196
    %v5245 = vadd.f32 %v5089, %v5197
    %v5246 = vadd.f32 %v5090, %v5198
    %v5247 = vadd.f32 %v5091, %v5199
    %v5248 = vadd.f32 %v5092, %v5200
    %v5249 = vadd.f32 %v5093, %v5201
    %v5250 = vadd.f32 %v5094, %v5202
    %v5251 = vadd.f32 %v5095, %v5203
    %v5252 = vadd.f32 %v5096, %v5204
    %v5253 = vadd.f32 %v5097, %v5205
    %v5254 = vadd.f32 %v5098, %v5206
    %v5255 = vadd.f32 %v5099, %v5207
    %v5256 = vadd.f32 %v5100, %v5208
    %v5257 = vadd.f32 %v5101, %v5209
    %v5258 = vadd.f32 %v5102, %v5210
    %v5259 = vadd.f32 %v5103, %v5211
    %v5260 = vadd.f32 %v5104, %v5212
    %v5261 = vadd.f32 %v5105, %v5213
    %v5262 = vadd.f32 %v5106, %v5214
    %v5263 = vadd.f32 %v5107, %v5215
    %v5264 = vadd.f32 %v5108, %v5216
    %v5265 = vadd.f32 %v5109, %v5217
    %v5266 = vadd.f32 %v5110, %v5218
    %v5267 = vadd.f32 %v5111, %v5219
    %5268 = vst [vmem:[#allocation2] sm:$0xff] %v5244
    %5269 = vst [vmem:[#allocation2 + $0x8] sm:$0xff] %v5245
    %5270 = vst [vmem:[#allocation2 + $0x10] sm:$0xff] %v5246
    %5271 = vst [vmem:[#allocation2 + $0x18] sm:$0xff] %v5247
    %5272 = vst [vmem:[#allocation2 + $0x20] sm:$0xff] %v5248
    %5273 = vst [vmem:[#allocation2 + $0x28] sm:$0xff] %v5249
    %5274 = vst [vmem:[#allocation2 + $0x30] sm:$0xff] %v5250
    %5275 = vst [vmem:[#allocation2 + $0x38] sm:$0xff] %v5251
    %5276 = vst [vmem:[#allocation2 + $0x40] sm:$0xff] %v5252
    %5277 = vst [vmem:[#allocation2 + $0x48] sm:$0xff] %v5253
    %5278 = vst [vmem:[#allocation2 + $0x50] sm:$0xff] %v5254
    %5279 = vst [vmem:[#allocation2 + $0x58] sm:$0xff] %v5255
    %5280 = vst [vmem:[#allocation2 + $0x60] sm:$0xff] %v5256
    %5281 = vst [vmem:[#allocation2 + $0x68] sm:$0xff] %v5257
    %5282 = vst [vmem:[#allocation2 + $0x70] sm:$0xff] %v5258
    %5283 = vst [vmem:[#allocation2 + $0x78] sm:$0xff] %v5259
    %5284 = vst [vmem:[#allocation2 + $0x80] sm:$0xff] %v5260
    %5285 = vst [vmem:[#allocation2 + $0x88] sm:$0xff] %v5261
    %5286 = vst [vmem:[#allocation2 + $0x90] sm:$0xff] %v5262
    %5287 = vst [vmem:[#allocation2 + $0x98] sm:$0xff] %v5263
    %5288 = vst [vmem:[#allocation2 + $0xa0] sm:$0xff] %v5264
    %5289 = vst [vmem:[#allocation2 + $0xa8] sm:$0xff] %v5265
    %5290 = vst [vmem:[#allocation2 + $0xb0] sm:$0xff] %v5266
    %5291 = vst [vmem:[#allocation2 + $0xb8] sm:$0xff] %v5267
    // Predicated region
    $region14: #{tpu_custom_call.1} parent=1 // pred_check
      _
    $region15: #{tpu_custom_call.1} parent=1 // pred_check_branch
      %5293 = sbr.rel (0) target = $region17
    $region16: #{tpu_custom_call.1} parent=1 // pred_region
      %s5295 = ssub.s32 3072, 3072
      %5296 = vsyncadd [#allocation3], %s5295
      %s5297 = sshll.u32 [#allocation2], 4
      %s5298 = int_to_ptr.vmem [resolvable:$true] %s5297
      %5303 = dma.vmem_to_hbm [thread:$0]  %s5298, 3072, %s3, [#allocation3], 768, 768, 48
    $region17: #{tpu_custom_call.1} parent=1 // pred_fallthru
      _
    // Predicated region
    $region18: #{tpu_custom_call.1} parent=1 // pred_check
      _
    $region19: #{tpu_custom_call.1} parent=1 // pred_check_branch
      %5305 = sbr.rel (0) target = $region21
    $region20: #{tpu_custom_call.1} parent=1 // pred_region
      %5306 = dma.done [#allocation3], 3072
    $region21: #{tpu_custom_call.1} parent=1 // pred_fallthru
      _
    %5307 = vsyncpa [#allocation3], 1

</llo_original>
